<compile_context>
chip_gen: v6e
topology: v6e:2x2x1
jax: 0.10.0
libtpu: 0.0.40
codegen_flags: <defaults>
</compile_context>

<pallas_src>
import functools

import jax
import jax.numpy as jnp
from jax import lax
from jax.experimental import pallas as pl
from jax.experimental.pallas import tpu as pltpu


def _round_up(x, m):
    return (x + m - 1) // m * m


# ----------------------------------------------------------------------------
# Pallas kernels
# ----------------------------------------------------------------------------
def _linear_kernel(x_ref, w_ref, b_ref, o_ref, *, act):
    # bf16 inputs, f32 accumulation on the MXU.
    y = jnp.dot(x_ref[...], w_ref[...], preferred_element_type=jnp.float32)
    y = y + b_ref[...]
    if act == "relu":
        y = jnp.maximum(y, 0.0)
    o_ref[...] = y.astype(o_ref.dtype)


def _head_decode_kernel(x_ref, w0_ref, waug_ref, prm_ref, wbig_ref, bbig_ref,
                        pool_ref, exp_ref, aux_ref, o_ref, *,
                        depth, gs, eps, num_classes, add_cnt):
    """Fused per-row-tile detection head (cls+reg towers block-diag fused).

    x_ref   : (tm, F)              bf16 merged pyramid rows
    w0      : (F, 2F+2G)           bf16 first fused tower layer (+ group-sum cols)
    waug    : (depth, 2F, 2F+2G)   bf16 later fused tower layers (slot 0 unused)
    prm     : (depth, 3, 2F+2G)    f32  [bias(+group-sum bias), gamma, beta]
    wbig    : (2F, Dout)           bf16 fused [cls | cnt | reg] output conv
    bbig    : (1, Dout)            f32
    pool    : (2F, 2G)             bf16 one-hot channel->group pooling
    exp     : (2G, 2F)             bf16 one-hot group->channel expansion
    aux     : (tm, 8)  f32         [cx, cy, level_scale, 0...]
    o_ref   : (tm, Dout) f32       lanes 0..5 = [x1, y1, x2, y2, score, label]
    """
    F2 = pool_ref.shape[0]                      # fused channel count (2F)
    pool = pool_ref[...]
    expand = exp_ref[...]
    inv_gs = 1.0 / gs

    def gn_relu(yz, prm):
        # yz: (tm, 2F+2G) f32 = [pre-activation | exact per-group sums]
        y = yz[:, :F2]
        mean_g = yz[:, F2:] * inv_gs                       # (tm, 2G)
        mean_c = jnp.dot(mean_g.astype(jnp.bfloat16), expand,
                         preferred_element_type=jnp.float32)
        c = y - mean_c
        cb = c.astype(jnp.bfloat16)
        ssq_g = jnp.dot(cb * cb, pool,                     # centered sum-of-squares
                        preferred_element_type=jnp.float32)
        rstd_c = jnp.dot(lax.rsqrt(ssq_g * inv_gs + eps).astype(jnp.bfloat16),
                         expand, preferred_element_type=jnp.float32)
        t = c * rstd_c * prm[1:2, :F2] + prm[2:3, :F2]
        return jnp.maximum(t, 0.0).astype(jnp.bfloat16)

    # ---- fused towers: state t = [t_cls | t_reg], all matmuls 2F=128 wide
    # TODO(synk): Python unroll is fine for small depth; switch to
    # lax.fori_loop(..., unroll=True) if depth/F grow (vreg/VMEM pressure).
    x = x_ref[...]                                         # (tm, F) bf16
    prm0 = prm_ref[0]
    yz = jnp.dot(x, w0_ref[...], preferred_element_type=jnp.float32)
    t = gn_relu(yz + prm0[0:1, :], prm0)
    for d in range(1, depth):
        prm = prm_ref[d]
        yz = jnp.dot(t, waug_ref[d], preferred_element_type=jnp.float32)
        t = gn_relu(yz + prm[0:1, :], prm)

    # ---- fused lane-dense output conv: [cls | cnt | reg | pad] = Dout lanes
    head = jnp.dot(t, wbig_ref[...], preferred_element_type=jnp.float32)
    head = head + bbig_ref[...]                            # (tm, Dout) f32

    C = num_classes
    cls_logits = head[:, :C]
    cnt_logit = head[:, C:C + 1]
    reg_logits = head[:, C + 1:C + 5]

    # sigmoid is monotone: max prob == sigmoid(max logit); padded cols excluded.
    max_logit = jnp.max(cls_logits, axis=-1, keepdims=True)
    idx = lax.broadcasted_iota(jnp.int32, cls_logits.shape, 1)
    label = jnp.min(jnp.where(cls_logits >= max_logit, idx, C), axis=-1,
                    keepdims=True).astype(jnp.float32)
    prob = jax.nn.sigmoid(max_logit)
    if add_cnt:
        score = jnp.sqrt(jnp.maximum(prob * jax.nn.sigmoid(cnt_logit), 0.0))
    else:
        score = prob

    aux = aux_ref[...]                                     # (tm, 8)
    xy = aux[:, 0:2]
    scale = aux[:, 2:3]
    reg = jnp.exp(scale * reg_logits)                      # (l, t, r, b) distances
    box = jnp.concatenate([xy - reg[:, 0:2], xy + reg[:, 2:4]], axis=-1)

    tm = x.shape[0]
    pad = jnp.zeros((tm, o_ref.shape[1] - 6), jnp.float32)
    o_ref[...] = jnp.concatenate([box, score, label, pad], axis=-1)


# ----------------------------------------------------------------------------
# Pallas wrappers
# ----------------------------------------------------------------------------
def _pick_tile(m, tm_max):
    # >= 4 grid steps where possible so both v7x TensorCores stay busy and the
    # per-core pipeline keeps double buffering.
    return min(tm_max, max(128, _round_up(max(m // 8, 8), 128)))


def pallas_linear(x, w, b, act="none", out_dtype=jnp.bfloat16, tm_max=512):
    """x: (M, K), w: (K, C), b: (C,) -> (M, C). bf16 matmul, f32 accumulate."""
    M, K = x.shape
    C = w.shape[1]
    tm = _pick_tile(M, tm_max)
    Mp = _round_up(max(M, tm), tm)
    xb = x.astype(jnp.bfloat16)
    if Mp != M:
        xb = jnp.pad(xb, ((0, Mp - M), (0, 0)))
    out = pl.pallas_call(
        functools.partial(_linear_kernel, act=act),
        out_shape=jax.ShapeDtypeStruct((Mp, C), out_dtype),
        grid=(Mp // tm,),
        in_specs=[
            pl.BlockSpec((tm, K), lambda i: (i, 0)),
            pl.BlockSpec((K, C), lambda i: (0, 0)),
            pl.BlockSpec((1, C), lambda i: (0, 0)),
        ],
        out_specs=pl.BlockSpec((tm, C), lambda i: (i, 0)),
        compiler_params=pltpu.CompilerParams(dimension_semantics=("parallel",)),
    )(xb, w.astype(jnp.bfloat16), b.reshape(1, C).astype(jnp.float32))
    return out[:M] if Mp != M else out


def pallas_head_decode(rows, aux, w0, waug, prm, w_big, b_big, pool_p, exp_pt,
                       *, eps, num_classes, add_cnt, tm_max=512):
    """Fused shared detection head + per-location decode over merged rows."""
    M, F = rows.shape
    depth, F2, FA = waug.shape
    G2 = FA - F2
    gs = F2 // G2
    Dout = w_big.shape[1]

    tm = _pick_tile(M, tm_max)
    Mp = _round_up(max(M, tm), tm)
    if Mp != M:
        rows = jnp.pad(rows, ((0, Mp - M), (0, 0)))
        aux = jnp.pad(aux, ((0, Mp - M), (0, 0)))

    out = pl.pallas_call(
        functools.partial(_head_decode_kernel, depth=depth, gs=float(gs),
                          eps=eps, num_classes=num_classes, add_cnt=add_cnt),
        out_shape=jax.ShapeDtypeStruct((Mp, Dout), jnp.float32),
        grid=(Mp // tm,),
        in_specs=[
            pl.BlockSpec((tm, F), lambda i: (i, 0)),          # rows
            pl.BlockSpec((F, FA), lambda i: (0, 0)),          # first tower layer
            pl.BlockSpec((depth, F2, FA), lambda i: (0, 0, 0)),  # fused towers
            pl.BlockSpec((depth, 3, FA), lambda i: (0, 0, 0)),   # bias/gamma/beta
            pl.BlockSpec((F2, Dout), lambda i: (0, 0)),       # fused output conv
            pl.BlockSpec((1, Dout), lambda i: (0, 0)),
            pl.BlockSpec((F2, G2), lambda i: (0, 0)),         # GN pooling (bf16)
            pl.BlockSpec((G2, F2), lambda i: (0, 0)),         # GN expansion (bf16)
            pl.BlockSpec((tm, 8), lambda i: (i, 0)),          # aux cx,cy,scale
        ],
        out_specs=pl.BlockSpec((tm, Dout), lambda i: (i, 0)),   # lane-dense slab
        compiler_params=pltpu.CompilerParams(dimension_semantics=("parallel",)),
    )(rows, w0, waug, prm, w_big, b_big, pool_p, exp_pt, aux)
    return out[:M] if Mp != M else out


# ----------------------------------------------------------------------------
# Plain-JAX post-processing glue (top-k, NMS, compaction, clipping, padding)
# ----------------------------------------------------------------------------
def _nms_keep(boxes, labels, valid, iou_thr):
    K = boxes.shape[0]
    x1, y1, x2, y2 = boxes[:, 0], boxes[:, 1], boxes[:, 2], boxes[:, 3]
    area = jnp.maximum(x2 - x1, 0.0) * jnp.maximum(y2 - y1, 0.0)
    xx1 = jnp.maximum(x1[:, None], x1[None, :])
    yy1 = jnp.maximum(y1[:, None], y1[None, :])
    xx2 = jnp.minimum(x2[:, None], x2[None, :])
    yy2 = jnp.minimum(y2[:, None], y2[None, :])
    inter = jnp.maximum(xx2 - xx1, 0.0) * jnp.maximum(yy2 - yy1, 0.0)
    iou = inter / (area[:, None] + area[None, :] - inter + 1e-9)
    same_class = labels[:, None] == labels[None, :]   # class-aware NMS mask
    idx = jnp.arange(K)

    def body(i, keep):
        suppress = (iou[i] > iou_thr) & same_class[i] & (idx > i) & keep[i]
        return keep & (~suppress)

    return lax.fori_loop(0, K, body, valid)


def _post_single(boxes, scores, labels, *, K, thr, iou_thr, max_det, img_h, img_w):
    top_scores, top_idx = lax.top_k(scores, K)
    top_boxes = boxes[top_idx]
    top_labels = labels[top_idx]
    valid = top_scores >= thr
    keep = _nms_keep(top_boxes, top_labels, valid, iou_thr)
    count = jnp.sum(keep.astype(jnp.int32))
    # compact kept detections to the front (stable, keeps score order)
    order = jnp.argsort(jnp.where(keep, 0, 1) * K + jnp.arange(K))
    bsel = top_boxes[order]
    ssel = top_scores[order]
    lsel = top_labels[order]
    # clip boxes to image (matches the forward's torch.clip on columns 0..3)
    x1 = jnp.clip(bsel[:, 0], 0.0, img_w)
    y1 = jnp.clip(bsel[:, 1], 0.0, img_h)
    x2 = jnp.clip(bsel[:, 2], 0.0, img_w)
    y2 = jnp.clip(bsel[:, 3], 0.0, img_h)
    pred = jnp.stack([x1, y1, x2, y2, ssel, lsel], axis=1)
    pred = jnp.where((jnp.arange(K) < count)[:, None], pred, 0.0)
    out = jnp.zeros((max_det, 6), jnp.float32).at[:K].set(pred)
    return out, count.astype(jnp.float32)


def _level_coords(h, w, stride):
    xs = (jnp.arange(w, dtype=jnp.float32) + 0.5) * stride
    ys = (jnp.arange(h, dtype=jnp.float32) + 0.5) * stride
    xg, yg = jnp.meshgrid(xs, ys)
    return jnp.stack([xg.reshape(-1), yg.reshape(-1)], axis=1)


# ----------------------------------------------------------------------------
# One-time parameter packing (runs OUTSIDE the jitted forward)
# ----------------------------------------------------------------------------
def pack_params(params, *, num_classes, gn_groups):
    Fc = params["p3_w"].shape[1]
    F2 = 2 * Fc
    G2 = 2 * gn_groups
    gs = Fc // gn_groups
    depth = len(params["cls_tower"])

    # one-hot channel->group pooling over the fused 2F channels (0/1, bf16-exact)
    ch = jnp.arange(F2)
    P = (ch[:, None] // gs == jnp.arange(G2)[None, :]).astype(jnp.float32)

    waug_list, prm_list = [], []
    for d in range(depth):
        wc, bc, gc, bec = params["cls_tower"][d]
        wr, br, gr, ber = params["reg_tower"][d]
        wbd = jnp.zeros((F2, F2), jnp.float32)
        wbd = wbd.at[:Fc, :Fc].set(wc).at[Fc:, Fc:].set(wr)   # block-diag towers
        wsum = wbd @ P                                        # folded group-sum cols
        waug_list.append(jnp.concatenate([wbd, wsum], axis=1))
        bfull = jnp.concatenate([bc, br])
        baug = jnp.concatenate([bfull, bfull @ P])
        zpad = jnp.zeros((G2,), jnp.float32)
        prm_list.append(jnp.stack([
            baug,
            jnp.concatenate([gc, gr, zpad]),
            jnp.concatenate([bec, ber, zpad])]))
    waug_f32 = jnp.stack(waug_list)                           # (depth, 2F, 2F+2G)
    # first layer consumes x directly (state is [x | x]) -> fold the halves
    w0 = waug_f32[0][:Fc, :] + waug_f32[0][Fc:, :]            # (F, 2F+2G)

    Dout = max(128, _round_up(num_classes + 5, 128))          # lane-dense output
    w_big = jnp.zeros((F2, Dout), jnp.float32)
    w_big = w_big.at[:Fc, :num_classes].set(params["cls_w"])
    w_big = w_big.at[Fc:, num_classes:num_classes + 1].set(params["cnt_w"])
    w_big = w_big.at[Fc:, num_classes + 1:num_classes + 5].set(params["reg_w"])
    b_big = jnp.zeros((1, Dout), jnp.float32)
    b_big = b_big.at[0, :num_classes].set(params["cls_b"])
    b_big = b_big.at[0, num_classes].set(params["cnt_b"][0])
    b_big = b_big.at[0, num_classes + 1:num_classes + 5].set(params["reg_b"])

    return {
        "p3_w": params["p3_w"].astype(jnp.bfloat16),
        "p3_b": params["p3_b"].astype(jnp.float32),
        "lat_w": [w.astype(jnp.bfloat16) for w in params["lat_w"]],
        "lat_b": [b.astype(jnp.float32) for b in params["lat_b"]],
        "w0": w0.astype(jnp.bfloat16),
        "waug": waug_f32.astype(jnp.bfloat16),
        "prm": jnp.stack(prm_list),
        "w_big": w_big.astype(jnp.bfloat16),
        "b_big": b_big,
        "pool_p": P.astype(jnp.bfloat16),
        "expand_pt": P.T.astype(jnp.bfloat16),
        "scales": params["scales"].astype(jnp.float32),
    }


# ----------------------------------------------------------------------------
# Full FCOSInference forward
# ----------------------------------------------------------------------------
@functools.partial(
    jax.jit,
    static_argnames=("strides", "num_classes", "max_det", "score_thr",
                     "iou_thr", "add_centerness"))
def fcos_inference(x_nchw, pk, *, strides, num_classes, max_det,
                   score_thr, iou_thr, add_centerness):
    B, Cin, H, W = x_nchw.shape
    Fc = pk["p3_w"].shape[1]

    # ---- stem: bf16 BEFORE the relayouts (halves HBM traffic of transposes)
    xb = jnp.transpose(x_nchw.astype(jnp.bfloat16), (0, 2, 3, 1))    # NHWC bf16
    s0 = strides[0]
    h0, w0 = H // s0, W // s0
    patches = xb.reshape(B, h0, s0, w0, s0, Cin).transpose(0, 1, 3, 2, 4, 5)
    patches = patches.reshape(B * h0 * w0, s0 * s0 * Cin)
    f0 = pallas_linear(patches, pk["p3_w"], pk["p3_b"], act="relu")
    feats = [f0.reshape(B, h0, w0, Fc)]

    # ---- tiny FPN-ish lateral chain (pool + 1x1 + ReLU): plain jnp; these are
    # only a few hundred/thousand rows and would be launch-bound as pallas_calls.
    cur = feats[0]
    for li in range(1, len(strides)):
        h, w = cur.shape[1] // 2, cur.shape[2] // 2
        pooled = cur.astype(jnp.float32).reshape(B, h, 2, w, 2, Fc).mean(axis=(2, 4))
        y = jnp.dot(pooled.reshape(B * h * w, Fc).astype(jnp.bfloat16),
                    pk["lat_w"][li - 1], preferred_element_type=jnp.float32)
        f = jnp.maximum(y + pk["lat_b"][li - 1], 0.0).astype(jnp.bfloat16)
        feats.append(f.reshape(B, h, w, Fc))
        cur = feats[-1]

    # ---- merge all pyramid levels into one row matrix for the shared head
    rows_list, aux_list, level_sizes = [], [], []
    for li, (f, stride) in enumerate(zip(feats, strides)):
        _, h, w, _ = f.shape
        n = h * w
        rows_list.append(f.reshape(B * n, Fc))
        xy = jnp.tile(_level_coords(h, w, stride), (B, 1))            # (B*n, 2)
        sc = jnp.broadcast_to(pk["scales"][li].reshape(1, 1), (B * n, 1))
        aux_list.append(jnp.concatenate(
            [xy, sc, jnp.zeros((B * n, 5), jnp.float32)], axis=1))    # (B*n, 8)
        level_sizes.append(n)
    rows_all = jnp.concatenate(rows_list, axis=0)    # (M, F) bf16
    aux_all = jnp.concatenate(aux_list, axis=0)      # (M, 8) f32

    det = pallas_head_decode(rows_all, aux_all, pk["w0"], pk["waug"], pk["prm"],
                             pk["w_big"], pk["b_big"], pk["pool_p"],
                             pk["expand_pt"], eps=1e-5,
                             num_classes=num_classes, add_cnt=add_centerness)

    # ---- regroup per batch element: (B, N, 6)
    chunks, off = [], 0
    for n in level_sizes:
        chunks.append(det[off:off + B * n, :6].reshape(B, n, 6))
        off += B * n
    det_b = jnp.concatenate(chunks, axis=1)
    boxes = det_b[..., 0:4]
    scores = det_b[..., 4]
    labels = det_b[..., 5]
    N = det_b.shape[1]

    # ---- post-process: top-k, threshold, NMS, clip, pad to (B, max_det, 6)
    K = min(max_det, N)
    post = functools.partial(_post_single, K=K, thr=score_thr, iou_thr=iou_thr,
                             max_det=max_det, img_h=float(H), img_w=float(W))
    final_prediction, num_bboxes = jax.vmap(post)(boxes, scores, labels)
    return final_prediction, num_bboxes


# ----------------------------------------------------------------------------
# Deterministic parameter init (synthetic, shapes implied by the module)
# ----------------------------------------------------------------------------
def init_params(key, *, in_channels=3, fpn_features=64, num_classes=81,
                num_strides=5, patch=8, tower_depth=2):
    keys = list(jax.random.split(key, 64))
    kit = iter(keys)

    def nrm(shape, scale=0.05):
        return scale * jax.random.normal(next(kit), shape, jnp.float32)

    Fc = fpn_features
    params = {
        "p3_w": nrm((in_channels * patch * patch, Fc)),
        "p3_b": jnp.zeros((Fc,), jnp.float32),
        "lat_w": [nrm((Fc, Fc)) for _ in range(num_strides - 1)],
        "lat_b": [jnp.zeros((Fc,), jnp.float32) for _ in range(num_strides - 1)],
        "cls_tower": [(nrm((Fc, Fc)), jnp.zeros((Fc,), jnp.float32),
                       jnp.ones((Fc,), jnp.float32), jnp.zeros((Fc,), jnp.float32))
                      for _ in range(tower_depth)],
        "reg_tower": [(nrm((Fc, Fc)), jnp.zeros((Fc,), jnp.float32),
                       jnp.ones((Fc,), jnp.float32), jnp.zeros((Fc,), jnp.float32))
                      for _ in range(tower_depth)],
        "cls_w": nrm((Fc, num_classes)),
        "cls_b": jnp.full((num_classes,), -2.0, jnp.float32),
        "cnt_w": nrm((Fc, 1)),
        "cnt_b": jnp.zeros((1,), jnp.float32),
        "reg_w": nrm((Fc, 4)),
        "reg_b": jnp.zeros((4,), jnp.float32),
        "scales": jnp.ones((num_strides,), jnp.float32),
    }
    return params


if __name__ == "__main__":
    B, Cin, H, W = 2, 3, 128, 128            # H, W must cover the largest stride
    strides = (8, 16, 32, 64, 128)
    num_classes = 81
    max_det = 100                             # max_detection_boxes_num (small demo)
    gn_groups = 8

    x = jax.random.normal(jax.random.PRNGKey(0), (B, Cin, H, W), jnp.float32)
    params = init_params(jax.random.PRNGKey(1), in_channels=Cin,
                         fpn_features=64, num_classes=num_classes,
                         num_strides=len(strides), patch=strides[0],
                         tower_depth=2)
    packed = pack_params(params, num_classes=num_classes, gn_groups=gn_groups)

    final_prediction, num_bboxes = fcos_inference(
        x, packed,
        strides=strides, num_classes=num_classes, max_det=max_det,
        score_thr=0.05, iou_thr=0.6, add_centerness=True)

    jax.block_until_ready((final_prediction, num_bboxes))
    assert final_prediction.shape == (B, max_det, 6)
    assert num_bboxes.shape == (B,)
    assert bool(jnp.all(jnp.isfinite(final_prediction)))
    print("KERNEL_OK")
</pallas_src>

<mosaic_0001>
module attributes {stable_mosaic.version = 11 : i64} {
  func.func @_linear_kernel(%arg0: i32, %arg1: memref<128x192xbf16, #tpu.memory_space<vmem>>, %arg2: memref<192x64xbf16, #tpu.memory_space<vmem>>, %arg3: memref<1x64xf32, #tpu.memory_space<vmem>>, %arg4: memref<128x64xbf16, #tpu.memory_space<vmem>>) attributes {dimension_semantics = [#tpu.dimension_semantics<parallel>], iteration_bounds = array<i64: 4>, scalar_prefetch = 0 : i64, scratch_operands = 0 : i64, tpu.core_type = #tpu.core_type<tc>, window_params = [{transform_indices = @transform_0, window_bounds = array<i64: 128, 192>}, {pipeline_mode = #tpu.pipeline_mode<synchronous>, transform_indices = @transform_1, window_bounds = array<i64: 192, 64>}, {pipeline_mode = #tpu.pipeline_mode<synchronous>, transform_indices = @transform_2, window_bounds = array<i64: 1, 64>}, {transform_indices = @transform_3, window_bounds = array<i64: 128, 64>}]} {
    %c0 = arith.constant 0 : index
    %c0_0 = arith.constant 0 : index
    %0 = vector.load %arg1[%c0, %c0_0] : memref<128x192xbf16, #tpu.memory_space<vmem>>, vector<128x192xbf16>
    %c0_1 = arith.constant 0 : index
    %c0_2 = arith.constant 0 : index
    %1 = vector.load %arg2[%c0_1, %c0_2] : memref<192x64xbf16, #tpu.memory_space<vmem>>, vector<192x64xbf16>
    %cst = arith.constant dense<0.000000e+00> : vector<128x64xf32>
    %2 = tpu.matmul %0, %1, %cst {dimension_numbers = #tpu.dot_dimension_numbers<[1], [0], [0], [1], [0, 0, 1, 1], [], []>} : vector<128x192xbf16>, vector<192x64xbf16>, vector<128x64xf32> -> vector<128x64xf32>
    %c0_3 = arith.constant 0 : index
    %c0_4 = arith.constant 0 : index
    %3 = vector.load %arg3[%c0_3, %c0_4] : memref<1x64xf32, #tpu.memory_space<vmem>>, vector<1x64xf32>
    %4 = vector.broadcast %3 : vector<1x64xf32> to vector<128x64xf32>
    %5 = arith.addf %2, %4 : vector<128x64xf32>
    %cst_5 = arith.constant 0.000000e+00 : f32
    %6 = vector.broadcast %cst_5 : f32 to vector<128x64xf32>
    %7 = arith.maximumf %5, %6 : vector<128x64xf32>
    %8 = arith.truncf %7 : vector<128x64xf32> to vector<128x64xbf16>
    %c0_6 = arith.constant 0 : index
    %c0_7 = arith.constant 0 : index
    %9 = vector.load %arg4[%c0_6, %c0_7] : memref<128x64xbf16, #tpu.memory_space<vmem>>, vector<128x64xbf16>
    tpu.vector_store %arg4[%c0_6, %c0_7], %8 {strides = array<i32>} : memref<128x64xbf16, #tpu.memory_space<vmem>>, vector<128x64xbf16>,
    return
  }
  func.func @transform_0(%arg0: i32) -> (i32, i32) {
    %c0_i32 = arith.constant 0 : i32
    %c0_i32_0 = arith.constant 0 : i32
    return %arg0, %c0_i32 : i32, i32
  }
  func.func @transform_1(%arg0: i32) -> (i32, i32) {
    %c0_i32 = arith.constant 0 : i32
    %c0_i32_0 = arith.constant 0 : i32
    %c0_i32_1 = arith.constant 0 : i32
    return %c0_i32, %c0_i32_0 : i32, i32
  }
  func.func @transform_2(%arg0: i32) -> (i32, i32) {
    %c0_i32 = arith.constant 0 : i32
    %c0_i32_0 = arith.constant 0 : i32
    %c0_i32_1 = arith.constant 0 : i32
    return %c0_i32, %c0_i32_0 : i32, i32
  }
  func.func @transform_3(%arg0: i32) -> (i32, i32) {
    %c0_i32 = arith.constant 0 : i32
    %c0_i32_0 = arith.constant 0 : i32
    return %arg0, %c0_i32 : i32, i32
  }
}

module attributes {stable_mosaic.version = 11 : i64} {
  func.func @_head_decode_kernel(%arg0: i32, %arg1: memref<128x64xbf16, #tpu.memory_space<vmem>>, %arg2: memref<64x144xbf16, #tpu.memory_space<vmem>>, %arg3: memref<2x128x144xbf16, #tpu.memory_space<vmem>>, %arg4: memref<2x3x144xf32, #tpu.memory_space<vmem>>, %arg5: memref<128x128xbf16, #tpu.memory_space<vmem>>, %arg6: memref<1x128xf32, #tpu.memory_space<vmem>>, %arg7: memref<128x16xbf16, #tpu.memory_space<vmem>>, %arg8: memref<16x128xbf16, #tpu.memory_space<vmem>>, %arg9: memref<128x8xf32, #tpu.memory_space<vmem>>, %arg10: memref<128x128xf32, #tpu.memory_space<vmem>>) attributes {dimension_semantics = [#tpu.dimension_semantics<parallel>], iteration_bounds = array<i64: 6>, scalar_prefetch = 0 : i64, scratch_operands = 0 : i64, tpu.core_type = #tpu.core_type<tc>, window_params = [{transform_indices = @transform_0, window_bounds = array<i64: 128, 64>}, {pipeline_mode = #tpu.pipeline_mode<synchronous>, transform_indices = @transform_1, window_bounds = array<i64: 64, 144>}, {pipeline_mode = #tpu.pipeline_mode<synchronous>, transform_indices = @transform_2, window_bounds = array<i64: 2, 128, 144>}, {pipeline_mode = #tpu.pipeline_mode<synchronous>, transform_indices = @transform_3, window_bounds = array<i64: 2, 3, 144>}, {pipeline_mode = #tpu.pipeline_mode<synchronous>, transform_indices = @transform_4, window_bounds = array<i64: 128, 128>}, {pipeline_mode = #tpu.pipeline_mode<synchronous>, transform_indices = @transform_5, window_bounds = array<i64: 1, 128>}, {pipeline_mode = #tpu.pipeline_mode<synchronous>, transform_indices = @transform_6, window_bounds = array<i64: 128, 16>}, {pipeline_mode = #tpu.pipeline_mode<synchronous>, transform_indices = @transform_7, window_bounds = array<i64: 16, 128>}, {transform_indices = @transform_8, window_bounds = array<i64: 128, 8>}, {transform_indices = @transform_9, window_bounds = array<i64: 128, 128>}]} {
    %c0 = arith.constant 0 : index
    %c0_0 = arith.constant 0 : index
    %0 = vector.load %arg7[%c0, %c0_0] : memref<128x16xbf16, #tpu.memory_space<vmem>>, vector<128x16xbf16>
    %c0_1 = arith.constant 0 : index
    %c0_2 = arith.constant 0 : index
    %1 = vector.load %arg8[%c0_1, %c0_2] : memref<16x128xbf16, #tpu.memory_space<vmem>>, vector<16x128xbf16>
    %c0_3 = arith.constant 0 : index
    %c0_4 = arith.constant 0 : index
    %2 = vector.load %arg1[%c0_3, %c0_4] : memref<128x64xbf16, #tpu.memory_space<vmem>>, vector<128x64xbf16>
    %c0_5 = arith.constant 0 : index
    %c0_6 = arith.constant 0 : index
    %c0_7 = arith.constant 0 : index
    %3 = vector.load %arg4[%c0_5, %c0_6, %c0_7] : memref<2x3x144xf32, #tpu.memory_space<vmem>>, vector<1x3x144xf32>
    %4 = vector.shape_cast %3 : vector<1x3x144xf32> to vector<3x144xf32>
    %c0_8 = arith.constant 0 : index
    %c0_9 = arith.constant 0 : index
    %5 = vector.load %arg2[%c0_8, %c0_9] : memref<64x144xbf16, #tpu.memory_space<vmem>>, vector<64x144xbf16>
    %cst = arith.constant dense<0.000000e+00> : vector<128x144xf32>
    %6 = tpu.matmul %2, %5, %cst {dimension_numbers = #tpu.dot_dimension_numbers<[1], [0], [0], [1], [0, 0, 1, 1], [], []>} : vector<128x64xbf16>, vector<64x144xbf16>, vector<128x144xf32> -> vector<128x144xf32>
    %7 = vector.extract_strided_slice %4 {offsets = [0, 0], sizes = [1, 144], strides = [1, 1]} : vector<3x144xf32> to vector<1x144xf32>
    %8 = vector.broadcast %7 : vector<1x144xf32> to vector<128x144xf32>
    %9 = arith.addf %6, %8 : vector<128x144xf32>
    %10 = vector.extract_strided_slice %9 {offsets = [0, 0], sizes = [128, 128], strides = [1, 1]} : vector<128x144xf32> to vector<128x128xf32>
    %11 = vector.extract_strided_slice %9 {offsets = [0, 128], sizes = [128, 16], strides = [1, 1]} : vector<128x144xf32> to vector<128x16xf32>
    %cst_10 = arith.constant 1.250000e-01 : f32
    %12 = vector.broadcast %cst_10 : f32 to vector<128x16xf32>
    %13 = arith.mulf %11, %12 : vector<128x16xf32>
    %14 = arith.truncf %13 : vector<128x16xf32> to vector<128x16xbf16>
    %cst_11 = arith.constant dense<0.000000e+00> : vector<128x128xf32>
    %15 = tpu.matmul %14, %1, %cst_11 {dimension_numbers = #tpu.dot_dimension_numbers<[1], [0], [0], [1], [0, 0, 1, 1], [], []>} : vector<128x16xbf16>, vector<16x128xbf16>, vector<128x128xf32> -> vector<128x128xf32>
    %16 = arith.subf %10, %15 : vector<128x128xf32>
    %17 = arith.truncf %16 : vector<128x128xf32> to vector<128x128xbf16>
    %18 = arith.mulf %17, %17 : vector<128x128xbf16>
    %cst_12 = arith.constant dense<0.000000e+00> : vector<128x16xf32>
    %19 = tpu.matmul %18, %0, %cst_12 {dimension_numbers = #tpu.dot_dimension_numbers<[1], [0], [0], [1], [0, 0, 1, 1], [], []>} : vector<128x128xbf16>, vector<128x16xbf16>, vector<128x16xf32> -> vector<128x16xf32>
    %cst_13 = arith.constant 1.250000e-01 : f32
    %20 = vector.broadcast %cst_13 : f32 to vector<128x16xf32>
    %21 = arith.mulf %19, %20 : vector<128x16xf32>
    %cst_14 = arith.constant 9.99999974E-6 : f32
    %22 = vector.broadcast %cst_14 : f32 to vector<128x16xf32>
    %23 = arith.addf %21, %22 : vector<128x16xf32>
    %24 = math.rsqrt %23 : vector<128x16xf32>
    %25 = arith.truncf %24 : vector<128x16xf32> to vector<128x16xbf16>
    %cst_15 = arith.constant dense<0.000000e+00> : vector<128x128xf32>
    %26 = tpu.matmul %25, %1, %cst_15 {dimension_numbers = #tpu.dot_dimension_numbers<[1], [0], [0], [1], [0, 0, 1, 1], [], []>} : vector<128x16xbf16>, vector<16x128xbf16>, vector<128x128xf32> -> vector<128x128xf32>
    %27 = arith.mulf %16, %26 : vector<128x128xf32>
    %28 = vector.extract_strided_slice %4 {offsets = [1, 0], sizes = [1, 128], strides = [1, 1]} : vector<3x144xf32> to vector<1x128xf32>
    %29 = vector.broadcast %28 : vector<1x128xf32> to vector<128x128xf32>
    %30 = arith.mulf %27, %29 : vector<128x128xf32>
    %31 = vector.extract_strided_slice %4 {offsets = [2, 0], sizes = [1, 128], strides = [1, 1]} : vector<3x144xf32> to vector<1x128xf32>
    %32 = vector.broadcast %31 : vector<1x128xf32> to vector<128x128xf32>
    %33 = arith.addf %30, %32 : vector<128x128xf32>
    %cst_16 = arith.constant 0.000000e+00 : f32
    %34 = vector.broadcast %cst_16 : f32 to vector<128x128xf32>
    %35 = arith.maximumf %33, %34 : vector<128x128xf32>
    %36 = arith.truncf %35 : vector<128x128xf32> to vector<128x128xbf16>
    %c1 = arith.constant 1 : index
    %c0_17 = arith.constant 0 : index
    %c0_18 = arith.constant 0 : index
    %37 = vector.load %arg4[%c1, %c0_17, %c0_18] : memref<2x3x144xf32, #tpu.memory_space<vmem>>, vector<1x3x144xf32>
    %38 = vector.shape_cast %37 : vector<1x3x144xf32> to vector<3x144xf32>
    %c1_19 = arith.constant 1 : index
    %c0_20 = arith.constant 0 : index
    %c0_21 = arith.constant 0 : index
    %39 = vector.load %arg3[%c1_19, %c0_20, %c0_21] : memref<2x128x144xbf16, #tpu.memory_space<vmem>>, vector<1x128x144xbf16>
    %40 = vector.shape_cast %39 : vector<1x128x144xbf16> to vector<128x144xbf16>
    %cst_22 = arith.constant dense<0.000000e+00> : vector<128x144xf32>
    %41 = tpu.matmul %36, %40, %cst_22 {dimension_numbers = #tpu.dot_dimension_numbers<[1], [0], [0], [1], [0, 0, 1, 1], [], []>} : vector<128x128xbf16>, vector<128x144xbf16>, vector<128x144xf32> -> vector<128x144xf32>
    %42 = vector.extract_strided_slice %38 {offsets = [0, 0], sizes = [1, 144], strides = [1, 1]} : vector<3x144xf32> to vector<1x144xf32>
    %43 = vector.broadcast %42 : vector<1x144xf32> to vector<128x144xf32>
    %44 = arith.addf %41, %43 : vector<128x144xf32>
    %45 = vector.extract_strided_slice %44 {offsets = [0, 0], sizes = [128, 128], strides = [1, 1]} : vector<128x144xf32> to vector<128x128xf32>
    %46 = vector.extract_strided_slice %44 {offsets = [0, 128], sizes = [128, 16], strides = [1, 1]} : vector<128x144xf32> to vector<128x16xf32>
    %cst_23 = arith.constant 1.250000e-01 : f32
    %47 = vector.broadcast %cst_23 : f32 to vector<128x16xf32>
    %48 = arith.mulf %46, %47 : vector<128x16xf32>
    %49 = arith.truncf %48 : vector<128x16xf32> to vector<128x16xbf16>
    %cst_24 = arith.constant dense<0.000000e+00> : vector<128x128xf32>
    %50 = tpu.matmul %49, %1, %cst_24 {dimension_numbers = #tpu.dot_dimension_numbers<[1], [0], [0], [1], [0, 0, 1, 1], [], []>} : vector<128x16xbf16>, vector<16x128xbf16>, vector<128x128xf32> -> vector<128x128xf32>
    %51 = arith.subf %45, %50 : vector<128x128xf32>
    %52 = arith.truncf %51 : vector<128x128xf32> to vector<128x128xbf16>
    %53 = arith.mulf %52, %52 : vector<128x128xbf16>
    %cst_25 = arith.constant dense<0.000000e+00> : vector<128x16xf32>
    %54 = tpu.matmul %53, %0, %cst_25 {dimension_numbers = #tpu.dot_dimension_numbers<[1], [0], [0], [1], [0, 0, 1, 1], [], []>} : vector<128x128xbf16>, vector<128x16xbf16>, vector<128x16xf32> -> vector<128x16xf32>
    %cst_26 = arith.constant 1.250000e-01 : f32
    %55 = vector.broadcast %cst_26 : f32 to vector<128x16xf32>
    %56 = arith.mulf %54, %55 : vector<128x16xf32>
    %cst_27 = arith.constant 9.99999974E-6 : f32
    %57 = vector.broadcast %cst_27 : f32 to vector<128x16xf32>
    %58 = arith.addf %56, %57 : vector<128x16xf32>
    %59 = math.rsqrt %58 : vector<128x16xf32>
    %60 = arith.truncf %59 : vector<128x16xf32> to vector<128x16xbf16>
    %cst_28 = arith.constant dense<0.000000e+00> : vector<128x128xf32>
    %61 = tpu.matmul %60, %1, %cst_28 {dimension_numbers = #tpu.dot_dimension_numbers<[1], [0], [0], [1], [0, 0, 1, 1], [], []>} : vector<128x16xbf16>, vector<16x128xbf16>, vector<128x128xf32> -> vector<128x128xf32>
    %62 = arith.mulf %51, %61 : vector<128x128xf32>
    %63 = vector.extract_strided_slice %38 {offsets = [1, 0], sizes = [1, 128], strides = [1, 1]} : vector<3x144xf32> to vector<1x128xf32>
    %64 = vector.broadcast %63 : vector<1x128xf32> to vector<128x128xf32>
    %65 = arith.mulf %62, %64 : vector<128x128xf32>
    %66 = vector.extract_strided_slice %38 {offsets = [2, 0], sizes = [1, 128], strides = [1, 1]} : vector<3x144xf32> to vector<1x128xf32>
    %67 = vector.broadcast %66 : vector<1x128xf32> to vector<128x128xf32>
    %68 = arith.addf %65, %67 : vector<128x128xf32>
    %cst_29 = arith.constant 0.000000e+00 : f32
    %69 = vector.broadcast %cst_29 : f32 to vector<128x128xf32>
    %70 = arith.maximumf %68, %69 : vector<128x128xf32>
    %71 = arith.truncf %70 : vector<128x128xf32> to vector<128x128xbf16>
    %c0_30 = arith.constant 0 : index
    %c0_31 = arith.constant 0 : index
    %72 = vector.load %arg5[%c0_30, %c0_31] : memref<128x128xbf16, #tpu.memory_space<vmem>>, vector<128x128xbf16>
    %cst_32 = arith.constant dense<0.000000e+00> : vector<128x128xf32>
    %73 = tpu.matmul %71, %72, %cst_32 {dimension_numbers = #tpu.dot_dimension_numbers<[1], [0], [0], [1], [0, 0, 1, 1], [], []>} : vector<128x128xbf16>, vector<128x128xbf16>, vector<128x128xf32> -> vector<128x128xf32>
    %c0_33 = arith.constant 0 : index
    %c0_34 = arith.constant 0 : index
    %74 = vector.load %arg6[%c0_33, %c0_34] : memref<1x128xf32, #tpu.memory_space<vmem>>, vector<1x128xf32>
    %75 = vector.broadcast %74 : vector<1x128xf32> to vector<128x128xf32>
    %76 = arith.addf %73, %75 : vector<128x128xf32>
    %77 = vector.extract_strided_slice %76 {offsets = [0, 0], sizes = [128, 81], strides = [1, 1]} : vector<128x128xf32> to vector<128x81xf32>
    %78 = vector.extract_strided_slice %76 {offsets = [0, 81], sizes = [128, 1], strides = [1, 1]} : vector<128x128xf32> to vector<128x1xf32>
    %79 = vector.extract_strided_slice %76 {offsets = [0, 82], sizes = [128, 4], strides = [1, 1]} : vector<128x128xf32> to vector<128x4xf32>
    %cst_35 = arith.constant dense<0xFF800000> : vector<128xf32>
    %80 = vector.multi_reduction <maximumf>, %77, %cst_35 [1] : vector<128x81xf32> to vector<128xf32>
    %81 = vector.shape_cast %80 : vector<128xf32> to vector<128x1xf32>
    %82 = tpu.iota {dimensions = array<i32: 1>} : vector<128x81xi32>
    %83 = vector.broadcast %81 : vector<128x1xf32> to vector<128x81xf32>
    %84 = arith.cmpf oge, %77, %83 : vector<128x81xf32>
    %c81_i32 = arith.constant 81 : i32
    %85 = vector.broadcast %c81_i32 : i32 to vector<128x81xi32>
    %86 = arith.select %84, %82, %85 : vector<128x81xi1>, vector<128x81xi32>
    %cst_36 = arith.constant dense<2147483647> : vector<128xi32>
    %87 = vector.multi_reduction <minsi>, %86, %cst_36 [1] : vector<128x81xi32> to vector<128xi32>
    %88 = vector.shape_cast %87 : vector<128xi32> to vector<128x1xi32>
    %89 = arith.sitofp %88 : vector<128x1xi32> to vector<128x1xf32>
    %90 = arith.negf %81 : vector<128x1xf32>
    %91 = math.exp %90 : vector<128x1xf32>
    %cst_37 = arith.constant 1.000000e+00 : f32
    %92 = vector.broadcast %cst_37 : f32 to vector<128x1xf32>
    %93 = arith.addf %92, %91 : vector<128x1xf32>
    %94 = arith.divf %92, %93 : vector<128x1xf32>
    %95 = arith.negf %78 : vector<128x1xf32>
    %96 = math.exp %95 : vector<128x1xf32>
    %cst_38 = arith.constant 1.000000e+00 : f32
    %97 = vector.broadcast %cst_38 : f32 to vector<128x1xf32>
    %98 = arith.addf %97, %96 : vector<128x1xf32>
    %99 = arith.divf %97, %98 : vector<128x1xf32>
    %100 = arith.mulf %94, %99 : vector<128x1xf32>
    %cst_39 = arith.constant 0.000000e+00 : f32
    %101 = vector.broadcast %cst_39 : f32 to vector<128x1xf32>
    %102 = arith.maximumf %100, %101 : vector<128x1xf32>
    %103 = math.sqrt %102 : vector<128x1xf32>
    %c0_40 = arith.constant 0 : index
    %c0_41 = arith.constant 0 : index
    %104 = vector.load %arg9[%c0_40, %c0_41] : memref<128x8xf32, #tpu.memory_space<vmem>>, vector<128x8xf32>
    %105 = vector.extract_strided_slice %104 {offsets = [0, 0], sizes = [128, 2], strides = [1, 1]} : vector<128x8xf32> to vector<128x2xf32>
    %106 = vector.extract_strided_slice %104 {offsets = [0, 2], sizes = [128, 1], strides = [1, 1]} : vector<128x8xf32> to vector<128x1xf32>
    %107 = vector.broadcast %106 : vector<128x1xf32> to vector<128x4xf32>
    %108 = arith.mulf %107, %79 : vector<128x4xf32>
    %109 = math.exp %108 : vector<128x4xf32>
    %110 = vector.extract_strided_slice %109 {offsets = [0, 0], sizes = [128, 2], strides = [1, 1]} : vector<128x4xf32> to vector<128x2xf32>
    %111 = arith.subf %105, %110 : vector<128x2xf32>
    %112 = vector.extract_strided_slice %109 {offsets = [0, 2], sizes = [128, 2], strides = [1, 1]} : vector<128x4xf32> to vector<128x2xf32>
    %113 = arith.addf %105, %112 : vector<128x2xf32>
    %114 = tpu.concatenate %111, %113 in 1 : vector<128x2xf32>, vector<128x2xf32> -> vector<128x4xf32>
    %cst_42 = arith.constant 0.000000e+00 : f32
    %115 = vector.broadcast %cst_42 : f32 to vector<128x122xf32>
    %116 = tpu.concatenate %114, %103, %89, %115 in 1 : vector<128x4xf32>, vector<128x1xf32>, vector<128x1xf32>, vector<128x122xf32> -> vector<128x128xf32>
    %c0_43 = arith.constant 0 : index
    %c0_44 = arith.constant 0 : index
    %117 = vector.load %arg10[%c0_43, %c0_44] : memref<128x128xf32, #tpu.memory_space<vmem>>, vector<128x128xf32>
    tpu.vector_store %arg10[%c0_43, %c0_44], %116 {strides = array<i32>} : memref<128x128xf32, #tpu.memory_space<vmem>>, vector<128x128xf32>,
    return
  }
  func.func @transform_0(%arg0: i32) -> (i32, i32) {
    %c0_i32 = arith.constant 0 : i32
    %c0_i32_0 = arith.constant 0 : i32
    return %arg0, %c0_i32 : i32, i32
  }
  func.func @transform_1(%arg0: i32) -> (i32, i32) {
    %c0_i32 = arith.constant 0 : i32
    %c0_i32_0 = arith.constant 0 : i32
    %c0_i32_1 = arith.constant 0 : i32
    return %c0_i32, %c0_i32_0 : i32, i32
  }
  func.func @transform_2(%arg0: i32) -> (i32, i32, i32) {
    %c0_i32 = arith.constant 0 : i32
    %c0_i32_0 = arith.constant 0 : i32
    %c0_i32_1 = arith.constant 0 : i32
    %c0_i32_2 = arith.constant 0 : i32
    return %c0_i32, %c0_i32_0, %c0_i32_1 : i32, i32, i32
  }
  func.func @transform_3(%arg0: i32) -> (i32, i32, i32) {
    %c0_i32 = arith.constant 0 : i32
    %c0_i32_0 = arith.constant 0 : i32
    %c0_i32_1 = arith.constant 0 : i32
    %c0_i32_2 = arith.constant 0 : i32
    return %c0_i32, %c0_i32_0, %c0_i32_1 : i32, i32, i32
  }
  func.func @transform_4(%arg0: i32) -> (i32, i32) {
    %c0_i32 = arith.constant 0 : i32
    %c0_i32_0 = arith.constant 0 : i32
    %c0_i32_1 = arith.constant 0 : i32
    return %c0_i32, %c0_i32_0 : i32, i32
  }
  func.func @transform_5(%arg0: i32) -> (i32, i32) {
    %c0_i32 = arith.constant 0 : i32
    %c0_i32_0 = arith.constant 0 : i32
    %c0_i32_1 = arith.constant 0 : i32
    return %c0_i32, %c0_i32_0 : i32, i32
  }
  func.func @transform_6(%arg0: i32) -> (i32, i32) {
    %c0_i32 = arith.constant 0 : i32
    %c0_i32_0 = arith.constant 0 : i32
    %c0_i32_1 = arith.constant 0 : i32
    return %c0_i32, %c0_i32_0 : i32, i32
  }
  func.func @transform_7(%arg0: i32) -> (i32, i32) {
    %c0_i32 = arith.constant 0 : i32
    %c0_i32_0 = arith.constant 0 : i32
    %c0_i32_1 = arith.constant 0 : i32
    return %c0_i32, %c0_i32_0 : i32, i32
  }
  func.func @transform_8(%arg0: i32) -> (i32, i32) {
    %c0_i32 = arith.constant 0 : i32
    %c0_i32_0 = arith.constant 0 : i32
    return %arg0, %c0_i32 : i32, i32
  }
  func.func @transform_9(%arg0: i32) -> (i32, i32) {
    %c0_i32 = arith.constant 0 : i32
    %c0_i32_0 = arith.constant 0 : i32
    return %arg0, %c0_i32 : i32, i32
  }
}

</mosaic_0001>

<llo_original>
// kernel: tile.29
$region0: #{tile.29}
  %s0 = inlined_call_operand.vmem [shape: f32[2,64,2], index: 0, kind: input, shape index: {}]
  %s1 = inlined_call_operand.vmem [shape: f32[128,2], index: 1, kind: output, shape index: {}]
  $region1: #{tile.29} parent=0
    #allocation0 [shape = 'u8[4096]{0}', space=vmem, size = 0x1000, scoped, tag = 'scoped mem for output reshape']
    #allocation1 [shape = 'u8[8192]{0}', space=vmem, size = 0x2000, scoped, tag = 'scoped mem for input reshape']
    %s3 = sshll.u32 1, 2
    %s4 = ssub.s32 %s3, 1
    %s5 = scalar_lea.vmem %s0, 2
    %v6 = vld [vmem:[%s5] sm:%s4]
    %s7 = scalar_lea.vmem [#allocation1], 8
    %8 = vst [vmem:[%s7] sm:%s4] %v6
    %v9 = vld [vmem:[%s0] sm:%s4]
    %10 = vst [vmem:[#allocation1] sm:%s4] %v9
    %s11 = smov 3
    %v12 = vld [vmem:[#allocation1] ss:$8 sm:%s11]
    %vm13 = vcmask 523264
    %14 = vst.msk [vmem:[#allocation0] sm:$0x3] %vm13, %v12
    %s15 = scalar_lea.vmem [#allocation1], 1
    %s16 = smov 3
    %v17 = vld [vmem:[%s15] ss:$8 sm:%s16]
    %18 = vrot.lane.b32.xlu0 %v17, 64
    %v19 = vpop.permute.xlu0 %18
    %vm20 = vcmask 1048064
    %21 = vst.msk [vmem:[#allocation0] sm:$0x3] %vm20, %v19
    %s23 = sshll.u32 1, 2
    %s24 = ssub.s32 %s23, 1
    %v26 = vld [vmem:[#allocation0] sm:%s24]
    %s27 = sshll.u32 1, 2
    %s28 = ssub.s32 %s27, 1
    %29 = vst [vmem:[%s1] sm:%s28] %v26

// kernel: tile.34
$region0: #{tile.34}
  %s0 = inlined_call_operand.vmem [shape: f32[2,16,2], index: 0, kind: input, shape index: {}]
  %s1 = inlined_call_operand.vmem [shape: f32[32,2], index: 1, kind: output, shape index: {}]
  $region1: #{tile.34} parent=0
    #allocation0 [shape = 'u8[4096]{0}', space=vmem, size = 0x1000, scoped, tag = 'scoped mem for output reshape']
    #allocation1 [shape = 'u8[8192]{0}', space=vmem, size = 0x2000, scoped, tag = 'scoped mem for input reshape']
    %s3 = sshll.u32 1, 2
    %s4 = ssub.s32 %s3, 1
    %s5 = scalar_lea.vmem %s0, 2
    %v6 = vld [vmem:[%s5] sm:%s4]
    %s7 = scalar_lea.vmem [#allocation1], 8
    %8 = vst [vmem:[%s7] sm:%s4] %v6
    %v9 = vld [vmem:[%s0] sm:%s4]
    %10 = vst [vmem:[#allocation1] sm:%s4] %v9
    %s11 = smov 3
    %v12 = vld [vmem:[#allocation1] ss:$8 sm:%s11]
    %vm13 = vcmask 130048
    %14 = vst.msk [vmem:[#allocation0] sm:$0x3] %vm13, %v12
    %s15 = scalar_lea.vmem [#allocation1], 1
    %s16 = smov 3
    %v17 = vld [vmem:[%s15] ss:$8 sm:%s16]
    %18 = vrot.lane.b32.xlu0 %v17, 16
    %v19 = vpop.permute.xlu0 %18
    %vm20 = vcmask 261248
    %21 = vst.msk [vmem:[#allocation0] sm:$0x3] %vm20, %v19
    %s23 = sshll.u32 1, 2
    %s24 = ssub.s32 %s23, 1
    %v26 = vld [vmem:[#allocation0] sm:%s24]
    %s27 = sshll.u32 1, 2
    %s28 = ssub.s32 %s27, 1
    %29 = vst [vmem:[%s1] sm:%s28] %v26

// kernel: fcos_inference.2
$region0: #{fcos_inference.2}
  #allocation0 [shape = 'u32[]', space=smem, size = 0x4, offset = 0x4, fixed_abs, tag = 'smem constant byte address 0x4 - core index']
  #allocation1 [shape = 'u32[144,128]{1,0:T(1,128)}', space=vmem, size = 0x12000, scoped, tag = 'internal scratch']
  %s0 = inlined_call_operand.vmem [shape: bf16[512,192], index: 0, kind: input, shape index: {}]
  %s1 = inlined_call_operand.vmem [shape: bf16[192,64], index: 1, kind: input, shape index: {}]
  %s2 = inlined_call_operand.vmem [shape: f32[1,64], index: 2, kind: input, shape index: {}]
  %s3 = inlined_call_operand.vmem [shape: bf16[512,64], index: 3, kind: output, shape index: {}]
  %s4 = sld [smem:[#allocation0]]
  $region45: #{fcos_inference.2} parent=0
    _
  %s6 = ssub.s32 1, %s4
  %s7 = scalar_select 0, %s6, %s4
  loop: start=0, step=1, limit=6
  $region2: #{fcos_inference.2} parent=0 // loop_pre_header
    _
  $region3: #{fcos_inference.2} parent=0 // loop_header
    %s9 = sphi 0, %s13
    %p10 = scmp.ge.s32.totalorder %s9, 6
    %s19 = sphi 0, %s21
    %s22 = sphi 0, %s19
    %s23 = sphi 0, %s22
    %s39 = sphi 0, %s23
    %s43 = sphi 0, %s43
    %s45 = sphi 0, %s43
    %s46 = sphi 0, %s45
    %s60 = sphi 0, %s46
    %s64 = sphi 0, %s64
    %s66 = sphi 0, %s64
    %s67 = sphi 0, %s66
    %s81 = sphi 0, %s67
    %s87 = sphi 0, %s89
    %s90 = sphi 0, %s87
    %s91 = sphi 0, %s90
    %s107 = sphi 0, %s91
  $region4: #{fcos_inference.2} parent=0 // loop_header_branch
    %12 = sbr.rel (%p10) target = $region8
  $region5: #{fcos_inference.2} parent=0 // loop_body
    %s14 = ssub.s32 %s9, 1
    %s15 = ssub.s32 %s9, 2
    %s16 = sadd.s32 %s9, 1
    %s17 = ssub.s32 %s9, %s16
    %p18 = scmp.eq.s32.totalorder %s17, 0
    %s20 = sadd.s32 %s19, 1
    %s21 = scalar_select %p18, %s19, %s20
    %p24 = pneg %p18
    %p25 = scmp.eq.s32.totalorder %s9, 3
    %p26 = por %p24, %p25
    %p27 = scmp.ne.s32.totalorder %s19, %s22
    %p28 = scmp.eq.s32.totalorder %s9, 0
    %p29 = por %p27, %p28
    %p30 = scmp.ne.s32.totalorder %s19, %s22
    %p31 = scmp.eq.s32.totalorder %s14, 3
    %p32 = por %p30, %p31
    %p33 = scmp.ne.s32.totalorder %s22, %s23
    %p34 = scmp.eq.s32.totalorder %s14, 0
    %p35 = por %p33, %p34
    %p36 = scmp.ne.s32.totalorder %s22, %s23
    %p37 = scmp.eq.s32.totalorder %s15, 3
    %p38 = por %p36, %p37
    %p40 = scmp.ne.s32.totalorder %s23, %s39
    %p41 = scmp.eq.s32.totalorder %s15, 0
    %p42 = por %p40, %p41
    %s44 = sadd.s32 %s43, 1
    %p47 = scmp.eq.s32.totalorder %s9, 3
    %p48 = scmp.ne.s32.totalorder %s43, %s45
    %p49 = scmp.eq.s32.totalorder %s9, 0
    %p50 = por %p48, %p49
    %p51 = scmp.ne.s32.totalorder %s43, %s45
    %p52 = scmp.eq.s32.totalorder %s14, 3
    %p53 = por %p51, %p52
    %p54 = scmp.ne.s32.totalorder %s45, %s46
    %p55 = scmp.eq.s32.totalorder %s14, 0
    %p56 = por %p54, %p55
    %p57 = scmp.ne.s32.totalorder %s45, %s46
    %p58 = scmp.eq.s32.totalorder %s15, 3
    %p59 = por %p57, %p58
    %p61 = scmp.ne.s32.totalorder %s46, %s60
    %p62 = scmp.eq.s32.totalorder %s15, 0
    %p63 = por %p61, %p62
    %s65 = sadd.s32 %s64, 1
    %p68 = scmp.eq.s32.totalorder %s9, 3
    %p69 = scmp.ne.s32.totalorder %s64, %s66
    %p70 = scmp.eq.s32.totalorder %s9, 0
    %p71 = por %p69, %p70
    %p72 = scmp.ne.s32.totalorder %s64, %s66
    %p73 = scmp.eq.s32.totalorder %s14, 3
    %p74 = por %p72, %p73
    %p75 = scmp.ne.s32.totalorder %s66, %s67
    %p76 = scmp.eq.s32.totalorder %s14, 0
    %p77 = por %p75, %p76
    %p78 = scmp.ne.s32.totalorder %s66, %s67
    %p79 = scmp.eq.s32.totalorder %s15, 3
    %p80 = por %p78, %p79
    %p82 = scmp.ne.s32.totalorder %s67, %s81
    %p83 = scmp.eq.s32.totalorder %s15, 0
    %p84 = por %p82, %p83
    %s85 = ssub.s32 %s9, %s16
    %p86 = scmp.eq.s32.totalorder %s85, 0
    %s88 = sadd.s32 %s87, 1
    %s89 = scalar_select %p86, %s87, %s88
    %p92 = pneg %p86
    %p93 = scmp.eq.s32.totalorder %s9, 3
    %p94 = por %p92, %p93
    %p95 = scmp.ne.s32.totalorder %s87, %s90
    %p96 = scmp.eq.s32.totalorder %s9, 0
    %p97 = por %p95, %p96
    %p98 = scmp.ne.s32.totalorder %s87, %s90
    %p99 = scmp.eq.s32.totalorder %s14, 3
    %p100 = por %p98, %p99
    %p101 = scmp.ne.s32.totalorder %s90, %s91
    %p102 = scmp.eq.s32.totalorder %s14, 0
    %p103 = por %p101, %p102
    %p104 = scmp.ne.s32.totalorder %s90, %s91
    %p105 = scmp.eq.s32.totalorder %s15, 3
    %p106 = por %p104, %p105
    %p108 = scmp.ne.s32.totalorder %s91, %s107
    %p109 = scmp.eq.s32.totalorder %s15, 0
    %p110 = por %p108, %p109
    %p111 = scmp.le.s32.totalorder 1, %s9
    %p112 = scmp.lt.s32.totalorder %s9, 5
    %p113 = pnand %p111, %p112
    %p114 = pneg %p113
    // Predicated region
    $region9: #{fcos_inference.2} parent=5 // pred_check
      _
    $region10: #{fcos_inference.2} parent=5 // pred_check_branch
      %116 = sbr.rel (%p113) target = $region12
    $region11: #{fcos_inference.2} parent=5 // pred_region
      %s117 = ssub.s32 %s9, 1
      // Predicated region
      $region13: #{fcos_inference.2} parent=11 // pred_check
        %p118 = pneg %p56
      $region14: #{fcos_inference.2} parent=11 // pred_check_branch
        %120 = sbr.rel (%p118) target = $region16
      $region15: #{fcos_inference.2} parent=11 // pred_region
        _
      $region16: #{fcos_inference.2} parent=11 // pred_fallthru
        _
      // Predicated region
      $region17: #{fcos_inference.2} parent=11 // pred_check
        %p121 = pneg %p77
      $region18: #{fcos_inference.2} parent=11 // pred_check_branch
        %123 = sbr.rel (%p121) target = $region20
      $region19: #{fcos_inference.2} parent=11 // pred_region
        _
      $region20: #{fcos_inference.2} parent=11 // pred_fallthru
        _
    $region12: #{fcos_inference.2} parent=5 // pred_fallthru
      _
    %p124 = scmp.lt.s32.totalorder %s9, 4
    // Predicated region
    $region21: #{fcos_inference.2} parent=5 // pred_check
      %p125 = pneg %p124
    $region22: #{fcos_inference.2} parent=5 // pred_check_branch
      %127 = sbr.rel (%p125) target = $region24
    $region23: #{fcos_inference.2} parent=5 // pred_region
      // Predicated region
      $region25: #{fcos_inference.2} parent=23 // pred_check
        %p128 = pneg %p29
      $region26: #{fcos_inference.2} parent=23 // pred_check_branch
        %130 = sbr.rel (%p128) target = $region28
      $region27: #{fcos_inference.2} parent=23 // pred_region
        %s131 = smul.u32 16, %s9
        %p132 = scmp.lt.s32.totalorder %s131, 63
        %s133 = scalar_select %p132, %s131, 63
        %s134 = smul.addr %s133, 2
        %s135 = smul.addr %s134, 4
        %s136 = scalar_lea.vmem %s0, %s135
        %s137 = smul.u32 16, %s9
      $region28: #{fcos_inference.2} parent=23 // pred_fallthru
        _
    $region24: #{fcos_inference.2} parent=5 // pred_fallthru
      _
    %p138 = scmp.le.s32.totalorder 1, %s9
    %p139 = scmp.lt.s32.totalorder %s9, 5
    %p140 = pnand %p138, %p139
    %p141 = pneg %p140
    // Predicated region
    $region29: #{fcos_inference.2} parent=5 // pred_check
      _
    $region30: #{fcos_inference.2} parent=5 // pred_check_branch
      %143 = sbr.rel (%p140) target = $region32
    $region31: #{fcos_inference.2} parent=5 // pred_region
      %s144 = ssub.s32 %s9, 1
      %s145 = smul.u32 16, %s14
      %p146 = scmp.lt.s32.totalorder %s145, 63
      %s147 = scalar_select %p146, %s145, 63
      %s148 = smul.addr %s147, 2
      %s149 = smul.addr %s148, 4
      %s150 = scalar_lea.vmem %s0, %s149
      %p151 = pneg %p35
      %p152 = pneg %p32
      %p153 = pneg %p56
      %p154 = pneg %p53
      %p155 = pneg %p77
      %p156 = pneg %p74
      %p157 = pneg %p103
      %p158 = pneg %p100
      %s159 = smul.u32 16, %s14
      %p160 = scmp.lt.s32.totalorder %s159, 63
      %s161 = scalar_select %p160, %s159, 63
      %s162 = smul.addr %s161, 4
      %s163 = scalar_lea.vmem %s3, %s162
      %s164 = smul.u32 16, %s14
      %p165 = scmp.lt.s32.totalorder %s164, 63
      %s166 = scalar_select %p165, %s164, 63
      %s167 = smul.addr %s166, 2
      %s168 = smul.addr %s167, 4
      %s169 = scalar_lea.vmem %s0, %s168
      %s170 = smul.u32 16, %s14
      %s171 = smul.u32 16, %s14
      %p172 = scmp.lt.s32.totalorder %s171, 63
      %s173 = scalar_select %p172, %s171, 63
      %s174 = smul.addr %s173, 4
      %s175 = scalar_lea.vmem %s3, %s174
      %s176 = smul.u32 16, %s14
      %v178 = vld [vmem:[%s169] sm:$0xff]
      %v179 = vld [vmem:[%s169 + $0x8] sm:$0xff]
      %v180 = vld [vmem:[%s169 + $0x10] sm:$0xff]
      %v181 = vld [vmem:[%s169 + $0x18] sm:$0xff]
      %v182 = vld [vmem:[%s169 + $0x20] sm:$0xff]
      %v183 = vld [vmem:[%s169 + $0x28] sm:$0xff]
      %v184 = vld [vmem:[%s169 + $0x30] sm:$0xff]
      %v185 = vld [vmem:[%s169 + $0x38] sm:$0xff]
      %v186 = vld [vmem:[%s169 + $0x40] sm:$0xff]
      %v187 = vld [vmem:[%s169 + $0x48] sm:$0xff]
      %v188 = vld [vmem:[%s169 + $0x50] sm:$0xff]
      %v189 = vld [vmem:[%s169 + $0x58] sm:$0xff]
      %v190 = vld [vmem:[%s169 + $0x60] sm:$0xff]
      %v191 = vld [vmem:[%s169 + $0x68] sm:$0xff]
      %v192 = vld [vmem:[%s169 + $0x70] sm:$0xff]
      %v193 = vld [vmem:[%s169 + $0x78] sm:$0xff]
      %v194 = vld [vmem:[%s1] sm:$0xf]
      %v195 = vld [vmem:[%s1 + $0x4] sm:$0xf]
      %v196 = vld [vmem:[%s1 + $0x8] sm:$0xf]
      %v197 = vld [vmem:[%s1 + $0xc] sm:$0xf]
      %v198 = vld [vmem:[%s1 + $0x10] sm:$0xf]
      %v199 = vld [vmem:[%s1 + $0x14] sm:$0xf]
      %v200 = vld [vmem:[%s1 + $0x18] sm:$0xf]
      %v201 = vld [vmem:[%s1 + $0x1c] sm:$0xf]
      %v202 = vld [vmem:[%s1 + $0x20] sm:$0xf]
      %v203 = vld [vmem:[%s1 + $0x24] sm:$0xf]
      %v204 = vld [vmem:[%s1 + $0x28] sm:$0xf]
      %v205 = vld [vmem:[%s1 + $0x2c] sm:$0xf]
      %v206 = vld [vmem:[%s1 + $0x30] sm:$0xf]
      %v207 = vld [vmem:[%s1 + $0x34] sm:$0xf]
      %v208 = vld [vmem:[%s1 + $0x38] sm:$0xf]
      %v209 = vld [vmem:[%s1 + $0x3c] sm:$0xf]
      %v210 = vld [vmem:[%s1 + $0x40] sm:$0xf]
      %v211 = vld [vmem:[%s1 + $0x44] sm:$0xf]
      %v212 = vld [vmem:[%s1 + $0x48] sm:$0xf]
      %v213 = vld [vmem:[%s1 + $0x4c] sm:$0xf]
      %v214 = vld [vmem:[%s1 + $0x50] sm:$0xf]
      %v215 = vld [vmem:[%s1 + $0x54] sm:$0xf]
      %v216 = vld [vmem:[%s1 + $0x58] sm:$0xf]
      %v217 = vld [vmem:[%s1 + $0x5c] sm:$0xf]
      %v218 = vld [vmem:[%s2] sm:$0x1]
      %v220 = vlaneseq
      %v221 = vshrl.u32 %v220, 7
      %v222 = vsub.s32 0, %v221
      %v223 = vrot.slane %v218, %v222
      %v241 = vunpack.c.l.b16 %v178
      %v242 = vunpack.c.h.b16 %v178
      %v243 = vunpack.c.l.b16 %v179
      %v244 = vunpack.c.h.b16 %v179
      %v245 = vunpack.c.l.b16 %v180
      %v246 = vunpack.c.h.b16 %v180
      %v247 = vunpack.c.l.b16 %v181
      %v248 = vunpack.c.h.b16 %v181
      %v249 = vunpack.c.l.b16 %v182
      %v250 = vunpack.c.h.b16 %v182
      %v251 = vunpack.c.l.b16 %v183
      %v252 = vunpack.c.h.b16 %v183
      %v253 = vunpack.c.l.b16 %v184
      %v254 = vunpack.c.h.b16 %v184
      %v255 = vunpack.c.l.b16 %v185
      %v256 = vunpack.c.h.b16 %v185
      %v257 = vunpack.c.l.b16 %v186
      %v258 = vunpack.c.h.b16 %v186
      %v259 = vunpack.c.l.b16 %v187
      %v260 = vunpack.c.h.b16 %v187
      %v261 = vunpack.c.l.b16 %v188
      %v262 = vunpack.c.h.b16 %v188
      %v263 = vunpack.c.l.b16 %v189
      %v264 = vunpack.c.h.b16 %v189
      %v265 = vunpack.c.l.b16 %v190
      %v266 = vunpack.c.h.b16 %v190
      %v267 = vunpack.c.l.b16 %v191
      %v268 = vunpack.c.h.b16 %v191
      %v269 = vunpack.c.l.b16 %v192
      %v270 = vunpack.c.h.b16 %v192
      %v271 = vunpack.c.l.b16 %v193
      %v272 = vunpack.c.h.b16 %v193
      %v273 = vpack.c.b16 %v243, %v241
      %v274 = vpack.c.b16 %v244, %v242
      %v275 = vpack.c.b16 %v247, %v245
      %v276 = vpack.c.b16 %v248, %v246
      %v277 = vpack.c.b16 %v251, %v249
      %v278 = vpack.c.b16 %v252, %v250
      %v279 = vpack.c.b16 %v255, %v253
      %v280 = vpack.c.b16 %v256, %v254
      %v281 = vpack.c.b16 %v259, %v257
      %v282 = vpack.c.b16 %v260, %v258
      %v283 = vpack.c.b16 %v263, %v261
      %v284 = vpack.c.b16 %v264, %v262
      %v285 = vpack.c.b16 %v267, %v265
      %v286 = vpack.c.b16 %v268, %v266
      %v287 = vpack.c.b16 %v271, %v269
      %v288 = vpack.c.b16 %v272, %v270
      %v321 = vunpack.c.l.b16 %v194
      %v322 = vunpack.c.l.b16 %v195
      %v323 = vunpack.c.l.b16 %v196
      %v324 = vunpack.c.l.b16 %v197
      %v325 = vunpack.c.l.b16 %v198
      %v326 = vunpack.c.l.b16 %v199
      %v327 = vunpack.c.l.b16 %v200
      %v328 = vunpack.c.l.b16 %v201
      %v329 = vunpack.c.l.b16 %v202
      %v330 = vunpack.c.l.b16 %v203
      %v331 = vunpack.c.l.b16 %v204
      %v332 = vunpack.c.l.b16 %v205
      %v333 = vunpack.c.l.b16 %v206
      %v334 = vunpack.c.l.b16 %v207
      %v335 = vunpack.c.l.b16 %v208
      %v336 = vunpack.c.l.b16 %v209
      %v337 = vunpack.c.l.b16 %v210
      %v338 = vunpack.c.l.b16 %v211
      %v339 = vunpack.c.l.b16 %v212
      %v340 = vunpack.c.l.b16 %v213
      %v341 = vunpack.c.l.b16 %v214
      %v342 = vunpack.c.l.b16 %v215
      %v343 = vunpack.c.l.b16 %v216
      %v344 = vunpack.c.l.b16 %v217
      %v345 = vpack.c.b16 %v322, %v321
      %v346 = vpack.c.b16 %v324, %v323
      %v347 = vpack.c.b16 %v326, %v325
      %v348 = vpack.c.b16 %v328, %v327
      %v349 = vpack.c.b16 %v330, %v329
      %v350 = vpack.c.b16 %v332, %v331
      %v351 = vpack.c.b16 %v334, %v333
      %v352 = vpack.c.b16 %v336, %v335
      %v353 = vpack.c.b16 %v338, %v337
      %v354 = vpack.c.b16 %v340, %v339
      %v355 = vpack.c.b16 %v342, %v341
      %v356 = vpack.c.b16 %v344, %v343
      %vm369 = vcmask 523264
      %v371 = vsel %vm369, %v274, 0
      %v374 = vsel %vm369, %v276, 0
      %v377 = vsel %vm369, %v278, 0
      %v380 = vsel %vm369, %v280, 0
      %v383 = vsel %vm369, %v282, 0
      %v386 = vsel %vm369, %v284, 0
      %v389 = vsel %vm369, %v286, 0
      %v392 = vsel %vm369, %v288, 0
      %394 = vmatprep.subr.bf16.mxu0 0
      %395 = vmatpush1.bf16.msra.mxu0 %v352
      %396 = vmatprep.subr.bf16.mxu0 0
      %397 = vmatpush1.bf16.msra.mxu0 %v351
      %398 = vmatprep.subr.bf16.mxu0 0
      %399 = vmatpush1.bf16.msra.mxu0 %v350
      %400 = vmatprep.subr.bf16.mxu0 0
      %401 = vmatpush1.bf16.msra.mxu0 %v349
      %402 = vmatprep.subr.bf16.mxu0 0
      %403 = vmatpush1.bf16.msra.mxu0 %v348
      %404 = vmatprep.subr.bf16.mxu0 0
      %405 = vmatpush1.bf16.msra.mxu0 %v347
      %406 = vmatprep.subr.bf16.mxu0 0
      %407 = vmatpush1.bf16.msra.mxu0 %v346
      %408 = vmatprep.subr.bf16.mxu0 0
      %409 = vmatpush1.bf16.msra.mxu0 %v345
      %410 = vmatprep.subr.bf16.mxu0 0
      %411 = vmatpush2.bf16.msra.mxu0 0
      %412 = vmatprep.subr.bf16.mxu0 0
      %413 = vmatpush2.bf16.msra.mxu0 0
      %414 = vmatprep.subr.bf16.mxu0 0
      %415 = vmatpush2.bf16.msra.mxu0 0
      %416 = vmatprep.subr.bf16.mxu0 0
      %417 = vmatpush2.bf16.msra.mxu0 0
      %418 = vmatprep.subr.bf16.mxu0 0
      %419 = vmatpush2.bf16.msra.mxu0 %v356
      %420 = vmatprep.subr.bf16.mxu0 0
      %421 = vmatpush2.bf16.msra.mxu0 %v355
      %422 = vmatprep.subr.bf16.mxu0 0
      %423 = vmatpush2.bf16.msra.mxu0 %v354
      %424 = vmatprep.subr.bf16.mxu0 0
      %425 = vmatpush2.bf16.msra.mxu0 %v353
      %426 = vmatprep.mubr.bf16.mxu0 %v371
      %427 = vmatmul.mubr.bf16.gmra.mxu0 %v273
      %v428 = vpop.f32.mrf.mxu0
      %v429 = vadd.f32 %v223, %v428
      %v430 = vpop.f32.mrf.mxu0
      %v431 = vpop.f32.mrf.mxu0
      %v432 = vadd.f32 %v223, %v431
      %v433 = vpop.f32.mrf.mxu0
      %434 = vmatprep.mubr.bf16.mxu0 %v374
      %435 = vmatmul.mubr.bf16.gmra.mxu0 %v275
      %v436 = vpop.f32.mrf.mxu0
      %v437 = vadd.f32 %v223, %v436
      %v438 = vpop.f32.mrf.mxu0
      %v439 = vpop.f32.mrf.mxu0
      %v440 = vadd.f32 %v223, %v439
      %v441 = vpop.f32.mrf.mxu0
      %442 = vmatprep.mubr.bf16.mxu0 %v377
      %443 = vmatmul.mubr.bf16.gmra.mxu0 %v277
      %v444 = vpop.f32.mrf.mxu0
      %v445 = vadd.f32 %v223, %v444
      %v446 = vpop.f32.mrf.mxu0
      %v447 = vpop.f32.mrf.mxu0
      %v448 = vadd.f32 %v223, %v447
      %v449 = vpop.f32.mrf.mxu0
      %450 = vmatprep.mubr.bf16.mxu0 %v380
      %451 = vmatmul.mubr.bf16.gmra.mxu0 %v279
      %v452 = vpop.f32.mrf.mxu0
      %v453 = vadd.f32 %v223, %v452
      %v454 = vpop.f32.mrf.mxu0
      %v455 = vpop.f32.mrf.mxu0
      %v456 = vadd.f32 %v223, %v455
      %v457 = vpop.f32.mrf.mxu0
      %458 = vmatprep.mubr.bf16.mxu0 %v383
      %459 = vmatmul.mubr.bf16.gmra.mxu0 %v281
      %v460 = vpop.f32.mrf.mxu0
      %v461 = vadd.f32 %v223, %v460
      %v462 = vpop.f32.mrf.mxu0
      %v463 = vpop.f32.mrf.mxu0
      %v464 = vadd.f32 %v223, %v463
      %v465 = vpop.f32.mrf.mxu0
      %466 = vmatprep.mubr.bf16.mxu0 %v386
      %467 = vmatmul.mubr.bf16.gmra.mxu0 %v283
      %v468 = vpop.f32.mrf.mxu0
      %v469 = vadd.f32 %v223, %v468
      %v470 = vpop.f32.mrf.mxu0
      %v471 = vpop.f32.mrf.mxu0
      %v472 = vadd.f32 %v223, %v471
      %v473 = vpop.f32.mrf.mxu0
      %474 = vmatprep.mubr.bf16.mxu0 %v389
      %475 = vmatmul.mubr.bf16.gmra.mxu0 %v285
      %v476 = vpop.f32.mrf.mxu0
      %v477 = vadd.f32 %v223, %v476
      %v478 = vpop.f32.mrf.mxu0
      %v479 = vpop.f32.mrf.mxu0
      %v480 = vadd.f32 %v223, %v479
      %v481 = vpop.f32.mrf.mxu0
      %482 = vmatprep.mubr.bf16.mxu0 %v392
      %483 = vmatmul.mubr.bf16.gmra.mxu0 %v287
      %v484 = vpop.f32.mrf.mxu0
      %v485 = vadd.f32 %v223, %v484
      %v486 = vpop.f32.mrf.mxu0
      %v487 = vpop.f32.mrf.mxu0
      %v488 = vadd.f32 %v223, %v487
      %v489 = vpop.f32.mrf.mxu0
      %490 = vdwg.mxu0
      %v491 = vmax.f32 %v429, 0.0
      %v492 = vmax.f32 %v432, 0.0
      %v493 = vmax.f32 %v437, 0.0
      %v494 = vmax.f32 %v440, 0.0
      %v495 = vmax.f32 %v445, 0.0
      %v496 = vmax.f32 %v448, 0.0
      %v497 = vmax.f32 %v453, 0.0
      %v498 = vmax.f32 %v456, 0.0
      %v499 = vmax.f32 %v461, 0.0
      %v500 = vmax.f32 %v464, 0.0
      %v501 = vmax.f32 %v469, 0.0
      %v502 = vmax.f32 %v472, 0.0
      %v503 = vmax.f32 %v477, 0.0
      %v504 = vmax.f32 %v480, 0.0
      %v505 = vmax.f32 %v485, 0.0
      %v506 = vmax.f32 %v488, 0.0
      %v507 = vpack.c.bf16 %v492, %v491
      %v508 = vpack.c.bf16 %v494, %v493
      %v509 = vpack.c.bf16 %v496, %v495
      %v510 = vpack.c.bf16 %v498, %v497
      %v511 = vpack.c.bf16 %v500, %v499
      %v512 = vpack.c.bf16 %v502, %v501
      %v513 = vpack.c.bf16 %v504, %v503
      %v514 = vpack.c.bf16 %v506, %v505
      %v523 = vunpack.c.l.b16 %v507
      %v524 = vunpack.c.h.b16 %v507
      %v525 = vunpack.c.l.b16 %v508
      %v526 = vunpack.c.h.b16 %v508
      %v527 = vunpack.c.l.b16 %v509
      %v528 = vunpack.c.h.b16 %v509
      %v529 = vunpack.c.l.b16 %v510
      %v530 = vunpack.c.h.b16 %v510
      %v531 = vunpack.c.l.b16 %v511
      %v532 = vunpack.c.h.b16 %v511
      %v533 = vunpack.c.l.b16 %v512
      %v534 = vunpack.c.h.b16 %v512
      %v535 = vunpack.c.l.b16 %v513
      %v536 = vunpack.c.h.b16 %v513
      %v537 = vunpack.c.l.b16 %v514
      %v538 = vunpack.c.h.b16 %v514
      %v539 = vpack.c.b16 %v523, %v523
      %v540 = vpack.c.b16 %v524, %v524
      %v541 = vpack.c.b16 %v525, %v525
      %v542 = vpack.c.b16 %v526, %v526
      %v543 = vpack.c.b16 %v527, %v527
      %v544 = vpack.c.b16 %v528, %v528
      %v545 = vpack.c.b16 %v529, %v529
      %v546 = vpack.c.b16 %v530, %v530
      %v547 = vpack.c.b16 %v531, %v531
      %v548 = vpack.c.b16 %v532, %v532
      %v549 = vpack.c.b16 %v533, %v533
      %v550 = vpack.c.b16 %v534, %v534
      %v551 = vpack.c.b16 %v535, %v535
      %v552 = vpack.c.b16 %v536, %v536
      %v553 = vpack.c.b16 %v537, %v537
      %v554 = vpack.c.b16 %v538, %v538
      %vm571 = vcmask 519168
      %572 = vst.msk [vmem:[%s175] sm:$0xf] %vm571, %v539
      %573 = vst.msk [vmem:[%s175 + $0x4] sm:$0xf] %vm571, %v540
      %574 = vst.msk [vmem:[%s175 + $0x8] sm:$0xf] %vm571, %v541
      %575 = vst.msk [vmem:[%s175 + $0xc] sm:$0xf] %vm571, %v542
      %576 = vst.msk [vmem:[%s175 + $0x10] sm:$0xf] %vm571, %v543
      %577 = vst.msk [vmem:[%s175 + $0x14] sm:$0xf] %vm571, %v544
      %578 = vst.msk [vmem:[%s175 + $0x18] sm:$0xf] %vm571, %v545
      %579 = vst.msk [vmem:[%s175 + $0x1c] sm:$0xf] %vm571, %v546
      %580 = vst.msk [vmem:[%s175 + $0x20] sm:$0xf] %vm571, %v547
      %581 = vst.msk [vmem:[%s175 + $0x24] sm:$0xf] %vm571, %v548
      %582 = vst.msk [vmem:[%s175 + $0x28] sm:$0xf] %vm571, %v549
      %583 = vst.msk [vmem:[%s175 + $0x2c] sm:$0xf] %vm571, %v550
      %584 = vst.msk [vmem:[%s175 + $0x30] sm:$0xf] %vm571, %v551
      %585 = vst.msk [vmem:[%s175 + $0x34] sm:$0xf] %vm571, %v552
      %586 = vst.msk [vmem:[%s175 + $0x38] sm:$0xf] %vm571, %v553
      %587 = vst.msk [vmem:[%s175 + $0x3c] sm:$0xf] %vm571, %v554
      %s588 = smul.u32 16, %s14
      %p589 = scmp.lt.s32.totalorder %s588, 63
      %s590 = scalar_select %p589, %s588, 63
      %s591 = smul.addr %s590, 4
      %s592 = scalar_lea.vmem %s3, %s591
      // Predicated region
      $region33: #{fcos_inference.2} parent=31 // pred_check
        %p593 = pneg %p100
      $region34: #{fcos_inference.2} parent=31 // pred_check_branch
        %595 = sbr.rel (%p593) target = $region36
      $region35: #{fcos_inference.2} parent=31 // pred_region
        %s596 = smul.u32 16, %s14
      $region36: #{fcos_inference.2} parent=31 // pred_fallthru
        _
    $region32: #{fcos_inference.2} parent=5 // pred_fallthru
      _
    %p597 = scmp.le.s32.totalorder 2, %s9
    // Predicated region
    $region37: #{fcos_inference.2} parent=5 // pred_check
      %p598 = pneg %p597
    $region38: #{fcos_inference.2} parent=5 // pred_check_branch
      %600 = sbr.rel (%p598) target = $region40
    $region39: #{fcos_inference.2} parent=5 // pred_region
      %s601 = ssub.s32 %s9, 2
      // Predicated region
      $region41: #{fcos_inference.2} parent=39 // pred_check
        %p602 = pneg %p106
      $region42: #{fcos_inference.2} parent=39 // pred_check_branch
        %604 = sbr.rel (%p602) target = $region44
      $region43: #{fcos_inference.2} parent=39 // pred_region
        %s605 = smul.u32 16, %s15
        %p606 = scmp.lt.s32.totalorder %s605, 63
        %s607 = scalar_select %p606, %s605, 63
        %s608 = smul.addr %s607, 4
        %s609 = scalar_lea.vmem %s3, %s608
      $region44: #{fcos_inference.2} parent=39 // pred_fallthru
        _
    $region40: #{fcos_inference.2} parent=5 // pred_fallthru
      _
  $region6: #{fcos_inference.2} parent=0 // loop_footer
    %s13 = sadd.s32 1, %s9
  $region7: #{fcos_inference.2} parent=0 // loop_footer_branch
    %8 = sbr.rel target = $region3
  $region8: #{fcos_inference.2} parent=0 // loop_exit
    _

// kernel: fcos_inference.3
$region0: #{fcos_inference.3}
  #allocation0 [shape = 'u32[]', space=smem, size = 0x4, offset = 0x4, fixed_abs, tag = 'smem constant byte address 0x4 - core index']
  #allocation1 [shape = 'u32[144,128]{1,0:T(1,128)}', space=vmem, size = 0x12000, scoped, tag = 'internal scratch']
  %s0 = inlined_call_operand.vmem [shape: bf16[768,64], index: 0, kind: input, shape index: {}]
  %s1 = inlined_call_operand.vmem [shape: bf16[64,144], index: 1, kind: input, shape index: {}]
  %s2 = inlined_call_operand.vmem [shape: bf16[2,128,144], index: 2, kind: input, shape index: {}]
  %s3 = inlined_call_operand.vmem [shape: f32[2,3,144], index: 3, kind: input, shape index: {}]
  %s4 = inlined_call_operand.vmem [shape: bf16[128,128], index: 4, kind: input, shape index: {}]
  %s5 = inlined_call_operand.vmem [shape: f32[1,128], index: 5, kind: input, shape index: {}]
  %s6 = inlined_call_operand.vmem [shape: bf16[128,16], index: 6, kind: input, shape index: {}]
  %s7 = inlined_call_operand.vmem [shape: bf16[16,128], index: 7, kind: input, shape index: {}]
  %s8 = inlined_call_operand.vmem [shape: f32[768,8], index: 8, kind: input, shape index: {}]
  %s9 = inlined_call_operand.vmem [shape: f32[768,128], index: 9, kind: output, shape index: {}]
  %s10 = sld [smem:[#allocation0]]
  $region69: #{fcos_inference.3} parent=0
    _
  %s12 = ssub.s32 1, %s10
  %s13 = scalar_select 0, %s12, %s10
  loop: start=0, step=1, limit=8
  $region2: #{fcos_inference.3} parent=0 // loop_pre_header
    _
  $region3: #{fcos_inference.3} parent=0 // loop_header
    %s15 = sphi 0, %s19
    %p16 = scmp.ge.s32.totalorder %s15, 8
    %s25 = sphi 0, %s27
    %s28 = sphi 0, %s25
    %s29 = sphi 0, %s28
    %s45 = sphi 0, %s29
    %s49 = sphi 0, %s49
    %s51 = sphi 0, %s49
    %s52 = sphi 0, %s51
    %s66 = sphi 0, %s52
    %s70 = sphi 0, %s70
    %s72 = sphi 0, %s70
    %s73 = sphi 0, %s72
    %s87 = sphi 0, %s73
    %s91 = sphi 0, %s91
    %s93 = sphi 0, %s91
    %s94 = sphi 0, %s93
    %s108 = sphi 0, %s94
    %s112 = sphi 0, %s112
    %s114 = sphi 0, %s112
    %s115 = sphi 0, %s114
    %s129 = sphi 0, %s115
    %s133 = sphi 0, %s133
    %s135 = sphi 0, %s133
    %s136 = sphi 0, %s135
    %s150 = sphi 0, %s136
    %s154 = sphi 0, %s154
    %s156 = sphi 0, %s154
    %s157 = sphi 0, %s156
    %s171 = sphi 0, %s157
    %s175 = sphi 0, %s175
    %s177 = sphi 0, %s175
    %s178 = sphi 0, %s177
    %s192 = sphi 0, %s178
    %s198 = sphi 0, %s200
    %s201 = sphi 0, %s198
    %s202 = sphi 0, %s201
    %s218 = sphi 0, %s202
    %s224 = sphi 0, %s226
    %s227 = sphi 0, %s224
    %s228 = sphi 0, %s227
    %s244 = sphi 0, %s228
  $region4: #{fcos_inference.3} parent=0 // loop_header_branch
    %18 = sbr.rel (%p16) target = $region8
  $region5: #{fcos_inference.3} parent=0 // loop_body
    %s20 = ssub.s32 %s15, 1
    %s21 = ssub.s32 %s15, 2
    %s22 = sadd.s32 %s15, 1
    %s23 = ssub.s32 %s15, %s22
    %p24 = scmp.eq.s32.totalorder %s23, 0
    %s26 = sadd.s32 %s25, 1
    %s27 = scalar_select %p24, %s25, %s26
    %p30 = pneg %p24
    %p31 = scmp.eq.s32.totalorder %s15, 5
    %p32 = por %p30, %p31
    %p33 = scmp.ne.s32.totalorder %s25, %s28
    %p34 = scmp.eq.s32.totalorder %s15, 0
    %p35 = por %p33, %p34
    %p36 = scmp.ne.s32.totalorder %s25, %s28
    %p37 = scmp.eq.s32.totalorder %s20, 5
    %p38 = por %p36, %p37
    %p39 = scmp.ne.s32.totalorder %s28, %s29
    %p40 = scmp.eq.s32.totalorder %s20, 0
    %p41 = por %p39, %p40
    %p42 = scmp.ne.s32.totalorder %s28, %s29
    %p43 = scmp.eq.s32.totalorder %s21, 5
    %p44 = por %p42, %p43
    %p46 = scmp.ne.s32.totalorder %s29, %s45
    %p47 = scmp.eq.s32.totalorder %s21, 0
    %p48 = por %p46, %p47
    %s50 = sadd.s32 %s49, 1
    %p53 = scmp.eq.s32.totalorder %s15, 5
    %p54 = scmp.ne.s32.totalorder %s49, %s51
    %p55 = scmp.eq.s32.totalorder %s15, 0
    %p56 = por %p54, %p55
    %p57 = scmp.ne.s32.totalorder %s49, %s51
    %p58 = scmp.eq.s32.totalorder %s20, 5
    %p59 = por %p57, %p58
    %p60 = scmp.ne.s32.totalorder %s51, %s52
    %p61 = scmp.eq.s32.totalorder %s20, 0
    %p62 = por %p60, %p61
    %p63 = scmp.ne.s32.totalorder %s51, %s52
    %p64 = scmp.eq.s32.totalorder %s21, 5
    %p65 = por %p63, %p64
    %p67 = scmp.ne.s32.totalorder %s52, %s66
    %p68 = scmp.eq.s32.totalorder %s21, 0
    %p69 = por %p67, %p68
    %s71 = sadd.s32 %s70, 1
    %p74 = scmp.eq.s32.totalorder %s15, 5
    %p75 = scmp.ne.s32.totalorder %s70, %s72
    %p76 = scmp.eq.s32.totalorder %s15, 0
    %p77 = por %p75, %p76
    %p78 = scmp.ne.s32.totalorder %s70, %s72
    %p79 = scmp.eq.s32.totalorder %s20, 5
    %p80 = por %p78, %p79
    %p81 = scmp.ne.s32.totalorder %s72, %s73
    %p82 = scmp.eq.s32.totalorder %s20, 0
    %p83 = por %p81, %p82
    %p84 = scmp.ne.s32.totalorder %s72, %s73
    %p85 = scmp.eq.s32.totalorder %s21, 5
    %p86 = por %p84, %p85
    %p88 = scmp.ne.s32.totalorder %s73, %s87
    %p89 = scmp.eq.s32.totalorder %s21, 0
    %p90 = por %p88, %p89
    %s92 = sadd.s32 %s91, 1
    %p95 = scmp.eq.s32.totalorder %s15, 5
    %p96 = scmp.ne.s32.totalorder %s91, %s93
    %p97 = scmp.eq.s32.totalorder %s15, 0
    %p98 = por %p96, %p97
    %p99 = scmp.ne.s32.totalorder %s91, %s93
    %p100 = scmp.eq.s32.totalorder %s20, 5
    %p101 = por %p99, %p100
    %p102 = scmp.ne.s32.totalorder %s93, %s94
    %p103 = scmp.eq.s32.totalorder %s20, 0
    %p104 = por %p102, %p103
    %p105 = scmp.ne.s32.totalorder %s93, %s94
    %p106 = scmp.eq.s32.totalorder %s21, 5
    %p107 = por %p105, %p106
    %p109 = scmp.ne.s32.totalorder %s94, %s108
    %p110 = scmp.eq.s32.totalorder %s21, 0
    %p111 = por %p109, %p110
    %s113 = sadd.s32 %s112, 1
    %p116 = scmp.eq.s32.totalorder %s15, 5
    %p117 = scmp.ne.s32.totalorder %s112, %s114
    %p118 = scmp.eq.s32.totalorder %s15, 0
    %p119 = por %p117, %p118
    %p120 = scmp.ne.s32.totalorder %s112, %s114
    %p121 = scmp.eq.s32.totalorder %s20, 5
    %p122 = por %p120, %p121
    %p123 = scmp.ne.s32.totalorder %s114, %s115
    %p124 = scmp.eq.s32.totalorder %s20, 0
    %p125 = por %p123, %p124
    %p126 = scmp.ne.s32.totalorder %s114, %s115
    %p127 = scmp.eq.s32.totalorder %s21, 5
    %p128 = por %p126, %p127
    %p130 = scmp.ne.s32.totalorder %s115, %s129
    %p131 = scmp.eq.s32.totalorder %s21, 0
    %p132 = por %p130, %p131
    %s134 = sadd.s32 %s133, 1
    %p137 = scmp.eq.s32.totalorder %s15, 5
    %p138 = scmp.ne.s32.totalorder %s133, %s135
    %p139 = scmp.eq.s32.totalorder %s15, 0
    %p140 = por %p138, %p139
    %p141 = scmp.ne.s32.totalorder %s133, %s135
    %p142 = scmp.eq.s32.totalorder %s20, 5
    %p143 = por %p141, %p142
    %p144 = scmp.ne.s32.totalorder %s135, %s136
    %p145 = scmp.eq.s32.totalorder %s20, 0
    %p146 = por %p144, %p145
    %p147 = scmp.ne.s32.totalorder %s135, %s136
    %p148 = scmp.eq.s32.totalorder %s21, 5
    %p149 = por %p147, %p148
    %p151 = scmp.ne.s32.totalorder %s136, %s150
    %p152 = scmp.eq.s32.totalorder %s21, 0
    %p153 = por %p151, %p152
    %s155 = sadd.s32 %s154, 1
    %p158 = scmp.eq.s32.totalorder %s15, 5
    %p159 = scmp.ne.s32.totalorder %s154, %s156
    %p160 = scmp.eq.s32.totalorder %s15, 0
    %p161 = por %p159, %p160
    %p162 = scmp.ne.s32.totalorder %s154, %s156
    %p163 = scmp.eq.s32.totalorder %s20, 5
    %p164 = por %p162, %p163
    %p165 = scmp.ne.s32.totalorder %s156, %s157
    %p166 = scmp.eq.s32.totalorder %s20, 0
    %p167 = por %p165, %p166
    %p168 = scmp.ne.s32.totalorder %s156, %s157
    %p169 = scmp.eq.s32.totalorder %s21, 5
    %p170 = por %p168, %p169
    %p172 = scmp.ne.s32.totalorder %s157, %s171
    %p173 = scmp.eq.s32.totalorder %s21, 0
    %p174 = por %p172, %p173
    %s176 = sadd.s32 %s175, 1
    %p179 = scmp.eq.s32.totalorder %s15, 5
    %p180 = scmp.ne.s32.totalorder %s175, %s177
    %p181 = scmp.eq.s32.totalorder %s15, 0
    %p182 = por %p180, %p181
    %p183 = scmp.ne.s32.totalorder %s175, %s177
    %p184 = scmp.eq.s32.totalorder %s20, 5
    %p185 = por %p183, %p184
    %p186 = scmp.ne.s32.totalorder %s177, %s178
    %p187 = scmp.eq.s32.totalorder %s20, 0
    %p188 = por %p186, %p187
    %p189 = scmp.ne.s32.totalorder %s177, %s178
    %p190 = scmp.eq.s32.totalorder %s21, 5
    %p191 = por %p189, %p190
    %p193 = scmp.ne.s32.totalorder %s178, %s192
    %p194 = scmp.eq.s32.totalorder %s21, 0
    %p195 = por %p193, %p194
    %s196 = ssub.s32 %s15, %s22
    %p197 = scmp.eq.s32.totalorder %s196, 0
    %s199 = sadd.s32 %s198, 1
    %s200 = scalar_select %p197, %s198, %s199
    %p203 = pneg %p197
    %p204 = scmp.eq.s32.totalorder %s15, 5
    %p205 = por %p203, %p204
    %p206 = scmp.ne.s32.totalorder %s198, %s201
    %p207 = scmp.eq.s32.totalorder %s15, 0
    %p208 = por %p206, %p207
    %p209 = scmp.ne.s32.totalorder %s198, %s201
    %p210 = scmp.eq.s32.totalorder %s20, 5
    %p211 = por %p209, %p210
    %p212 = scmp.ne.s32.totalorder %s201, %s202
    %p213 = scmp.eq.s32.totalorder %s20, 0
    %p214 = por %p212, %p213
    %p215 = scmp.ne.s32.totalorder %s201, %s202
    %p216 = scmp.eq.s32.totalorder %s21, 5
    %p217 = por %p215, %p216
    %p219 = scmp.ne.s32.totalorder %s202, %s218
    %p220 = scmp.eq.s32.totalorder %s21, 0
    %p221 = por %p219, %p220
    %s222 = ssub.s32 %s15, %s22
    %p223 = scmp.eq.s32.totalorder %s222, 0
    %s225 = sadd.s32 %s224, 1
    %s226 = scalar_select %p223, %s224, %s225
    %p229 = pneg %p223
    %p230 = scmp.eq.s32.totalorder %s15, 5
    %p231 = por %p229, %p230
    %p232 = scmp.ne.s32.totalorder %s224, %s227
    %p233 = scmp.eq.s32.totalorder %s15, 0
    %p234 = por %p232, %p233
    %p235 = scmp.ne.s32.totalorder %s224, %s227
    %p236 = scmp.eq.s32.totalorder %s20, 5
    %p237 = por %p235, %p236
    %p238 = scmp.ne.s32.totalorder %s227, %s228
    %p239 = scmp.eq.s32.totalorder %s20, 0
    %p240 = por %p238, %p239
    %p241 = scmp.ne.s32.totalorder %s227, %s228
    %p242 = scmp.eq.s32.totalorder %s21, 5
    %p243 = por %p241, %p242
    %p245 = scmp.ne.s32.totalorder %s228, %s244
    %p246 = scmp.eq.s32.totalorder %s21, 0
    %p247 = por %p245, %p246
    %p248 = scmp.le.s32.totalorder 1, %s15
    %p249 = scmp.lt.s32.totalorder %s15, 7
    %p250 = pnand %p248, %p249
    %p251 = pneg %p250
    // Predicated region
    $region9: #{fcos_inference.3} parent=5 // pred_check
      _
    $region10: #{fcos_inference.3} parent=5 // pred_check_branch
      %253 = sbr.rel (%p250) target = $region12
    $region11: #{fcos_inference.3} parent=5 // pred_region
      %s254 = ssub.s32 %s15, 1
      // Predicated region
      $region13: #{fcos_inference.3} parent=11 // pred_check
        %p255 = pneg %p62
      $region14: #{fcos_inference.3} parent=11 // pred_check_branch
        %257 = sbr.rel (%p255) target = $region16
      $region15: #{fcos_inference.3} parent=11 // pred_region
        _
      $region16: #{fcos_inference.3} parent=11 // pred_fallthru
        _
      // Predicated region
      $region17: #{fcos_inference.3} parent=11 // pred_check
        %p258 = pneg %p83
      $region18: #{fcos_inference.3} parent=11 // pred_check_branch
        %260 = sbr.rel (%p258) target = $region20
      $region19: #{fcos_inference.3} parent=11 // pred_region
        _
      $region20: #{fcos_inference.3} parent=11 // pred_fallthru
        _
      // Predicated region
      $region21: #{fcos_inference.3} parent=11 // pred_check
        %p261 = pneg %p104
      $region22: #{fcos_inference.3} parent=11 // pred_check_branch
        %263 = sbr.rel (%p261) target = $region24
      $region23: #{fcos_inference.3} parent=11 // pred_region
        _
      $region24: #{fcos_inference.3} parent=11 // pred_fallthru
        _
      // Predicated region
      $region25: #{fcos_inference.3} parent=11 // pred_check
        %p264 = pneg %p125
      $region26: #{fcos_inference.3} parent=11 // pred_check_branch
        %266 = sbr.rel (%p264) target = $region28
      $region27: #{fcos_inference.3} parent=11 // pred_region
        _
      $region28: #{fcos_inference.3} parent=11 // pred_fallthru
        _
      // Predicated region
      $region29: #{fcos_inference.3} parent=11 // pred_check
        %p267 = pneg %p146
      $region30: #{fcos_inference.3} parent=11 // pred_check_branch
        %269 = sbr.rel (%p267) target = $region32
      $region31: #{fcos_inference.3} parent=11 // pred_region
        _
      $region32: #{fcos_inference.3} parent=11 // pred_fallthru
        _
      // Predicated region
      $region33: #{fcos_inference.3} parent=11 // pred_check
        %p270 = pneg %p167
      $region34: #{fcos_inference.3} parent=11 // pred_check_branch
        %272 = sbr.rel (%p270) target = $region36
      $region35: #{fcos_inference.3} parent=11 // pred_region
        _
      $region36: #{fcos_inference.3} parent=11 // pred_fallthru
        _
      // Predicated region
      $region37: #{fcos_inference.3} parent=11 // pred_check
        %p273 = pneg %p188
      $region38: #{fcos_inference.3} parent=11 // pred_check_branch
        %275 = sbr.rel (%p273) target = $region40
      $region39: #{fcos_inference.3} parent=11 // pred_region
        _
      $region40: #{fcos_inference.3} parent=11 // pred_fallthru
        _
    $region12: #{fcos_inference.3} parent=5 // pred_fallthru
      _
    %p276 = scmp.lt.s32.totalorder %s15, 6
    // Predicated region
    $region41: #{fcos_inference.3} parent=5 // pred_check
      %p277 = pneg %p276
    $region42: #{fcos_inference.3} parent=5 // pred_check_branch
      %279 = sbr.rel (%p277) target = $region44
    $region43: #{fcos_inference.3} parent=5 // pred_region
      // Predicated region
      $region45: #{fcos_inference.3} parent=43 // pred_check
        %p280 = pneg %p35
      $region46: #{fcos_inference.3} parent=43 // pred_check_branch
        %282 = sbr.rel (%p280) target = $region48
      $region47: #{fcos_inference.3} parent=43 // pred_region
        %s283 = smul.u32 16, %s15
        %p284 = scmp.lt.s32.totalorder %s283, 95
        %s285 = scalar_select %p284, %s283, 95
        %s286 = smul.addr %s285, 4
        %s287 = scalar_lea.vmem %s0, %s286
        %s288 = smul.u32 16, %s15
      $region48: #{fcos_inference.3} parent=43 // pred_fallthru
        _
      // Predicated region
      $region49: #{fcos_inference.3} parent=43 // pred_check
        %p289 = pneg %p208
      $region50: #{fcos_inference.3} parent=43 // pred_check_branch
        %291 = sbr.rel (%p289) target = $region52
      $region51: #{fcos_inference.3} parent=43 // pred_region
        %s292 = smul.u32 16, %s15
        %p293 = scmp.lt.s32.totalorder %s292, 95
        %s294 = scalar_select %p293, %s292, 95
        %s295 = smul.addr %s294, 8
        %s296 = scalar_lea.vmem %s8, %s295
        %s297 = smul.u32 16, %s15
      $region52: #{fcos_inference.3} parent=43 // pred_fallthru
        _
    $region44: #{fcos_inference.3} parent=5 // pred_fallthru
      _
    %p298 = scmp.le.s32.totalorder 1, %s15
    %p299 = scmp.lt.s32.totalorder %s15, 7
    %p300 = pnand %p298, %p299
    %p301 = pneg %p300
    // Predicated region
    $region53: #{fcos_inference.3} parent=5 // pred_check
      _
    $region54: #{fcos_inference.3} parent=5 // pred_check_branch
      %303 = sbr.rel (%p300) target = $region56
    $region55: #{fcos_inference.3} parent=5 // pred_region
      %s304 = ssub.s32 %s15, 1
      %s305 = smul.u32 16, %s20
      %p306 = scmp.lt.s32.totalorder %s305, 95
      %s307 = scalar_select %p306, %s305, 95
      %s308 = smul.addr %s307, 4
      %s309 = scalar_lea.vmem %s0, %s308
      %p310 = pneg %p41
      %p311 = pneg %p38
      %p312 = pneg %p62
      %p313 = pneg %p59
      %p314 = pneg %p83
      %p315 = pneg %p80
      %p316 = pneg %p104
      %p317 = pneg %p101
      %p318 = pneg %p125
      %p319 = pneg %p122
      %p320 = pneg %p146
      %p321 = pneg %p143
      %p322 = pneg %p167
      %p323 = pneg %p164
      %p324 = pneg %p188
      %p325 = pneg %p185
      %s326 = smul.u32 16, %s20
      %p327 = scmp.lt.s32.totalorder %s326, 95
      %s328 = scalar_select %p327, %s326, 95
      %s329 = smul.addr %s328, 8
      %s330 = scalar_lea.vmem %s8, %s329
      %p331 = pneg %p214
      %p332 = pneg %p211
      %p333 = pneg %p240
      %p334 = pneg %p237
      %s335 = smul.u32 16, %s20
      %p336 = scmp.lt.s32.totalorder %s335, 95
      %s337 = scalar_select %p336, %s335, 95
      %s338 = smul.addr %s337, 8
      %s339 = scalar_lea.vmem %s9, %s338
      %s340 = smul.u32 16, %s20
      %p341 = scmp.lt.s32.totalorder %s340, 95
      %s342 = scalar_select %p341, %s340, 95
      %s343 = smul.addr %s342, 4
      %s344 = scalar_lea.vmem %s0, %s343
      %s345 = smul.u32 16, %s20
      %s346 = smul.u32 16, %s20
      %p347 = scmp.lt.s32.totalorder %s346, 95
      %s348 = scalar_select %p347, %s346, 95
      %s349 = smul.addr %s348, 8
      %s350 = scalar_lea.vmem %s8, %s349
      %s351 = smul.u32 16, %s20
      %s352 = smul.u32 16, %s20
      %p353 = scmp.lt.s32.totalorder %s352, 95
      %s354 = scalar_select %p353, %s352, 95
      %s355 = smul.addr %s354, 8
      %s356 = scalar_lea.vmem %s9, %s355
      %s357 = smul.u32 16, %s20
      %v359 = vld [vmem:[%s6] sm:$0xf]
      %v360 = vld [vmem:[%s6 + $0x4] sm:$0xf]
      %v361 = vld [vmem:[%s6 + $0x8] sm:$0xf]
      %v362 = vld [vmem:[%s6 + $0xc] sm:$0xf]
      %v363 = vld [vmem:[%s6 + $0x10] sm:$0xf]
      %v364 = vld [vmem:[%s6 + $0x14] sm:$0xf]
      %v365 = vld [vmem:[%s6 + $0x18] sm:$0xf]
      %v366 = vld [vmem:[%s6 + $0x1c] sm:$0xf]
      %v367 = vld [vmem:[%s6 + $0x20] sm:$0xf]
      %v368 = vld [vmem:[%s6 + $0x24] sm:$0xf]
      %v369 = vld [vmem:[%s6 + $0x28] sm:$0xf]
      %v370 = vld [vmem:[%s6 + $0x2c] sm:$0xf]
      %v371 = vld [vmem:[%s6 + $0x30] sm:$0xf]
      %v372 = vld [vmem:[%s6 + $0x34] sm:$0xf]
      %v373 = vld [vmem:[%s6 + $0x38] sm:$0xf]
      %v374 = vld [vmem:[%s6 + $0x3c] sm:$0xf]
      %v375 = vld [vmem:[%s7] sm:$0xf]
      %v376 = vld [vmem:[%s7 + $0x4] sm:$0xf]
      %v377 = vld [vmem:[%s344] sm:$0xf]
      %v378 = vld [vmem:[%s344 + $0x4] sm:$0xf]
      %v379 = vld [vmem:[%s344 + $0x8] sm:$0xf]
      %v380 = vld [vmem:[%s344 + $0xc] sm:$0xf]
      %v381 = vld [vmem:[%s344 + $0x10] sm:$0xf]
      %v382 = vld [vmem:[%s344 + $0x14] sm:$0xf]
      %v383 = vld [vmem:[%s344 + $0x18] sm:$0xf]
      %v384 = vld [vmem:[%s344 + $0x1c] sm:$0xf]
      %v385 = vld [vmem:[%s344 + $0x20] sm:$0xf]
      %v386 = vld [vmem:[%s344 + $0x24] sm:$0xf]
      %v387 = vld [vmem:[%s344 + $0x28] sm:$0xf]
      %v388 = vld [vmem:[%s344 + $0x2c] sm:$0xf]
      %v389 = vld [vmem:[%s344 + $0x30] sm:$0xf]
      %v390 = vld [vmem:[%s344 + $0x34] sm:$0xf]
      %v391 = vld [vmem:[%s344 + $0x38] sm:$0xf]
      %v392 = vld [vmem:[%s344 + $0x3c] sm:$0xf]
      %v393 = vld [vmem:[%s3] sm:$0x77]
      %v394 = vld [vmem:[%s1] sm:$0xff]
      %v395 = vld [vmem:[%s1 + $0x8] sm:$0xff]
      %v396 = vld [vmem:[%s1 + $0x10] sm:$0xff]
      %v397 = vld [vmem:[%s1 + $0x18] sm:$0xff]
      %v398 = vld [vmem:[%s1 + $0x20] sm:$0xff]
      %v399 = vld [vmem:[%s1 + $0x28] sm:$0xff]
      %v400 = vld [vmem:[%s1 + $0x30] sm:$0xff]
      %v401 = vld [vmem:[%s1 + $0x38] sm:$0xff]
      %v403 = vlaneseq
      %v404 = vshrl.u32 %v403, 7
      %v405 = vsub.s32 0, %v404
      %v406 = vrot.slane %v393, %v405
      %v407 = vlaneseq
      %v408 = vshrl.u32 %v407, 7
      %v409 = vsub.s32 4, %v408
      %v410 = vrot.slane %v393, %v409
      %v413 = vlaneseq
      %v414 = vshrl.u32 %v413, 7
      %v415 = vsub.s32 0, %v414
      %v416 = vrot.slane %v406, %v415
      %v417 = vlaneseq
      %v418 = vshrl.u32 %v417, 7
      %v419 = vsub.s32 0, %v418
      %v420 = vrot.slane %v410, %v419
      %v437 = vunpack.c.l.b16 %v377
      %v438 = vunpack.c.l.b16 %v378
      %v439 = vunpack.c.l.b16 %v379
      %v440 = vunpack.c.l.b16 %v380
      %v441 = vunpack.c.l.b16 %v381
      %v442 = vunpack.c.l.b16 %v382
      %v443 = vunpack.c.l.b16 %v383
      %v444 = vunpack.c.l.b16 %v384
      %v445 = vunpack.c.l.b16 %v385
      %v446 = vunpack.c.l.b16 %v386
      %v447 = vunpack.c.l.b16 %v387
      %v448 = vunpack.c.l.b16 %v388
      %v449 = vunpack.c.l.b16 %v389
      %v450 = vunpack.c.l.b16 %v390
      %v451 = vunpack.c.l.b16 %v391
      %v452 = vunpack.c.l.b16 %v392
      %v453 = vpack.c.b16 %v438, %v437
      %v454 = vpack.c.b16 %v440, %v439
      %v455 = vpack.c.b16 %v442, %v441
      %v456 = vpack.c.b16 %v444, %v443
      %v457 = vpack.c.b16 %v446, %v445
      %v458 = vpack.c.b16 %v448, %v447
      %v459 = vpack.c.b16 %v450, %v449
      %v460 = vpack.c.b16 %v452, %v451
      %v469 = vunpack.c.l.b16 %v394
      %v470 = vunpack.c.h.b16 %v394
      %v471 = vunpack.c.l.b16 %v395
      %v472 = vunpack.c.h.b16 %v395
      %v473 = vunpack.c.l.b16 %v396
      %v474 = vunpack.c.h.b16 %v396
      %v475 = vunpack.c.l.b16 %v397
      %v476 = vunpack.c.h.b16 %v397
      %v477 = vunpack.c.l.b16 %v398
      %v478 = vunpack.c.h.b16 %v398
      %v479 = vunpack.c.l.b16 %v399
      %v480 = vunpack.c.h.b16 %v399
      %v481 = vunpack.c.l.b16 %v400
      %v482 = vunpack.c.h.b16 %v400
      %v483 = vunpack.c.l.b16 %v401
      %v484 = vunpack.c.h.b16 %v401
      %v485 = vpack.c.b16 %v471, %v469
      %v486 = vpack.c.b16 %v472, %v470
      %v487 = vpack.c.b16 %v475, %v473
      %v488 = vpack.c.b16 %v476, %v474
      %v489 = vpack.c.b16 %v479, %v477
      %v490 = vpack.c.b16 %v480, %v478
      %v491 = vpack.c.b16 %v483, %v481
      %v492 = vpack.c.b16 %v484, %v482
      %vm501 = vcmask 523264
      %v503 = vsel %vm501, %v453, 0
      %v506 = vsel %vm501, %v454, 0
      %v509 = vsel %vm501, %v455, 0
      %v512 = vsel %vm501, %v456, 0
      %v515 = vsel %vm501, %v457, 0
      %v518 = vsel %vm501, %v458, 0
      %v521 = vsel %vm501, %v459, 0
      %v524 = vsel %vm501, %v460, 0
      %526 = vmatprep.subr.bf16.mxu0 0
      %527 = vmatpush1.bf16.msra.mxu0 0
      %528 = vmatprep.subr.bf16.mxu0 0
      %529 = vmatpush1.bf16.msra.mxu0 0
      %530 = vmatprep.subr.bf16.mxu0 0
      %531 = vmatpush1.bf16.msra.mxu0 0
      %532 = vmatprep.subr.bf16.mxu0 0
      %533 = vmatpush1.bf16.msra.mxu0 0
      %534 = vmatprep.subr.bf16.mxu0 %v492
      %535 = vmatpush1.bf16.msra.mxu0 %v491
      %536 = vmatprep.subr.bf16.mxu0 %v490
      %537 = vmatpush1.bf16.msra.mxu0 %v489
      %538 = vmatprep.subr.bf16.mxu0 %v488
      %539 = vmatpush1.bf16.msra.mxu0 %v487
      %540 = vmatprep.subr.bf16.mxu0 %v486
      %541 = vmatpush1.bf16.msra.mxu0 %v485
      %542 = vmatprep.subr.bf16.mxu0 0
      %543 = vmatpush2.bf16.msra.mxu0 0
      %544 = vmatprep.subr.bf16.mxu0 0
      %545 = vmatpush2.bf16.msra.mxu0 0
      %546 = vmatprep.subr.bf16.mxu0 0
      %547 = vmatpush2.bf16.msra.mxu0 0
      %548 = vmatprep.subr.bf16.mxu0 0
      %549 = vmatpush2.bf16.msra.mxu0 0
      %550 = vmatprep.subr.bf16.mxu0 0
      %551 = vmatpush2.bf16.msra.mxu0 0
      %552 = vmatprep.subr.bf16.mxu0 0
      %553 = vmatpush2.bf16.msra.mxu0 0
      %554 = vmatprep.subr.bf16.mxu0 0
      %555 = vmatpush2.bf16.msra.mxu0 0
      %556 = vmatprep.subr.bf16.mxu0 0
      %557 = vmatpush2.bf16.msra.mxu0 0
      %558 = vmatprep.mubr.bf16.mxu0 0
      %559 = vmatmul.mubr.bf16.gmra.mxu0 %v503
      %v560 = vpop.f32.mrf.mxu0
      %v561 = vadd.f32 %v416, %v560
      %v562 = vpop.f32.mrf.mxu0
      %v563 = vadd.f32 %v420, %v562
      %v564 = vpop.f32.mrf.mxu0
      %v565 = vadd.f32 %v416, %v564
      %v566 = vpop.f32.mrf.mxu0
      %v567 = vadd.f32 %v420, %v566
      %568 = vmatprep.mubr.bf16.mxu0 0
      %569 = vmatmul.mubr.bf16.gmra.mxu0 %v506
      %v570 = vpop.f32.mrf.mxu0
      %v571 = vadd.f32 %v416, %v570
      %v572 = vpop.f32.mrf.mxu0
      %v573 = vadd.f32 %v420, %v572
      %v574 = vpop.f32.mrf.mxu0
      %v575 = vadd.f32 %v416, %v574
      %v576 = vpop.f32.mrf.mxu0
      %v577 = vadd.f32 %v420, %v576
      %578 = vmatprep.mubr.bf16.mxu0 0
      %579 = vmatmul.mubr.bf16.gmra.mxu0 %v509
      %v580 = vpop.f32.mrf.mxu0
      %v581 = vadd.f32 %v416, %v580
      %v582 = vpop.f32.mrf.mxu0
      %v583 = vadd.f32 %v420, %v582
      %v584 = vpop.f32.mrf.mxu0
      %v585 = vadd.f32 %v416, %v584
      %v586 = vpop.f32.mrf.mxu0
      %v587 = vadd.f32 %v420, %v586
      %588 = vmatprep.mubr.bf16.mxu0 0
      %589 = vmatmul.mubr.bf16.gmra.mxu0 %v512
      %v590 = vpop.f32.mrf.mxu0
      %v591 = vadd.f32 %v416, %v590
      %v592 = vpop.f32.mrf.mxu0
      %v593 = vadd.f32 %v420, %v592
      %v594 = vpop.f32.mrf.mxu0
      %v595 = vadd.f32 %v416, %v594
      %v596 = vpop.f32.mrf.mxu0
      %v597 = vadd.f32 %v420, %v596
      %598 = vmatprep.mubr.bf16.mxu0 0
      %599 = vmatmul.mubr.bf16.gmra.mxu0 %v515
      %v600 = vpop.f32.mrf.mxu0
      %v601 = vadd.f32 %v416, %v600
      %v602 = vpop.f32.mrf.mxu0
      %v603 = vadd.f32 %v420, %v602
      %v604 = vpop.f32.mrf.mxu0
      %v605 = vadd.f32 %v416, %v604
      %v606 = vpop.f32.mrf.mxu0
      %v607 = vadd.f32 %v420, %v606
      %608 = vmatprep.mubr.bf16.mxu0 0
      %609 = vmatmul.mubr.bf16.gmra.mxu0 %v518
      %v610 = vpop.f32.mrf.mxu0
      %v611 = vadd.f32 %v416, %v610
      %v612 = vpop.f32.mrf.mxu0
      %v613 = vadd.f32 %v420, %v612
      %v614 = vpop.f32.mrf.mxu0
      %v615 = vadd.f32 %v416, %v614
      %v616 = vpop.f32.mrf.mxu0
      %v617 = vadd.f32 %v420, %v616
      %618 = vmatprep.mubr.bf16.mxu0 0
      %619 = vmatmul.mubr.bf16.gmra.mxu0 %v521
      %v620 = vpop.f32.mrf.mxu0
      %v621 = vadd.f32 %v416, %v620
      %v622 = vpop.f32.mrf.mxu0
      %v623 = vadd.f32 %v420, %v622
      %v624 = vpop.f32.mrf.mxu0
      %v625 = vadd.f32 %v416, %v624
      %v626 = vpop.f32.mrf.mxu0
      %v627 = vadd.f32 %v420, %v626
      %628 = vmatprep.mubr.bf16.mxu0 0
      %629 = vmatmul.mubr.bf16.gmra.mxu0 %v524
      %v630 = vpop.f32.mrf.mxu0
      %v631 = vadd.f32 %v416, %v630
      %v632 = vpop.f32.mrf.mxu0
      %v633 = vadd.f32 %v420, %v632
      %v634 = vpop.f32.mrf.mxu0
      %v635 = vadd.f32 %v416, %v634
      %v636 = vpop.f32.mrf.mxu0
      %v637 = vadd.f32 %v420, %v636
      %638 = vdwg.mxu0
      %v639 = vmul.f32 %v563, 0.125
      %v640 = vmul.f32 %v567, 0.125
      %v641 = vmul.f32 %v573, 0.125
      %v642 = vmul.f32 %v577, 0.125
      %v643 = vmul.f32 %v583, 0.125
      %v644 = vmul.f32 %v587, 0.125
      %v645 = vmul.f32 %v593, 0.125
      %v646 = vmul.f32 %v597, 0.125
      %v647 = vmul.f32 %v603, 0.125
      %v648 = vmul.f32 %v607, 0.125
      %v649 = vmul.f32 %v613, 0.125
      %v650 = vmul.f32 %v617, 0.125
      %v651 = vmul.f32 %v623, 0.125
      %v652 = vmul.f32 %v627, 0.125
      %v653 = vmul.f32 %v633, 0.125
      %v654 = vmul.f32 %v637, 0.125
      %v655 = vpack.c.bf16 %v640, %v639
      %v656 = vpack.c.bf16 %v642, %v641
      %v657 = vpack.c.bf16 %v644, %v643
      %v658 = vpack.c.bf16 %v646, %v645
      %v659 = vpack.c.bf16 %v648, %v647
      %v660 = vpack.c.bf16 %v650, %v649
      %v661 = vpack.c.bf16 %v652, %v651
      %v662 = vpack.c.bf16 %v654, %v653
      %v665 = vunpack.c.l.b16 %v375
      %v666 = vunpack.c.l.b16 %v376
      %v667 = vpack.c.b16 %v666, %v665
      %vm669 = vcmask 130048
      %v671 = vsel %vm669, %v655, 0
      %v674 = vsel %vm669, %v656, 0
      %v677 = vsel %vm669, %v657, 0
      %v680 = vsel %vm669, %v658, 0
      %v683 = vsel %vm669, %v659, 0
      %v686 = vsel %vm669, %v660, 0
      %v689 = vsel %vm669, %v661, 0
      %v692 = vsel %vm669, %v662, 0
      %694 = vmatprep.subr.bf16.mxu0 0
      %695 = vmatpush1.bf16.msra.mxu0 0
      %696 = vmatprep.subr.bf16.mxu0 0
      %697 = vmatpush1.bf16.msra.mxu0 0
      %698 = vmatprep.subr.bf16.mxu0 0
      %699 = vmatpush1.bf16.msra.mxu0 0
      %700 = vmatprep.subr.bf16.mxu0 0
      %701 = vmatpush1.bf16.msra.mxu0 0
      %702 = vmatprep.subr.bf16.mxu0 0
      %703 = vmatpush1.bf16.msra.mxu0 0
      %704 = vmatprep.subr.bf16.mxu0 0
      %705 = vmatpush1.bf16.msra.mxu0 0
      %706 = vmatprep.subr.bf16.mxu0 0
      %707 = vmatpush1.bf16.msra.mxu0 0
      %708 = vmatprep.subr.bf16.mxu0 0
      %709 = vmatpush1.bf16.msra.mxu0 %v667
      %710 = vmatprep.subr.bf16.mxu0 0
      %711 = vmatpush2.bf16.msra.mxu0 0
      %712 = vmatprep.subr.bf16.mxu0 0
      %713 = vmatpush2.bf16.msra.mxu0 0
      %714 = vmatprep.subr.bf16.mxu0 0
      %715 = vmatpush2.bf16.msra.mxu0 0
      %716 = vmatprep.subr.bf16.mxu0 0
      %717 = vmatpush2.bf16.msra.mxu0 0
      %718 = vmatprep.subr.bf16.mxu0 0
      %719 = vmatpush2.bf16.msra.mxu0 0
      %720 = vmatprep.subr.bf16.mxu0 0
      %721 = vmatpush2.bf16.msra.mxu0 0
      %722 = vmatprep.subr.bf16.mxu0 0
      %723 = vmatpush2.bf16.msra.mxu0 0
      %724 = vmatprep.subr.bf16.mxu0 0
      %725 = vmatpush2.bf16.msra.mxu0 0
      %726 = vmatprep.mubr.bf16.mxu0 0
      %727 = vmatmul.mubr.bf16.gmra.mxu0 %v671
      %v728 = vpop.f32.mrf.mxu0
      %v729 = vadd.f32 0.0, %v728
      %v730 = vpop.f32.mrf.mxu0
      %v731 = vpop.f32.mrf.mxu0
      %v732 = vadd.f32 0.0, %v731
      %v733 = vpop.f32.mrf.mxu0
      %734 = vmatprep.mubr.bf16.mxu0 0
      %735 = vmatmul.mubr.bf16.gmra.mxu0 %v674
      %v736 = vpop.f32.mrf.mxu0
      %v737 = vadd.f32 0.0, %v736
      %v738 = vpop.f32.mrf.mxu0
      %v739 = vpop.f32.mrf.mxu0
      %v740 = vadd.f32 0.0, %v739
      %v741 = vpop.f32.mrf.mxu0
      %742 = vmatprep.mubr.bf16.mxu0 0
      %743 = vmatmul.mubr.bf16.gmra.mxu0 %v677
      %v744 = vpop.f32.mrf.mxu0
      %v745 = vadd.f32 0.0, %v744
      %v746 = vpop.f32.mrf.mxu0
      %v747 = vpop.f32.mrf.mxu0
      %v748 = vadd.f32 0.0, %v747
      %v749 = vpop.f32.mrf.mxu0
      %750 = vmatprep.mubr.bf16.mxu0 0
      %751 = vmatmul.mubr.bf16.gmra.mxu0 %v680
      %v752 = vpop.f32.mrf.mxu0
      %v753 = vadd.f32 0.0, %v752
      %v754 = vpop.f32.mrf.mxu0
      %v755 = vpop.f32.mrf.mxu0
      %v756 = vadd.f32 0.0, %v755
      %v757 = vpop.f32.mrf.mxu0
      %758 = vmatprep.mubr.bf16.mxu0 0
      %759 = vmatmul.mubr.bf16.gmra.mxu0 %v683
      %v760 = vpop.f32.mrf.mxu0
      %v761 = vadd.f32 0.0, %v760
      %v762 = vpop.f32.mrf.mxu0
      %v763 = vpop.f32.mrf.mxu0
      %v764 = vadd.f32 0.0, %v763
      %v765 = vpop.f32.mrf.mxu0
      %766 = vmatprep.mubr.bf16.mxu0 0
      %767 = vmatmul.mubr.bf16.gmra.mxu0 %v686
      %v768 = vpop.f32.mrf.mxu0
      %v769 = vadd.f32 0.0, %v768
      %v770 = vpop.f32.mrf.mxu0
      %v771 = vpop.f32.mrf.mxu0
      %v772 = vadd.f32 0.0, %v771
      %v773 = vpop.f32.mrf.mxu0
      %774 = vmatprep.mubr.bf16.mxu0 0
      %775 = vmatmul.mubr.bf16.gmra.mxu0 %v689
      %v776 = vpop.f32.mrf.mxu0
      %v777 = vadd.f32 0.0, %v776
      %v778 = vpop.f32.mrf.mxu0
      %v779 = vpop.f32.mrf.mxu0
      %v780 = vadd.f32 0.0, %v779
      %v781 = vpop.f32.mrf.mxu0
      %782 = vmatprep.mubr.bf16.mxu0 0
      %783 = vmatmul.mubr.bf16.gmra.mxu0 %v692
      %v784 = vpop.f32.mrf.mxu0
      %v785 = vadd.f32 0.0, %v784
      %v786 = vpop.f32.mrf.mxu0
      %v787 = vpop.f32.mrf.mxu0
      %v788 = vadd.f32 0.0, %v787
      %v789 = vpop.f32.mrf.mxu0
      %790 = vdwg.mxu0
      %v791 = vsub.f32 %v561, %v729
      %v792 = vsub.f32 %v565, %v732
      %v793 = vsub.f32 %v571, %v737
      %v794 = vsub.f32 %v575, %v740
      %v795 = vsub.f32 %v581, %v745
      %v796 = vsub.f32 %v585, %v748
      %v797 = vsub.f32 %v591, %v753
      %v798 = vsub.f32 %v595, %v756
      %v799 = vsub.f32 %v601, %v761
      %v800 = vsub.f32 %v605, %v764
      %v801 = vsub.f32 %v611, %v769
      %v802 = vsub.f32 %v615, %v772
      %v803 = vsub.f32 %v621, %v777
      %v804 = vsub.f32 %v625, %v780
      %v805 = vsub.f32 %v631, %v785
      %v806 = vsub.f32 %v635, %v788
      %v807 = vpack.c.bf16 %v792, %v791
      %v808 = vpack.c.bf16 %v794, %v793
      %v809 = vpack.c.bf16 %v796, %v795
      %v810 = vpack.c.bf16 %v798, %v797
      %v811 = vpack.c.bf16 %v800, %v799
      %v812 = vpack.c.bf16 %v802, %v801
      %v813 = vpack.c.bf16 %v804, %v803
      %v814 = vpack.c.bf16 %v806, %v805
      %v815 = vmul.bf16 %v807, %v807
      %v816 = vmul.bf16 %v808, %v808
      %v817 = vmul.bf16 %v809, %v809
      %v818 = vmul.bf16 %v810, %v810
      %v819 = vmul.bf16 %v811, %v811
      %v820 = vmul.bf16 %v812, %v812
      %v821 = vmul.bf16 %v813, %v813
      %v822 = vmul.bf16 %v814, %v814
      %v839 = vunpack.c.l.b16 %v359
      %v840 = vunpack.c.l.b16 %v360
      %v841 = vunpack.c.l.b16 %v361
      %v842 = vunpack.c.l.b16 %v362
      %v843 = vunpack.c.l.b16 %v363
      %v844 = vunpack.c.l.b16 %v364
      %v845 = vunpack.c.l.b16 %v365
      %v846 = vunpack.c.l.b16 %v366
      %v847 = vunpack.c.l.b16 %v367
      %v848 = vunpack.c.l.b16 %v368
      %v849 = vunpack.c.l.b16 %v369
      %v850 = vunpack.c.l.b16 %v370
      %v851 = vunpack.c.l.b16 %v371
      %v852 = vunpack.c.l.b16 %v372
      %v853 = vunpack.c.l.b16 %v373
      %v854 = vunpack.c.l.b16 %v374
      %v855 = vpack.c.b16 %v840, %v839
      %v856 = vpack.c.b16 %v842, %v841
      %v857 = vpack.c.b16 %v844, %v843
      %v858 = vpack.c.b16 %v846, %v845
      %v859 = vpack.c.b16 %v848, %v847
      %v860 = vpack.c.b16 %v850, %v849
      %v861 = vpack.c.b16 %v852, %v851
      %v862 = vpack.c.b16 %v854, %v853
      %871 = vmatprep.subr.bf16.mxu0 0
      %872 = vmatpush1.bf16.msra.mxu0 %v862
      %873 = vmatprep.subr.bf16.mxu0 0
      %874 = vmatpush1.bf16.msra.mxu0 %v861
      %875 = vmatprep.subr.bf16.mxu0 0
      %876 = vmatpush1.bf16.msra.mxu0 %v860
      %877 = vmatprep.subr.bf16.mxu0 0
      %878 = vmatpush1.bf16.msra.mxu0 %v859
      %879 = vmatprep.subr.bf16.mxu0 0
      %880 = vmatpush1.bf16.msra.mxu0 %v858
      %881 = vmatprep.subr.bf16.mxu0 0
      %882 = vmatpush1.bf16.msra.mxu0 %v857
      %883 = vmatprep.subr.bf16.mxu0 0
      %884 = vmatpush1.bf16.msra.mxu0 %v856
      %885 = vmatprep.subr.bf16.mxu0 0
      %886 = vmatpush1.bf16.msra.mxu0 %v855
      %887 = vmatprep.subr.bf16.mxu0 0
      %888 = vmatpush2.bf16.msra.mxu0 0
      %889 = vmatprep.subr.bf16.mxu0 0
      %890 = vmatpush2.bf16.msra.mxu0 0
      %891 = vmatprep.subr.bf16.mxu0 0
      %892 = vmatpush2.bf16.msra.mxu0 0
      %893 = vmatprep.subr.bf16.mxu0 0
      %894 = vmatpush2.bf16.msra.mxu0 0
      %895 = vmatprep.subr.bf16.mxu0 0
      %896 = vmatpush2.bf16.msra.mxu0 0
      %897 = vmatprep.subr.bf16.mxu0 0
      %898 = vmatpush2.bf16.msra.mxu0 0
      %899 = vmatprep.subr.bf16.mxu0 0
      %900 = vmatpush2.bf16.msra.mxu0 0
      %901 = vmatprep.subr.bf16.mxu0 0
      %902 = vmatpush2.bf16.msra.mxu0 0
      %903 = vmatprep.mubr.bf16.mxu0 0
      %904 = vmatmul.mubr.bf16.gmra.mxu0 %v815
      %v905 = vpop.f32.mrf.mxu0
      %v906 = vadd.f32 0.0, %v905
      %v907 = vpop.f32.mrf.mxu0
      %v908 = vpop.f32.mrf.mxu0
      %v909 = vadd.f32 0.0, %v908
      %v910 = vpop.f32.mrf.mxu0
      %911 = vmatprep.mubr.bf16.mxu0 0
      %912 = vmatmul.mubr.bf16.gmra.mxu0 %v816
      %v913 = vpop.f32.mrf.mxu0
      %v914 = vadd.f32 0.0, %v913
      %v915 = vpop.f32.mrf.mxu0
      %v916 = vpop.f32.mrf.mxu0
      %v917 = vadd.f32 0.0, %v916
      %v918 = vpop.f32.mrf.mxu0
      %919 = vmatprep.mubr.bf16.mxu0 0
      %920 = vmatmul.mubr.bf16.gmra.mxu0 %v817
      %v921 = vpop.f32.mrf.mxu0
      %v922 = vadd.f32 0.0, %v921
      %v923 = vpop.f32.mrf.mxu0
      %v924 = vpop.f32.mrf.mxu0
      %v925 = vadd.f32 0.0, %v924
      %v926 = vpop.f32.mrf.mxu0
      %927 = vmatprep.mubr.bf16.mxu0 0
      %928 = vmatmul.mubr.bf16.gmra.mxu0 %v818
      %v929 = vpop.f32.mrf.mxu0
      %v930 = vadd.f32 0.0, %v929
      %v931 = vpop.f32.mrf.mxu0
      %v932 = vpop.f32.mrf.mxu0
      %v933 = vadd.f32 0.0, %v932
      %v934 = vpop.f32.mrf.mxu0
      %935 = vmatprep.mubr.bf16.mxu0 0
      %936 = vmatmul.mubr.bf16.gmra.mxu0 %v819
      %v937 = vpop.f32.mrf.mxu0
      %v938 = vadd.f32 0.0, %v937
      %v939 = vpop.f32.mrf.mxu0
      %v940 = vpop.f32.mrf.mxu0
      %v941 = vadd.f32 0.0, %v940
      %v942 = vpop.f32.mrf.mxu0
      %943 = vmatprep.mubr.bf16.mxu0 0
      %944 = vmatmul.mubr.bf16.gmra.mxu0 %v820
      %v945 = vpop.f32.mrf.mxu0
      %v946 = vadd.f32 0.0, %v945
      %v947 = vpop.f32.mrf.mxu0
      %v948 = vpop.f32.mrf.mxu0
      %v949 = vadd.f32 0.0, %v948
      %v950 = vpop.f32.mrf.mxu0
      %951 = vmatprep.mubr.bf16.mxu0 0
      %952 = vmatmul.mubr.bf16.gmra.mxu0 %v821
      %v953 = vpop.f32.mrf.mxu0
      %v954 = vadd.f32 0.0, %v953
      %v955 = vpop.f32.mrf.mxu0
      %v956 = vpop.f32.mrf.mxu0
      %v957 = vadd.f32 0.0, %v956
      %v958 = vpop.f32.mrf.mxu0
      %959 = vmatprep.mubr.bf16.mxu0 0
      %960 = vmatmul.mubr.bf16.gmra.mxu0 %v822
      %v961 = vpop.f32.mrf.mxu0
      %v962 = vadd.f32 0.0, %v961
      %v963 = vpop.f32.mrf.mxu0
      %v964 = vpop.f32.mrf.mxu0
      %v965 = vadd.f32 0.0, %v964
      %v966 = vpop.f32.mrf.mxu0
      %967 = vdwg.mxu0
      %v968 = vmul.f32 %v906, 0.125
      %v969 = vmul.f32 %v909, 0.125
      %v970 = vmul.f32 %v914, 0.125
      %v971 = vmul.f32 %v917, 0.125
      %v972 = vmul.f32 %v922, 0.125
      %v973 = vmul.f32 %v925, 0.125
      %v974 = vmul.f32 %v930, 0.125
      %v975 = vmul.f32 %v933, 0.125
      %v976 = vmul.f32 %v938, 0.125
      %v977 = vmul.f32 %v941, 0.125
      %v978 = vmul.f32 %v946, 0.125
      %v979 = vmul.f32 %v949, 0.125
      %v980 = vmul.f32 %v954, 0.125
      %v981 = vmul.f32 %v957, 0.125
      %v982 = vmul.f32 %v962, 0.125
      %v983 = vmul.f32 %v965, 0.125
      %v984 = vadd.f32 %v968, 1e-05
      %v985 = vadd.f32 %v969, 1e-05
      %v986 = vadd.f32 %v970, 1e-05
      %v987 = vadd.f32 %v971, 1e-05
      %v988 = vadd.f32 %v972, 1e-05
      %v989 = vadd.f32 %v973, 1e-05
      %v990 = vadd.f32 %v974, 1e-05
      %v991 = vadd.f32 %v975, 1e-05
      %v992 = vadd.f32 %v976, 1e-05
      %v993 = vadd.f32 %v977, 1e-05
      %v994 = vadd.f32 %v978, 1e-05
      %v995 = vadd.f32 %v979, 1e-05
      %v996 = vadd.f32 %v980, 1e-05
      %v997 = vadd.f32 %v981, 1e-05
      %v998 = vadd.f32 %v982, 1e-05
      %v999 = vadd.f32 %v983, 1e-05
      %v1000 = vrsqrt.pop %v984
      %v1001 = vrsqrt.pop %v985
      %v1002 = vrsqrt.pop %v986
      %v1003 = vrsqrt.pop %v987
      %v1004 = vrsqrt.pop %v988
      %v1005 = vrsqrt.pop %v989
      %v1006 = vrsqrt.pop %v990
      %v1007 = vrsqrt.pop %v991
      %v1008 = vrsqrt.pop %v992
      %v1009 = vrsqrt.pop %v993
      %v1010 = vrsqrt.pop %v994
      %v1011 = vrsqrt.pop %v995
      %v1012 = vrsqrt.pop %v996
      %v1013 = vrsqrt.pop %v997
      %v1014 = vrsqrt.pop %v998
      %v1015 = vrsqrt.pop %v999
      %v1016 = vpack.c.bf16 %v1001, %v1000
      %v1017 = vpack.c.bf16 %v1003, %v1002
      %v1018 = vpack.c.bf16 %v1005, %v1004
      %v1019 = vpack.c.bf16 %v1007, %v1006
      %v1020 = vpack.c.bf16 %v1009, %v1008
      %v1021 = vpack.c.bf16 %v1011, %v1010
      %v1022 = vpack.c.bf16 %v1013, %v1012
      %v1023 = vpack.c.bf16 %v1015, %v1014
      %v1025 = vsel %vm669, %v1016, 0
      %v1028 = vsel %vm669, %v1017, 0
      %v1031 = vsel %vm669, %v1018, 0
      %v1034 = vsel %vm669, %v1019, 0
      %v1037 = vsel %vm669, %v1020, 0
      %v1040 = vsel %vm669, %v1021, 0
      %v1043 = vsel %vm669, %v1022, 0
      %v1046 = vsel %vm669, %v1023, 0
      %1048 = vmatprep.subr.bf16.mxu0 0
      %1049 = vmatpush1.bf16.msra.mxu0 0
      %1050 = vmatprep.subr.bf16.mxu0 0
      %1051 = vmatpush1.bf16.msra.mxu0 0
      %1052 = vmatprep.subr.bf16.mxu0 0
      %1053 = vmatpush1.bf16.msra.mxu0 0
      %1054 = vmatprep.subr.bf16.mxu0 0
      %1055 = vmatpush1.bf16.msra.mxu0 0
      %1056 = vmatprep.subr.bf16.mxu0 0
      %1057 = vmatpush1.bf16.msra.mxu0 0
      %1058 = vmatprep.subr.bf16.mxu0 0
      %1059 = vmatpush1.bf16.msra.mxu0 0
      %1060 = vmatprep.subr.bf16.mxu0 0
      %1061 = vmatpush1.bf16.msra.mxu0 0
      %1062 = vmatprep.subr.bf16.mxu0 0
      %1063 = vmatpush1.bf16.msra.mxu0 %v667
      %1064 = vmatprep.subr.bf16.mxu0 0
      %1065 = vmatpush2.bf16.msra.mxu0 0
      %1066 = vmatprep.subr.bf16.mxu0 0
      %1067 = vmatpush2.bf16.msra.mxu0 0
      %1068 = vmatprep.subr.bf16.mxu0 0
      %1069 = vmatpush2.bf16.msra.mxu0 0
      %1070 = vmatprep.subr.bf16.mxu0 0
      %1071 = vmatpush2.bf16.msra.mxu0 0
      %1072 = vmatprep.subr.bf16.mxu0 0
      %1073 = vmatpush2.bf16.msra.mxu0 0
      %1074 = vmatprep.subr.bf16.mxu0 0
      %1075 = vmatpush2.bf16.msra.mxu0 0
      %1076 = vmatprep.subr.bf16.mxu0 0
      %1077 = vmatpush2.bf16.msra.mxu0 0
      %1078 = vmatprep.subr.bf16.mxu0 0
      %1079 = vmatpush2.bf16.msra.mxu0 0
      %1080 = vmatprep.mubr.bf16.mxu0 0
      %1081 = vmatmul.mubr.bf16.gmra.mxu0 %v1025
      %v1082 = vpop.f32.mrf.mxu0
      %v1083 = vadd.f32 0.0, %v1082
      %v1084 = vpop.f32.mrf.mxu0
      %v1085 = vpop.f32.mrf.mxu0
      %v1086 = vadd.f32 0.0, %v1085
      %v1087 = vpop.f32.mrf.mxu0
      %1088 = vmatprep.mubr.bf16.mxu0 0
      %1089 = vmatmul.mubr.bf16.gmra.mxu0 %v1028
      %v1090 = vpop.f32.mrf.mxu0
      %v1091 = vadd.f32 0.0, %v1090
      %v1092 = vpop.f32.mrf.mxu0
      %v1093 = vpop.f32.mrf.mxu0
      %v1094 = vadd.f32 0.0, %v1093
      %v1095 = vpop.f32.mrf.mxu0
      %1096 = vmatprep.mubr.bf16.mxu0 0
      %1097 = vmatmul.mubr.bf16.gmra.mxu0 %v1031
      %v1098 = vpop.f32.mrf.mxu0
      %v1099 = vadd.f32 0.0, %v1098
      %v1100 = vpop.f32.mrf.mxu0
      %v1101 = vpop.f32.mrf.mxu0
      %v1102 = vadd.f32 0.0, %v1101
      %v1103 = vpop.f32.mrf.mxu0
      %1104 = vmatprep.mubr.bf16.mxu0 0
      %1105 = vmatmul.mubr.bf16.gmra.mxu0 %v1034
      %v1106 = vpop.f32.mrf.mxu0
      %v1107 = vadd.f32 0.0, %v1106
      %v1108 = vpop.f32.mrf.mxu0
      %v1109 = vpop.f32.mrf.mxu0
      %v1110 = vadd.f32 0.0, %v1109
      %v1111 = vpop.f32.mrf.mxu0
      %1112 = vmatprep.mubr.bf16.mxu0 0
      %1113 = vmatmul.mubr.bf16.gmra.mxu0 %v1037
      %v1114 = vpop.f32.mrf.mxu0
      %v1115 = vadd.f32 0.0, %v1114
      %v1116 = vpop.f32.mrf.mxu0
      %v1117 = vpop.f32.mrf.mxu0
      %v1118 = vadd.f32 0.0, %v1117
      %v1119 = vpop.f32.mrf.mxu0
      %1120 = vmatprep.mubr.bf16.mxu0 0
      %1121 = vmatmul.mubr.bf16.gmra.mxu0 %v1040
      %v1122 = vpop.f32.mrf.mxu0
      %v1123 = vadd.f32 0.0, %v1122
      %v1124 = vpop.f32.mrf.mxu0
      %v1125 = vpop.f32.mrf.mxu0
      %v1126 = vadd.f32 0.0, %v1125
      %v1127 = vpop.f32.mrf.mxu0
      %1128 = vmatprep.mubr.bf16.mxu0 0
      %1129 = vmatmul.mubr.bf16.gmra.mxu0 %v1043
      %v1130 = vpop.f32.mrf.mxu0
      %v1131 = vadd.f32 0.0, %v1130
      %v1132 = vpop.f32.mrf.mxu0
      %v1133 = vpop.f32.mrf.mxu0
      %v1134 = vadd.f32 0.0, %v1133
      %v1135 = vpop.f32.mrf.mxu0
      %1136 = vmatprep.mubr.bf16.mxu0 0
      %1137 = vmatmul.mubr.bf16.gmra.mxu0 %v1046
      %v1138 = vpop.f32.mrf.mxu0
      %v1139 = vadd.f32 0.0, %v1138
      %v1140 = vpop.f32.mrf.mxu0
      %v1141 = vpop.f32.mrf.mxu0
      %v1142 = vadd.f32 0.0, %v1141
      %v1143 = vpop.f32.mrf.mxu0
      %1144 = vdwg.mxu0
      %v1145 = vmul.f32 %v791, %v1083
      %v1146 = vmul.f32 %v792, %v1086
      %v1147 = vmul.f32 %v793, %v1091
      %v1148 = vmul.f32 %v794, %v1094
      %v1149 = vmul.f32 %v795, %v1099
      %v1150 = vmul.f32 %v796, %v1102
      %v1151 = vmul.f32 %v797, %v1107
      %v1152 = vmul.f32 %v798, %v1110
      %v1153 = vmul.f32 %v799, %v1115
      %v1154 = vmul.f32 %v800, %v1118
      %v1155 = vmul.f32 %v801, %v1123
      %v1156 = vmul.f32 %v802, %v1126
      %v1157 = vmul.f32 %v803, %v1131
      %v1158 = vmul.f32 %v804, %v1134
      %v1159 = vmul.f32 %v805, %v1139
      %v1160 = vmul.f32 %v806, %v1142
      %v1161 = vlaneseq
      %v1162 = vshrl.u32 %v1161, 7
      %v1163 = vsub.s32 1, %v1162
      %v1164 = vrot.slane %v393, %v1163
      %v1165 = vmul.f32 %v1145, %v1164
      %v1166 = vmul.f32 %v1146, %v1164
      %v1167 = vmul.f32 %v1147, %v1164
      %v1168 = vmul.f32 %v1148, %v1164
      %v1169 = vmul.f32 %v1149, %v1164
      %v1170 = vmul.f32 %v1150, %v1164
      %v1171 = vmul.f32 %v1151, %v1164
      %v1172 = vmul.f32 %v1152, %v1164
      %v1173 = vmul.f32 %v1153, %v1164
      %v1174 = vmul.f32 %v1154, %v1164
      %v1175 = vmul.f32 %v1155, %v1164
      %v1176 = vmul.f32 %v1156, %v1164
      %v1177 = vmul.f32 %v1157, %v1164
      %v1178 = vmul.f32 %v1158, %v1164
      %v1179 = vmul.f32 %v1159, %v1164
      %v1180 = vmul.f32 %v1160, %v1164
      %v1181 = vlaneseq
      %v1182 = vshrl.u32 %v1181, 7
      %v1183 = vsub.s32 2, %v1182
      %v1184 = vrot.slane %v393, %v1183
      %v1185 = vadd.f32 %v1165, %v1184
      %v1186 = vadd.f32 %v1166, %v1184
      %v1187 = vadd.f32 %v1167, %v1184
      %v1188 = vadd.f32 %v1168, %v1184
      %v1189 = vadd.f32 %v1169, %v1184
      %v1190 = vadd.f32 %v1170, %v1184
      %v1191 = vadd.f32 %v1171, %v1184
      %v1192 = vadd.f32 %v1172, %v1184
      %v1193 = vadd.f32 %v1173, %v1184
      %v1194 = vadd.f32 %v1174, %v1184
      %v1195 = vadd.f32 %v1175, %v1184
      %v1196 = vadd.f32 %v1176, %v1184
      %v1197 = vadd.f32 %v1177, %v1184
      %v1198 = vadd.f32 %v1178, %v1184
      %v1199 = vadd.f32 %v1179, %v1184
      %v1200 = vadd.f32 %v1180, %v1184
      %v1201 = vmax.f32 %v1185, 0.0
      %v1202 = vmax.f32 %v1186, 0.0
      %v1203 = vmax.f32 %v1187, 0.0
      %v1204 = vmax.f32 %v1188, 0.0
      %v1205 = vmax.f32 %v1189, 0.0
      %v1206 = vmax.f32 %v1190, 0.0
      %v1207 = vmax.f32 %v1191, 0.0
      %v1208 = vmax.f32 %v1192, 0.0
      %v1209 = vmax.f32 %v1193, 0.0
      %v1210 = vmax.f32 %v1194, 0.0
      %v1211 = vmax.f32 %v1195, 0.0
      %v1212 = vmax.f32 %v1196, 0.0
      %v1213 = vmax.f32 %v1197, 0.0
      %v1214 = vmax.f32 %v1198, 0.0
      %v1215 = vmax.f32 %v1199, 0.0
      %v1216 = vmax.f32 %v1200, 0.0
      %v1217 = vpack.c.bf16 %v1202, %v1201
      %v1218 = vpack.c.bf16 %v1204, %v1203
      %v1219 = vpack.c.bf16 %v1206, %v1205
      %v1220 = vpack.c.bf16 %v1208, %v1207
      %v1221 = vpack.c.bf16 %v1210, %v1209
      %v1222 = vpack.c.bf16 %v1212, %v1211
      %v1223 = vpack.c.bf16 %v1214, %v1213
      %v1224 = vpack.c.bf16 %v1216, %v1215
      %s1225 = scalar_lea.vmem %s3, 8
      %v1226 = vld [vmem:[%s1225] sm:$0x77]
      %s1227 = scalar_lea.vmem %s2, 128
      %v1228 = vld [vmem:[%s1227] sm:$0xff]
      %v1229 = vld [vmem:[%s1227 + $0x8] sm:$0xff]
      %v1230 = vld [vmem:[%s1227 + $0x10] sm:$0xff]
      %v1231 = vld [vmem:[%s1227 + $0x18] sm:$0xff]
      %v1232 = vld [vmem:[%s1227 + $0x20] sm:$0xff]
      %v1233 = vld [vmem:[%s1227 + $0x28] sm:$0xff]
      %v1234 = vld [vmem:[%s1227 + $0x30] sm:$0xff]
      %v1235 = vld [vmem:[%s1227 + $0x38] sm:$0xff]
      %v1236 = vld [vmem:[%s1227 + $0x40] sm:$0xff]
      %v1237 = vld [vmem:[%s1227 + $0x48] sm:$0xff]
      %v1238 = vld [vmem:[%s1227 + $0x50] sm:$0xff]
      %v1239 = vld [vmem:[%s1227 + $0x58] sm:$0xff]
      %v1240 = vld [vmem:[%s1227 + $0x60] sm:$0xff]
      %v1241 = vld [vmem:[%s1227 + $0x68] sm:$0xff]
      %v1242 = vld [vmem:[%s1227 + $0x70] sm:$0xff]
      %v1243 = vld [vmem:[%s1227 + $0x78] sm:$0xff]
      %v1245 = vlaneseq
      %v1246 = vshrl.u32 %v1245, 7
      %v1247 = vsub.s32 0, %v1246
      %v1248 = vrot.slane %v1226, %v1247
      %v1249 = vlaneseq
      %v1250 = vshrl.u32 %v1249, 7
      %v1251 = vsub.s32 4, %v1250
      %v1252 = vrot.slane %v1226, %v1251
      %v1255 = vlaneseq
      %v1256 = vshrl.u32 %v1255, 7
      %v1257 = vsub.s32 0, %v1256
      %v1258 = vrot.slane %v1248, %v1257
      %v1259 = vlaneseq
      %v1260 = vshrl.u32 %v1259, 7
      %v1261 = vsub.s32 0, %v1260
      %v1262 = vrot.slane %v1252, %v1261
      %v1279 = vunpack.c.l.b16 %v1228
      %v1280 = vunpack.c.h.b16 %v1228
      %v1281 = vunpack.c.l.b16 %v1229
      %v1282 = vunpack.c.h.b16 %v1229
      %v1283 = vunpack.c.l.b16 %v1230
      %v1284 = vunpack.c.h.b16 %v1230
      %v1285 = vunpack.c.l.b16 %v1231
      %v1286 = vunpack.c.h.b16 %v1231
      %v1287 = vunpack.c.l.b16 %v1232
      %v1288 = vunpack.c.h.b16 %v1232
      %v1289 = vunpack.c.l.b16 %v1233
      %v1290 = vunpack.c.h.b16 %v1233
      %v1291 = vunpack.c.l.b16 %v1234
      %v1292 = vunpack.c.h.b16 %v1234
      %v1293 = vunpack.c.l.b16 %v1235
      %v1294 = vunpack.c.h.b16 %v1235
      %v1295 = vunpack.c.l.b16 %v1236
      %v1296 = vunpack.c.h.b16 %v1236
      %v1297 = vunpack.c.l.b16 %v1237
      %v1298 = vunpack.c.h.b16 %v1237
      %v1299 = vunpack.c.l.b16 %v1238
      %v1300 = vunpack.c.h.b16 %v1238
      %v1301 = vunpack.c.l.b16 %v1239
      %v1302 = vunpack.c.h.b16 %v1239
      %v1303 = vunpack.c.l.b16 %v1240
      %v1304 = vunpack.c.h.b16 %v1240
      %v1305 = vunpack.c.l.b16 %v1241
      %v1306 = vunpack.c.h.b16 %v1241
      %v1307 = vunpack.c.l.b16 %v1242
      %v1308 = vunpack.c.h.b16 %v1242
      %v1309 = vunpack.c.l.b16 %v1243
      %v1310 = vunpack.c.h.b16 %v1243
      %v1311 = vpack.c.b16 %v1281, %v1279
      %v1312 = vpack.c.b16 %v1282, %v1280
      %v1313 = vpack.c.b16 %v1285, %v1283
      %v1314 = vpack.c.b16 %v1286, %v1284
      %v1315 = vpack.c.b16 %v1289, %v1287
      %v1316 = vpack.c.b16 %v1290, %v1288
      %v1317 = vpack.c.b16 %v1293, %v1291
      %v1318 = vpack.c.b16 %v1294, %v1292
      %v1319 = vpack.c.b16 %v1297, %v1295
      %v1320 = vpack.c.b16 %v1298, %v1296
      %v1321 = vpack.c.b16 %v1301, %v1299
      %v1322 = vpack.c.b16 %v1302, %v1300
      %v1323 = vpack.c.b16 %v1305, %v1303
      %v1324 = vpack.c.b16 %v1306, %v1304
      %v1325 = vpack.c.b16 %v1309, %v1307
      %v1326 = vpack.c.b16 %v1310, %v1308
      %1343 = vmatprep.subr.bf16.mxu0 %v1326
      %1344 = vmatpush1.bf16.msra.mxu0 %v1325
      %1345 = vmatprep.subr.bf16.mxu0 %v1324
      %1346 = vmatpush1.bf16.msra.mxu0 %v1323
      %1347 = vmatprep.subr.bf16.mxu0 %v1322
      %1348 = vmatpush1.bf16.msra.mxu0 %v1321
      %1349 = vmatprep.subr.bf16.mxu0 %v1320
      %1350 = vmatpush1.bf16.msra.mxu0 %v1319
      %1351 = vmatprep.subr.bf16.mxu0 %v1318
      %1352 = vmatpush1.bf16.msra.mxu0 %v1317
      %1353 = vmatprep.subr.bf16.mxu0 %v1316
      %1354 = vmatpush1.bf16.msra.mxu0 %v1315
      %1355 = vmatprep.subr.bf16.mxu0 %v1314
      %1356 = vmatpush1.bf16.msra.mxu0 %v1313
      %1357 = vmatprep.subr.bf16.mxu0 %v1312
      %1358 = vmatpush1.bf16.msra.mxu0 %v1311
      %1359 = vmatprep.subr.bf16.mxu0 0
      %1360 = vmatpush2.bf16.msra.mxu0 0
      %1361 = vmatprep.subr.bf16.mxu0 0
      %1362 = vmatpush2.bf16.msra.mxu0 0
      %1363 = vmatprep.subr.bf16.mxu0 0
      %1364 = vmatpush2.bf16.msra.mxu0 0
      %1365 = vmatprep.subr.bf16.mxu0 0
      %1366 = vmatpush2.bf16.msra.mxu0 0
      %1367 = vmatprep.subr.bf16.mxu0 0
      %1368 = vmatpush2.bf16.msra.mxu0 0
      %1369 = vmatprep.subr.bf16.mxu0 0
      %1370 = vmatpush2.bf16.msra.mxu0 0
      %1371 = vmatprep.subr.bf16.mxu0 0
      %1372 = vmatpush2.bf16.msra.mxu0 0
      %1373 = vmatprep.subr.bf16.mxu0 0
      %1374 = vmatpush2.bf16.msra.mxu0 0
      %1375 = vmatprep.mubr.bf16.mxu0 0
      %1376 = vmatmul.mubr.bf16.gmra.mxu0 %v1217
      %v1377 = vpop.f32.mrf.mxu0
      %v1378 = vadd.f32 %v1258, %v1377
      %v1379 = vpop.f32.mrf.mxu0
      %v1380 = vadd.f32 %v1262, %v1379
      %v1381 = vpop.f32.mrf.mxu0
      %v1382 = vadd.f32 %v1258, %v1381
      %v1383 = vpop.f32.mrf.mxu0
      %v1384 = vadd.f32 %v1262, %v1383
      %1385 = vmatprep.mubr.bf16.mxu0 0
      %1386 = vmatmul.mubr.bf16.gmra.mxu0 %v1218
      %v1387 = vpop.f32.mrf.mxu0
      %v1388 = vadd.f32 %v1258, %v1387
      %v1389 = vpop.f32.mrf.mxu0
      %v1390 = vadd.f32 %v1262, %v1389
      %v1391 = vpop.f32.mrf.mxu0
      %v1392 = vadd.f32 %v1258, %v1391
      %v1393 = vpop.f32.mrf.mxu0
      %v1394 = vadd.f32 %v1262, %v1393
      %1395 = vmatprep.mubr.bf16.mxu0 0
      %1396 = vmatmul.mubr.bf16.gmra.mxu0 %v1219
      %v1397 = vpop.f32.mrf.mxu0
      %v1398 = vadd.f32 %v1258, %v1397
      %v1399 = vpop.f32.mrf.mxu0
      %v1400 = vadd.f32 %v1262, %v1399
      %v1401 = vpop.f32.mrf.mxu0
      %v1402 = vadd.f32 %v1258, %v1401
      %v1403 = vpop.f32.mrf.mxu0
      %v1404 = vadd.f32 %v1262, %v1403
      %1405 = vmatprep.mubr.bf16.mxu0 0
      %1406 = vmatmul.mubr.bf16.gmra.mxu0 %v1220
      %v1407 = vpop.f32.mrf.mxu0
      %v1408 = vadd.f32 %v1258, %v1407
      %v1409 = vpop.f32.mrf.mxu0
      %v1410 = vadd.f32 %v1262, %v1409
      %v1411 = vpop.f32.mrf.mxu0
      %v1412 = vadd.f32 %v1258, %v1411
      %v1413 = vpop.f32.mrf.mxu0
      %v1414 = vadd.f32 %v1262, %v1413
      %1415 = vmatprep.mubr.bf16.mxu0 0
      %1416 = vmatmul.mubr.bf16.gmra.mxu0 %v1221
      %v1417 = vpop.f32.mrf.mxu0
      %v1418 = vadd.f32 %v1258, %v1417
      %v1419 = vpop.f32.mrf.mxu0
      %v1420 = vadd.f32 %v1262, %v1419
      %v1421 = vpop.f32.mrf.mxu0
      %v1422 = vadd.f32 %v1258, %v1421
      %v1423 = vpop.f32.mrf.mxu0
      %v1424 = vadd.f32 %v1262, %v1423
      %1425 = vmatprep.mubr.bf16.mxu0 0
      %1426 = vmatmul.mubr.bf16.gmra.mxu0 %v1222
      %v1427 = vpop.f32.mrf.mxu0
      %v1428 = vadd.f32 %v1258, %v1427
      %v1429 = vpop.f32.mrf.mxu0
      %v1430 = vadd.f32 %v1262, %v1429
      %v1431 = vpop.f32.mrf.mxu0
      %v1432 = vadd.f32 %v1258, %v1431
      %v1433 = vpop.f32.mrf.mxu0
      %v1434 = vadd.f32 %v1262, %v1433
      %1435 = vmatprep.mubr.bf16.mxu0 0
      %1436 = vmatmul.mubr.bf16.gmra.mxu0 %v1223
      %v1437 = vpop.f32.mrf.mxu0
      %v1438 = vadd.f32 %v1258, %v1437
      %v1439 = vpop.f32.mrf.mxu0
      %v1440 = vadd.f32 %v1262, %v1439
      %v1441 = vpop.f32.mrf.mxu0
      %v1442 = vadd.f32 %v1258, %v1441
      %v1443 = vpop.f32.mrf.mxu0
      %v1444 = vadd.f32 %v1262, %v1443
      %1445 = vmatprep.mubr.bf16.mxu0 0
      %1446 = vmatmul.mubr.bf16.gmra.mxu0 %v1224
      %v1447 = vpop.f32.mrf.mxu0
      %v1448 = vadd.f32 %v1258, %v1447
      %v1449 = vpop.f32.mrf.mxu0
      %v1450 = vadd.f32 %v1262, %v1449
      %v1451 = vpop.f32.mrf.mxu0
      %v1452 = vadd.f32 %v1258, %v1451
      %v1453 = vpop.f32.mrf.mxu0
      %v1454 = vadd.f32 %v1262, %v1453
      %1455 = vdwg.mxu0
      %v1456 = vmul.f32 %v1380, 0.125
      %v1457 = vmul.f32 %v1384, 0.125
      %v1458 = vmul.f32 %v1390, 0.125
      %v1459 = vmul.f32 %v1394, 0.125
      %v1460 = vmul.f32 %v1400, 0.125
      %v1461 = vmul.f32 %v1404, 0.125
      %v1462 = vmul.f32 %v1410, 0.125
      %v1463 = vmul.f32 %v1414, 0.125
      %v1464 = vmul.f32 %v1420, 0.125
      %v1465 = vmul.f32 %v1424, 0.125
      %v1466 = vmul.f32 %v1430, 0.125
      %v1467 = vmul.f32 %v1434, 0.125
      %v1468 = vmul.f32 %v1440, 0.125
      %v1469 = vmul.f32 %v1444, 0.125
      %v1470 = vmul.f32 %v1450, 0.125
      %v1471 = vmul.f32 %v1454, 0.125
      %v1472 = vpack.c.bf16 %v1457, %v1456
      %v1473 = vpack.c.bf16 %v1459, %v1458
      %v1474 = vpack.c.bf16 %v1461, %v1460
      %v1475 = vpack.c.bf16 %v1463, %v1462
      %v1476 = vpack.c.bf16 %v1465, %v1464
      %v1477 = vpack.c.bf16 %v1467, %v1466
      %v1478 = vpack.c.bf16 %v1469, %v1468
      %v1479 = vpack.c.bf16 %v1471, %v1470
      %v1481 = vsel %vm669, %v1472, 0
      %v1484 = vsel %vm669, %v1473, 0
      %v1487 = vsel %vm669, %v1474, 0
      %v1490 = vsel %vm669, %v1475, 0
      %v1493 = vsel %vm669, %v1476, 0
      %v1496 = vsel %vm669, %v1477, 0
      %v1499 = vsel %vm669, %v1478, 0
      %v1502 = vsel %vm669, %v1479, 0
      %1504 = vmatprep.subr.bf16.mxu0 0
      %1505 = vmatpush1.bf16.msra.mxu0 0
      %1506 = vmatprep.subr.bf16.mxu0 0
      %1507 = vmatpush1.bf16.msra.mxu0 0
      %1508 = vmatprep.subr.bf16.mxu0 0
      %1509 = vmatpush1.bf16.msra.mxu0 0
      %1510 = vmatprep.subr.bf16.mxu0 0
      %1511 = vmatpush1.bf16.msra.mxu0 0
      %1512 = vmatprep.subr.bf16.mxu0 0
      %1513 = vmatpush1.bf16.msra.mxu0 0
      %1514 = vmatprep.subr.bf16.mxu0 0
      %1515 = vmatpush1.bf16.msra.mxu0 0
      %1516 = vmatprep.subr.bf16.mxu0 0
      %1517 = vmatpush1.bf16.msra.mxu0 0
      %1518 = vmatprep.subr.bf16.mxu0 0
      %1519 = vmatpush1.bf16.msra.mxu0 %v667
      %1520 = vmatprep.subr.bf16.mxu0 0
      %1521 = vmatpush2.bf16.msra.mxu0 0
      %1522 = vmatprep.subr.bf16.mxu0 0
      %1523 = vmatpush2.bf16.msra.mxu0 0
      %1524 = vmatprep.subr.bf16.mxu0 0
      %1525 = vmatpush2.bf16.msra.mxu0 0
      %1526 = vmatprep.subr.bf16.mxu0 0
      %1527 = vmatpush2.bf16.msra.mxu0 0
      %1528 = vmatprep.subr.bf16.mxu0 0
      %1529 = vmatpush2.bf16.msra.mxu0 0
      %1530 = vmatprep.subr.bf16.mxu0 0
      %1531 = vmatpush2.bf16.msra.mxu0 0
      %1532 = vmatprep.subr.bf16.mxu0 0
      %1533 = vmatpush2.bf16.msra.mxu0 0
      %1534 = vmatprep.subr.bf16.mxu0 0
      %1535 = vmatpush2.bf16.msra.mxu0 0
      %1536 = vmatprep.mubr.bf16.mxu0 0
      %1537 = vmatmul.mubr.bf16.gmra.mxu0 %v1481
      %v1538 = vpop.f32.mrf.mxu0
      %v1539 = vadd.f32 0.0, %v1538
      %v1540 = vpop.f32.mrf.mxu0
      %v1541 = vpop.f32.mrf.mxu0
      %v1542 = vadd.f32 0.0, %v1541
      %v1543 = vpop.f32.mrf.mxu0
      %1544 = vmatprep.mubr.bf16.mxu0 0
      %1545 = vmatmul.mubr.bf16.gmra.mxu0 %v1484
      %v1546 = vpop.f32.mrf.mxu0
      %v1547 = vadd.f32 0.0, %v1546
      %v1548 = vpop.f32.mrf.mxu0
      %v1549 = vpop.f32.mrf.mxu0
      %v1550 = vadd.f32 0.0, %v1549
      %v1551 = vpop.f32.mrf.mxu0
      %1552 = vmatprep.mubr.bf16.mxu0 0
      %1553 = vmatmul.mubr.bf16.gmra.mxu0 %v1487
      %v1554 = vpop.f32.mrf.mxu0
      %v1555 = vadd.f32 0.0, %v1554
      %v1556 = vpop.f32.mrf.mxu0
      %v1557 = vpop.f32.mrf.mxu0
      %v1558 = vadd.f32 0.0, %v1557
      %v1559 = vpop.f32.mrf.mxu0
      %1560 = vmatprep.mubr.bf16.mxu0 0
      %1561 = vmatmul.mubr.bf16.gmra.mxu0 %v1490
      %v1562 = vpop.f32.mrf.mxu0
      %v1563 = vadd.f32 0.0, %v1562
      %v1564 = vpop.f32.mrf.mxu0
      %v1565 = vpop.f32.mrf.mxu0
      %v1566 = vadd.f32 0.0, %v1565
      %v1567 = vpop.f32.mrf.mxu0
      %1568 = vmatprep.mubr.bf16.mxu0 0
      %1569 = vmatmul.mubr.bf16.gmra.mxu0 %v1493
      %v1570 = vpop.f32.mrf.mxu0
      %v1571 = vadd.f32 0.0, %v1570
      %v1572 = vpop.f32.mrf.mxu0
      %v1573 = vpop.f32.mrf.mxu0
      %v1574 = vadd.f32 0.0, %v1573
      %v1575 = vpop.f32.mrf.mxu0
      %1576 = vmatprep.mubr.bf16.mxu0 0
      %1577 = vmatmul.mubr.bf16.gmra.mxu0 %v1496
      %v1578 = vpop.f32.mrf.mxu0
      %v1579 = vadd.f32 0.0, %v1578
      %v1580 = vpop.f32.mrf.mxu0
      %v1581 = vpop.f32.mrf.mxu0
      %v1582 = vadd.f32 0.0, %v1581
      %v1583 = vpop.f32.mrf.mxu0
      %1584 = vmatprep.mubr.bf16.mxu0 0
      %1585 = vmatmul.mubr.bf16.gmra.mxu0 %v1499
      %v1586 = vpop.f32.mrf.mxu0
      %v1587 = vadd.f32 0.0, %v1586
      %v1588 = vpop.f32.mrf.mxu0
      %v1589 = vpop.f32.mrf.mxu0
      %v1590 = vadd.f32 0.0, %v1589
      %v1591 = vpop.f32.mrf.mxu0
      %1592 = vmatprep.mubr.bf16.mxu0 0
      %1593 = vmatmul.mubr.bf16.gmra.mxu0 %v1502
      %v1594 = vpop.f32.mrf.mxu0
      %v1595 = vadd.f32 0.0, %v1594
      %v1596 = vpop.f32.mrf.mxu0
      %v1597 = vpop.f32.mrf.mxu0
      %v1598 = vadd.f32 0.0, %v1597
      %v1599 = vpop.f32.mrf.mxu0
      %1600 = vdwg.mxu0
      %v1601 = vsub.f32 %v1378, %v1539
      %v1602 = vsub.f32 %v1382, %v1542
      %v1603 = vsub.f32 %v1388, %v1547
      %v1604 = vsub.f32 %v1392, %v1550
      %v1605 = vsub.f32 %v1398, %v1555
      %v1606 = vsub.f32 %v1402, %v1558
      %v1607 = vsub.f32 %v1408, %v1563
      %v1608 = vsub.f32 %v1412, %v1566
      %v1609 = vsub.f32 %v1418, %v1571
      %v1610 = vsub.f32 %v1422, %v1574
      %v1611 = vsub.f32 %v1428, %v1579
      %v1612 = vsub.f32 %v1432, %v1582
      %v1613 = vsub.f32 %v1438, %v1587
      %v1614 = vsub.f32 %v1442, %v1590
      %v1615 = vsub.f32 %v1448, %v1595
      %v1616 = vsub.f32 %v1452, %v1598
      %v1617 = vpack.c.bf16 %v1602, %v1601
      %v1618 = vpack.c.bf16 %v1604, %v1603
      %v1619 = vpack.c.bf16 %v1606, %v1605
      %v1620 = vpack.c.bf16 %v1608, %v1607
      %v1621 = vpack.c.bf16 %v1610, %v1609
      %v1622 = vpack.c.bf16 %v1612, %v1611
      %v1623 = vpack.c.bf16 %v1614, %v1613
      %v1624 = vpack.c.bf16 %v1616, %v1615
      %v1625 = vmul.bf16 %v1617, %v1617
      %v1626 = vmul.bf16 %v1618, %v1618
      %v1627 = vmul.bf16 %v1619, %v1619
      %v1628 = vmul.bf16 %v1620, %v1620
      %v1629 = vmul.bf16 %v1621, %v1621
      %v1630 = vmul.bf16 %v1622, %v1622
      %v1631 = vmul.bf16 %v1623, %v1623
      %v1632 = vmul.bf16 %v1624, %v1624
      %1633 = vmatprep.subr.bf16.mxu0 0
      %1634 = vmatpush1.bf16.msra.mxu0 %v862
      %1635 = vmatprep.subr.bf16.mxu0 0
      %1636 = vmatpush1.bf16.msra.mxu0 %v861
      %1637 = vmatprep.subr.bf16.mxu0 0
      %1638 = vmatpush1.bf16.msra.mxu0 %v860
      %1639 = vmatprep.subr.bf16.mxu0 0
      %1640 = vmatpush1.bf16.msra.mxu0 %v859
      %1641 = vmatprep.subr.bf16.mxu0 0
      %1642 = vmatpush1.bf16.msra.mxu0 %v858
      %1643 = vmatprep.subr.bf16.mxu0 0
      %1644 = vmatpush1.bf16.msra.mxu0 %v857
      %1645 = vmatprep.subr.bf16.mxu0 0
      %1646 = vmatpush1.bf16.msra.mxu0 %v856
      %1647 = vmatprep.subr.bf16.mxu0 0
      %1648 = vmatpush1.bf16.msra.mxu0 %v855
      %1649 = vmatprep.subr.bf16.mxu0 0
      %1650 = vmatpush2.bf16.msra.mxu0 0
      %1651 = vmatprep.subr.bf16.mxu0 0
      %1652 = vmatpush2.bf16.msra.mxu0 0
      %1653 = vmatprep.subr.bf16.mxu0 0
      %1654 = vmatpush2.bf16.msra.mxu0 0
      %1655 = vmatprep.subr.bf16.mxu0 0
      %1656 = vmatpush2.bf16.msra.mxu0 0
      %1657 = vmatprep.subr.bf16.mxu0 0
      %1658 = vmatpush2.bf16.msra.mxu0 0
      %1659 = vmatprep.subr.bf16.mxu0 0
      %1660 = vmatpush2.bf16.msra.mxu0 0
      %1661 = vmatprep.subr.bf16.mxu0 0
      %1662 = vmatpush2.bf16.msra.mxu0 0
      %1663 = vmatprep.subr.bf16.mxu0 0
      %1664 = vmatpush2.bf16.msra.mxu0 0
      %1665 = vmatprep.mubr.bf16.mxu0 0
      %1666 = vmatmul.mubr.bf16.gmra.mxu0 %v1625
      %v1667 = vpop.f32.mrf.mxu0
      %v1668 = vadd.f32 0.0, %v1667
      %v1669 = vpop.f32.mrf.mxu0
      %v1670 = vpop.f32.mrf.mxu0
      %v1671 = vadd.f32 0.0, %v1670
      %v1672 = vpop.f32.mrf.mxu0
      %1673 = vmatprep.mubr.bf16.mxu0 0
      %1674 = vmatmul.mubr.bf16.gmra.mxu0 %v1626
      %v1675 = vpop.f32.mrf.mxu0
      %v1676 = vadd.f32 0.0, %v1675
      %v1677 = vpop.f32.mrf.mxu0
      %v1678 = vpop.f32.mrf.mxu0
      %v1679 = vadd.f32 0.0, %v1678
      %v1680 = vpop.f32.mrf.mxu0
      %1681 = vmatprep.mubr.bf16.mxu0 0
      %1682 = vmatmul.mubr.bf16.gmra.mxu0 %v1627
      %v1683 = vpop.f32.mrf.mxu0
      %v1684 = vadd.f32 0.0, %v1683
      %v1685 = vpop.f32.mrf.mxu0
      %v1686 = vpop.f32.mrf.mxu0
      %v1687 = vadd.f32 0.0, %v1686
      %v1688 = vpop.f32.mrf.mxu0
      %1689 = vmatprep.mubr.bf16.mxu0 0
      %1690 = vmatmul.mubr.bf16.gmra.mxu0 %v1628
      %v1691 = vpop.f32.mrf.mxu0
      %v1692 = vadd.f32 0.0, %v1691
      %v1693 = vpop.f32.mrf.mxu0
      %v1694 = vpop.f32.mrf.mxu0
      %v1695 = vadd.f32 0.0, %v1694
      %v1696 = vpop.f32.mrf.mxu0
      %1697 = vmatprep.mubr.bf16.mxu0 0
      %1698 = vmatmul.mubr.bf16.gmra.mxu0 %v1629
      %v1699 = vpop.f32.mrf.mxu0
      %v1700 = vadd.f32 0.0, %v1699
      %v1701 = vpop.f32.mrf.mxu0
      %v1702 = vpop.f32.mrf.mxu0
      %v1703 = vadd.f32 0.0, %v1702
      %v1704 = vpop.f32.mrf.mxu0
      %1705 = vmatprep.mubr.bf16.mxu0 0
      %1706 = vmatmul.mubr.bf16.gmra.mxu0 %v1630
      %v1707 = vpop.f32.mrf.mxu0
      %v1708 = vadd.f32 0.0, %v1707
      %v1709 = vpop.f32.mrf.mxu0
      %v1710 = vpop.f32.mrf.mxu0
      %v1711 = vadd.f32 0.0, %v1710
      %v1712 = vpop.f32.mrf.mxu0
      %1713 = vmatprep.mubr.bf16.mxu0 0
      %1714 = vmatmul.mubr.bf16.gmra.mxu0 %v1631
      %v1715 = vpop.f32.mrf.mxu0
      %v1716 = vadd.f32 0.0, %v1715
      %v1717 = vpop.f32.mrf.mxu0
      %v1718 = vpop.f32.mrf.mxu0
      %v1719 = vadd.f32 0.0, %v1718
      %v1720 = vpop.f32.mrf.mxu0
      %1721 = vmatprep.mubr.bf16.mxu0 0
      %1722 = vmatmul.mubr.bf16.gmra.mxu0 %v1632
      %v1723 = vpop.f32.mrf.mxu0
      %v1724 = vadd.f32 0.0, %v1723
      %v1725 = vpop.f32.mrf.mxu0
      %v1726 = vpop.f32.mrf.mxu0
      %v1727 = vadd.f32 0.0, %v1726
      %v1728 = vpop.f32.mrf.mxu0
      %1729 = vdwg.mxu0
      %v1730 = vmul.f32 %v1668, 0.125
      %v1731 = vmul.f32 %v1671, 0.125
      %v1732 = vmul.f32 %v1676, 0.125
      %v1733 = vmul.f32 %v1679, 0.125
      %v1734 = vmul.f32 %v1684, 0.125
      %v1735 = vmul.f32 %v1687, 0.125
      %v1736 = vmul.f32 %v1692, 0.125
      %v1737 = vmul.f32 %v1695, 0.125
      %v1738 = vmul.f32 %v1700, 0.125
      %v1739 = vmul.f32 %v1703, 0.125
      %v1740 = vmul.f32 %v1708, 0.125
      %v1741 = vmul.f32 %v1711, 0.125
      %v1742 = vmul.f32 %v1716, 0.125
      %v1743 = vmul.f32 %v1719, 0.125
      %v1744 = vmul.f32 %v1724, 0.125
      %v1745 = vmul.f32 %v1727, 0.125
      %v1746 = vadd.f32 %v1730, 1e-05
      %v1747 = vadd.f32 %v1731, 1e-05
      %v1748 = vadd.f32 %v1732, 1e-05
      %v1749 = vadd.f32 %v1733, 1e-05
      %v1750 = vadd.f32 %v1734, 1e-05
      %v1751 = vadd.f32 %v1735, 1e-05
      %v1752 = vadd.f32 %v1736, 1e-05
      %v1753 = vadd.f32 %v1737, 1e-05
      %v1754 = vadd.f32 %v1738, 1e-05
      %v1755 = vadd.f32 %v1739, 1e-05
      %v1756 = vadd.f32 %v1740, 1e-05
      %v1757 = vadd.f32 %v1741, 1e-05
      %v1758 = vadd.f32 %v1742, 1e-05
      %v1759 = vadd.f32 %v1743, 1e-05
      %v1760 = vadd.f32 %v1744, 1e-05
      %v1761 = vadd.f32 %v1745, 1e-05
      %v1762 = vrsqrt.pop %v1746
      %v1763 = vrsqrt.pop %v1747
      %v1764 = vrsqrt.pop %v1748
      %v1765 = vrsqrt.pop %v1749
      %v1766 = vrsqrt.pop %v1750
      %v1767 = vrsqrt.pop %v1751
      %v1768 = vrsqrt.pop %v1752
      %v1769 = vrsqrt.pop %v1753
      %v1770 = vrsqrt.pop %v1754
      %v1771 = vrsqrt.pop %v1755
      %v1772 = vrsqrt.pop %v1756
      %v1773 = vrsqrt.pop %v1757
      %v1774 = vrsqrt.pop %v1758
      %v1775 = vrsqrt.pop %v1759
      %v1776 = vrsqrt.pop %v1760
      %v1777 = vrsqrt.pop %v1761
      %v1778 = vpack.c.bf16 %v1763, %v1762
      %v1779 = vpack.c.bf16 %v1765, %v1764
      %v1780 = vpack.c.bf16 %v1767, %v1766
      %v1781 = vpack.c.bf16 %v1769, %v1768
      %v1782 = vpack.c.bf16 %v1771, %v1770
      %v1783 = vpack.c.bf16 %v1773, %v1772
      %v1784 = vpack.c.bf16 %v1775, %v1774
      %v1785 = vpack.c.bf16 %v1777, %v1776
      %v1787 = vsel %vm669, %v1778, 0
      %v1790 = vsel %vm669, %v1779, 0
      %v1793 = vsel %vm669, %v1780, 0
      %v1796 = vsel %vm669, %v1781, 0
      %v1799 = vsel %vm669, %v1782, 0
      %v1802 = vsel %vm669, %v1783, 0
      %v1805 = vsel %vm669, %v1784, 0
      %v1808 = vsel %vm669, %v1785, 0
      %1810 = vmatprep.subr.bf16.mxu0 0
      %1811 = vmatpush1.bf16.msra.mxu0 0
      %1812 = vmatprep.subr.bf16.mxu0 0
      %1813 = vmatpush1.bf16.msra.mxu0 0
      %1814 = vmatprep.subr.bf16.mxu0 0
      %1815 = vmatpush1.bf16.msra.mxu0 0
      %1816 = vmatprep.subr.bf16.mxu0 0
      %1817 = vmatpush1.bf16.msra.mxu0 0
      %1818 = vmatprep.subr.bf16.mxu0 0
      %1819 = vmatpush1.bf16.msra.mxu0 0
      %1820 = vmatprep.subr.bf16.mxu0 0
      %1821 = vmatpush1.bf16.msra.mxu0 0
      %1822 = vmatprep.subr.bf16.mxu0 0
      %1823 = vmatpush1.bf16.msra.mxu0 0
      %1824 = vmatprep.subr.bf16.mxu0 0
      %1825 = vmatpush1.bf16.msra.mxu0 %v667
      %1826 = vmatprep.subr.bf16.mxu0 0
      %1827 = vmatpush2.bf16.msra.mxu0 0
      %1828 = vmatprep.subr.bf16.mxu0 0
      %1829 = vmatpush2.bf16.msra.mxu0 0
      %1830 = vmatprep.subr.bf16.mxu0 0
      %1831 = vmatpush2.bf16.msra.mxu0 0
      %1832 = vmatprep.subr.bf16.mxu0 0
      %1833 = vmatpush2.bf16.msra.mxu0 0
      %1834 = vmatprep.subr.bf16.mxu0 0
      %1835 = vmatpush2.bf16.msra.mxu0 0
      %1836 = vmatprep.subr.bf16.mxu0 0
      %1837 = vmatpush2.bf16.msra.mxu0 0
      %1838 = vmatprep.subr.bf16.mxu0 0
      %1839 = vmatpush2.bf16.msra.mxu0 0
      %1840 = vmatprep.subr.bf16.mxu0 0
      %1841 = vmatpush2.bf16.msra.mxu0 0
      %1842 = vmatprep.mubr.bf16.mxu0 0
      %1843 = vmatmul.mubr.bf16.gmra.mxu0 %v1787
      %v1844 = vpop.f32.mrf.mxu0
      %v1845 = vadd.f32 0.0, %v1844
      %v1846 = vpop.f32.mrf.mxu0
      %v1847 = vpop.f32.mrf.mxu0
      %v1848 = vadd.f32 0.0, %v1847
      %v1849 = vpop.f32.mrf.mxu0
      %1850 = vmatprep.mubr.bf16.mxu0 0
      %1851 = vmatmul.mubr.bf16.gmra.mxu0 %v1790
      %v1852 = vpop.f32.mrf.mxu0
      %v1853 = vadd.f32 0.0, %v1852
      %v1854 = vpop.f32.mrf.mxu0
      %v1855 = vpop.f32.mrf.mxu0
      %v1856 = vadd.f32 0.0, %v1855
      %v1857 = vpop.f32.mrf.mxu0
      %1858 = vmatprep.mubr.bf16.mxu0 0
      %1859 = vmatmul.mubr.bf16.gmra.mxu0 %v1793
      %v1860 = vpop.f32.mrf.mxu0
      %v1861 = vadd.f32 0.0, %v1860
      %v1862 = vpop.f32.mrf.mxu0
      %v1863 = vpop.f32.mrf.mxu0
      %v1864 = vadd.f32 0.0, %v1863
      %v1865 = vpop.f32.mrf.mxu0
      %1866 = vmatprep.mubr.bf16.mxu0 0
      %1867 = vmatmul.mubr.bf16.gmra.mxu0 %v1796
      %v1868 = vpop.f32.mrf.mxu0
      %v1869 = vadd.f32 0.0, %v1868
      %v1870 = vpop.f32.mrf.mxu0
      %v1871 = vpop.f32.mrf.mxu0
      %v1872 = vadd.f32 0.0, %v1871
      %v1873 = vpop.f32.mrf.mxu0
      %1874 = vmatprep.mubr.bf16.mxu0 0
      %1875 = vmatmul.mubr.bf16.gmra.mxu0 %v1799
      %v1876 = vpop.f32.mrf.mxu0
      %v1877 = vadd.f32 0.0, %v1876
      %v1878 = vpop.f32.mrf.mxu0
      %v1879 = vpop.f32.mrf.mxu0
      %v1880 = vadd.f32 0.0, %v1879
      %v1881 = vpop.f32.mrf.mxu0
      %1882 = vmatprep.mubr.bf16.mxu0 0
      %1883 = vmatmul.mubr.bf16.gmra.mxu0 %v1802
      %v1884 = vpop.f32.mrf.mxu0
      %v1885 = vadd.f32 0.0, %v1884
      %v1886 = vpop.f32.mrf.mxu0
      %v1887 = vpop.f32.mrf.mxu0
      %v1888 = vadd.f32 0.0, %v1887
      %v1889 = vpop.f32.mrf.mxu0
      %1890 = vmatprep.mubr.bf16.mxu0 0
      %1891 = vmatmul.mubr.bf16.gmra.mxu0 %v1805
      %v1892 = vpop.f32.mrf.mxu0
      %v1893 = vadd.f32 0.0, %v1892
      %v1894 = vpop.f32.mrf.mxu0
      %v1895 = vpop.f32.mrf.mxu0
      %v1896 = vadd.f32 0.0, %v1895
      %v1897 = vpop.f32.mrf.mxu0
      %1898 = vmatprep.mubr.bf16.mxu0 0
      %1899 = vmatmul.mubr.bf16.gmra.mxu0 %v1808
      %v1900 = vpop.f32.mrf.mxu0
      %v1901 = vadd.f32 0.0, %v1900
      %v1902 = vpop.f32.mrf.mxu0
      %v1903 = vpop.f32.mrf.mxu0
      %v1904 = vadd.f32 0.0, %v1903
      %v1905 = vpop.f32.mrf.mxu0
      %1906 = vdwg.mxu0
      %v1907 = vmul.f32 %v1601, %v1845
      %v1908 = vmul.f32 %v1602, %v1848
      %v1909 = vmul.f32 %v1603, %v1853
      %v1910 = vmul.f32 %v1604, %v1856
      %v1911 = vmul.f32 %v1605, %v1861
      %v1912 = vmul.f32 %v1606, %v1864
      %v1913 = vmul.f32 %v1607, %v1869
      %v1914 = vmul.f32 %v1608, %v1872
      %v1915 = vmul.f32 %v1609, %v1877
      %v1916 = vmul.f32 %v1610, %v1880
      %v1917 = vmul.f32 %v1611, %v1885
      %v1918 = vmul.f32 %v1612, %v1888
      %v1919 = vmul.f32 %v1613, %v1893
      %v1920 = vmul.f32 %v1614, %v1896
      %v1921 = vmul.f32 %v1615, %v1901
      %v1922 = vmul.f32 %v1616, %v1904
      %v1923 = vlaneseq
      %v1924 = vshrl.u32 %v1923, 7
      %v1925 = vsub.s32 1, %v1924
      %v1926 = vrot.slane %v1226, %v1925
      %v1927 = vmul.f32 %v1907, %v1926
      %v1928 = vmul.f32 %v1908, %v1926
      %v1929 = vmul.f32 %v1909, %v1926
      %v1930 = vmul.f32 %v1910, %v1926
      %v1931 = vmul.f32 %v1911, %v1926
      %v1932 = vmul.f32 %v1912, %v1926
      %v1933 = vmul.f32 %v1913, %v1926
      %v1934 = vmul.f32 %v1914, %v1926
      %v1935 = vmul.f32 %v1915, %v1926
      %v1936 = vmul.f32 %v1916, %v1926
      %v1937 = vmul.f32 %v1917, %v1926
      %v1938 = vmul.f32 %v1918, %v1926
      %v1939 = vmul.f32 %v1919, %v1926
      %v1940 = vmul.f32 %v1920, %v1926
      %v1941 = vmul.f32 %v1921, %v1926
      %v1942 = vmul.f32 %v1922, %v1926
      %v1943 = vlaneseq
      %v1944 = vshrl.u32 %v1943, 7
      %v1945 = vsub.s32 2, %v1944
      %v1946 = vrot.slane %v1226, %v1945
      %v1947 = vadd.f32 %v1927, %v1946
      %v1948 = vadd.f32 %v1928, %v1946
      %v1949 = vadd.f32 %v1929, %v1946
      %v1950 = vadd.f32 %v1930, %v1946
      %v1951 = vadd.f32 %v1931, %v1946
      %v1952 = vadd.f32 %v1932, %v1946
      %v1953 = vadd.f32 %v1933, %v1946
      %v1954 = vadd.f32 %v1934, %v1946
      %v1955 = vadd.f32 %v1935, %v1946
      %v1956 = vadd.f32 %v1936, %v1946
      %v1957 = vadd.f32 %v1937, %v1946
      %v1958 = vadd.f32 %v1938, %v1946
      %v1959 = vadd.f32 %v1939, %v1946
      %v1960 = vadd.f32 %v1940, %v1946
      %v1961 = vadd.f32 %v1941, %v1946
      %v1962 = vadd.f32 %v1942, %v1946
      %v1963 = vmax.f32 %v1947, 0.0
      %v1964 = vmax.f32 %v1948, 0.0
      %v1965 = vmax.f32 %v1949, 0.0
      %v1966 = vmax.f32 %v1950, 0.0
      %v1967 = vmax.f32 %v1951, 0.0
      %v1968 = vmax.f32 %v1952, 0.0
      %v1969 = vmax.f32 %v1953, 0.0
      %v1970 = vmax.f32 %v1954, 0.0
      %v1971 = vmax.f32 %v1955, 0.0
      %v1972 = vmax.f32 %v1956, 0.0
      %v1973 = vmax.f32 %v1957, 0.0
      %v1974 = vmax.f32 %v1958, 0.0
      %v1975 = vmax.f32 %v1959, 0.0
      %v1976 = vmax.f32 %v1960, 0.0
      %v1977 = vmax.f32 %v1961, 0.0
      %v1978 = vmax.f32 %v1962, 0.0
      %v1979 = vpack.c.bf16 %v1964, %v1963
      %v1980 = vpack.c.bf16 %v1966, %v1965
      %v1981 = vpack.c.bf16 %v1968, %v1967
      %v1982 = vpack.c.bf16 %v1970, %v1969
      %v1983 = vpack.c.bf16 %v1972, %v1971
      %v1984 = vpack.c.bf16 %v1974, %v1973
      %v1985 = vpack.c.bf16 %v1976, %v1975
      %v1986 = vpack.c.bf16 %v1978, %v1977
      %v1987 = vld [vmem:[%s4] sm:$0xf]
      %v1988 = vld [vmem:[%s4 + $0x4] sm:$0xf]
      %v1989 = vld [vmem:[%s4 + $0x8] sm:$0xf]
      %v1990 = vld [vmem:[%s4 + $0xc] sm:$0xf]
      %v1991 = vld [vmem:[%s4 + $0x10] sm:$0xf]
      %v1992 = vld [vmem:[%s4 + $0x14] sm:$0xf]
      %v1993 = vld [vmem:[%s4 + $0x18] sm:$0xf]
      %v1994 = vld [vmem:[%s4 + $0x1c] sm:$0xf]
      %v1995 = vld [vmem:[%s4 + $0x20] sm:$0xf]
      %v1996 = vld [vmem:[%s4 + $0x24] sm:$0xf]
      %v1997 = vld [vmem:[%s4 + $0x28] sm:$0xf]
      %v1998 = vld [vmem:[%s4 + $0x2c] sm:$0xf]
      %v1999 = vld [vmem:[%s4 + $0x30] sm:$0xf]
      %v2000 = vld [vmem:[%s4 + $0x34] sm:$0xf]
      %v2001 = vld [vmem:[%s4 + $0x38] sm:$0xf]
      %v2002 = vld [vmem:[%s4 + $0x3c] sm:$0xf]
      %v2003 = vld [vmem:[%s5] sm:$0x1]
      %v2005 = vlaneseq
      %v2006 = vshrl.u32 %v2005, 7
      %v2007 = vsub.s32 0, %v2006
      %v2008 = vrot.slane %v2003, %v2007
      %v2026 = vunpack.c.l.b16 %v1987
      %v2027 = vunpack.c.l.b16 %v1988
      %v2028 = vunpack.c.l.b16 %v1989
      %v2029 = vunpack.c.l.b16 %v1990
      %v2030 = vunpack.c.l.b16 %v1991
      %v2031 = vunpack.c.l.b16 %v1992
      %v2032 = vunpack.c.l.b16 %v1993
      %v2033 = vunpack.c.l.b16 %v1994
      %v2034 = vunpack.c.l.b16 %v1995
      %v2035 = vunpack.c.l.b16 %v1996
      %v2036 = vunpack.c.l.b16 %v1997
      %v2037 = vunpack.c.l.b16 %v1998
      %v2038 = vunpack.c.l.b16 %v1999
      %v2039 = vunpack.c.l.b16 %v2000
      %v2040 = vunpack.c.l.b16 %v2001
      %v2041 = vunpack.c.l.b16 %v2002
      %v2042 = vpack.c.b16 %v2027, %v2026
      %v2043 = vpack.c.b16 %v2029, %v2028
      %v2044 = vpack.c.b16 %v2031, %v2030
      %v2045 = vpack.c.b16 %v2033, %v2032
      %v2046 = vpack.c.b16 %v2035, %v2034
      %v2047 = vpack.c.b16 %v2037, %v2036
      %v2048 = vpack.c.b16 %v2039, %v2038
      %v2049 = vpack.c.b16 %v2041, %v2040
      %2058 = vmatprep.subr.bf16.mxu0 0
      %2059 = vmatpush1.bf16.msra.mxu0 %v2049
      %2060 = vmatprep.subr.bf16.mxu0 0
      %2061 = vmatpush1.bf16.msra.mxu0 %v2048
      %2062 = vmatprep.subr.bf16.mxu0 0
      %2063 = vmatpush1.bf16.msra.mxu0 %v2047
      %2064 = vmatprep.subr.bf16.mxu0 0
      %2065 = vmatpush1.bf16.msra.mxu0 %v2046
      %2066 = vmatprep.subr.bf16.mxu0 0
      %2067 = vmatpush1.bf16.msra.mxu0 %v2045
      %2068 = vmatprep.subr.bf16.mxu0 0
      %2069 = vmatpush1.bf16.msra.mxu0 %v2044
      %2070 = vmatprep.subr.bf16.mxu0 0
      %2071 = vmatpush1.bf16.msra.mxu0 %v2043
      %2072 = vmatprep.subr.bf16.mxu0 0
      %2073 = vmatpush1.bf16.msra.mxu0 %v2042
      %2074 = vmatprep.subr.bf16.mxu0 0
      %2075 = vmatpush2.bf16.msra.mxu0 0
      %2076 = vmatprep.subr.bf16.mxu0 0
      %2077 = vmatpush2.bf16.msra.mxu0 0
      %2078 = vmatprep.subr.bf16.mxu0 0
      %2079 = vmatpush2.bf16.msra.mxu0 0
      %2080 = vmatprep.subr.bf16.mxu0 0
      %2081 = vmatpush2.bf16.msra.mxu0 0
      %2082 = vmatprep.subr.bf16.mxu0 0
      %2083 = vmatpush2.bf16.msra.mxu0 0
      %2084 = vmatprep.subr.bf16.mxu0 0
      %2085 = vmatpush2.bf16.msra.mxu0 0
      %2086 = vmatprep.subr.bf16.mxu0 0
      %2087 = vmatpush2.bf16.msra.mxu0 0
      %2088 = vmatprep.subr.bf16.mxu0 0
      %2089 = vmatpush2.bf16.msra.mxu0 0
      %2090 = vmatprep.mubr.bf16.mxu0 0
      %2091 = vmatmul.mubr.bf16.gmra.mxu0 %v1979
      %v2092 = vpop.f32.mrf.mxu0
      %v2093 = vadd.f32 %v2008, %v2092
      %v2094 = vpop.f32.mrf.mxu0
      %v2095 = vpop.f32.mrf.mxu0
      %v2096 = vadd.f32 %v2008, %v2095
      %v2097 = vpop.f32.mrf.mxu0
      %2098 = vmatprep.mubr.bf16.mxu0 0
      %2099 = vmatmul.mubr.bf16.gmra.mxu0 %v1980
      %v2100 = vpop.f32.mrf.mxu0
      %v2101 = vadd.f32 %v2008, %v2100
      %v2102 = vpop.f32.mrf.mxu0
      %v2103 = vpop.f32.mrf.mxu0
      %v2104 = vadd.f32 %v2008, %v2103
      %v2105 = vpop.f32.mrf.mxu0
      %2106 = vmatprep.mubr.bf16.mxu0 0
      %2107 = vmatmul.mubr.bf16.gmra.mxu0 %v1981
      %v2108 = vpop.f32.mrf.mxu0
      %v2109 = vadd.f32 %v2008, %v2108
      %v2110 = vpop.f32.mrf.mxu0
      %v2111 = vpop.f32.mrf.mxu0
      %v2112 = vadd.f32 %v2008, %v2111
      %v2113 = vpop.f32.mrf.mxu0
      %2114 = vmatprep.mubr.bf16.mxu0 0
      %2115 = vmatmul.mubr.bf16.gmra.mxu0 %v1982
      %v2116 = vpop.f32.mrf.mxu0
      %v2117 = vadd.f32 %v2008, %v2116
      %v2118 = vpop.f32.mrf.mxu0
      %v2119 = vpop.f32.mrf.mxu0
      %v2120 = vadd.f32 %v2008, %v2119
      %v2121 = vpop.f32.mrf.mxu0
      %2122 = vmatprep.mubr.bf16.mxu0 0
      %2123 = vmatmul.mubr.bf16.gmra.mxu0 %v1983
      %v2124 = vpop.f32.mrf.mxu0
      %v2125 = vadd.f32 %v2008, %v2124
      %v2126 = vpop.f32.mrf.mxu0
      %v2127 = vpop.f32.mrf.mxu0
      %v2128 = vadd.f32 %v2008, %v2127
      %v2129 = vpop.f32.mrf.mxu0
      %2130 = vmatprep.mubr.bf16.mxu0 0
      %2131 = vmatmul.mubr.bf16.gmra.mxu0 %v1984
      %v2132 = vpop.f32.mrf.mxu0
      %v2133 = vadd.f32 %v2008, %v2132
      %v2134 = vpop.f32.mrf.mxu0
      %v2135 = vpop.f32.mrf.mxu0
      %v2136 = vadd.f32 %v2008, %v2135
      %v2137 = vpop.f32.mrf.mxu0
      %2138 = vmatprep.mubr.bf16.mxu0 0
      %2139 = vmatmul.mubr.bf16.gmra.mxu0 %v1985
      %v2140 = vpop.f32.mrf.mxu0
      %v2141 = vadd.f32 %v2008, %v2140
      %v2142 = vpop.f32.mrf.mxu0
      %v2143 = vpop.f32.mrf.mxu0
      %v2144 = vadd.f32 %v2008, %v2143
      %v2145 = vpop.f32.mrf.mxu0
      %2146 = vmatprep.mubr.bf16.mxu0 0
      %2147 = vmatmul.mubr.bf16.gmra.mxu0 %v1986
      %v2148 = vpop.f32.mrf.mxu0
      %v2149 = vadd.f32 %v2008, %v2148
      %v2150 = vpop.f32.mrf.mxu0
      %v2151 = vpop.f32.mrf.mxu0
      %v2152 = vadd.f32 %v2008, %v2151
      %v2153 = vpop.f32.mrf.mxu0
      %2154 = vdwg.mxu0
      %vm2155 = vcmask 662528
      %v2156 = vsel %vm2155, %v2093, -inf
      %2157 = vmax.xlane.f32.xlu0 %v2156
      %v2158 = vpop.xlane.xlu0 %2157
      %v2159 = vsel %vm2155, %v2096, -inf
      %2160 = vmax.xlane.f32.xlu0 %v2159
      %v2161 = vpop.xlane.xlu0 %2160
      %v2162 = vsel %vm2155, %v2101, -inf
      %2163 = vmax.xlane.f32.xlu0 %v2162
      %v2164 = vpop.xlane.xlu0 %2163
      %v2165 = vsel %vm2155, %v2104, -inf
      %2166 = vmax.xlane.f32.xlu0 %v2165
      %v2167 = vpop.xlane.xlu0 %2166
      %v2168 = vsel %vm2155, %v2109, -inf
      %2169 = vmax.xlane.f32.xlu0 %v2168
      %v2170 = vpop.xlane.xlu0 %2169
      %v2171 = vsel %vm2155, %v2112, -inf
      %2172 = vmax.xlane.f32.xlu0 %v2171
      %v2173 = vpop.xlane.xlu0 %2172
      %v2174 = vsel %vm2155, %v2117, -inf
      %2175 = vmax.xlane.f32.xlu0 %v2174
      %v2176 = vpop.xlane.xlu0 %2175
      %v2177 = vsel %vm2155, %v2120, -inf
      %2178 = vmax.xlane.f32.xlu0 %v2177
      %v2179 = vpop.xlane.xlu0 %2178
      %v2180 = vsel %vm2155, %v2125, -inf
      %2181 = vmax.xlane.f32.xlu0 %v2180
      %v2182 = vpop.xlane.xlu0 %2181
      %v2183 = vsel %vm2155, %v2128, -inf
      %2184 = vmax.xlane.f32.xlu0 %v2183
      %v2185 = vpop.xlane.xlu0 %2184
      %v2186 = vsel %vm2155, %v2133, -inf
      %2187 = vmax.xlane.f32.xlu0 %v2186
      %v2188 = vpop.xlane.xlu0 %2187
      %v2189 = vsel %vm2155, %v2136, -inf
      %2190 = vmax.xlane.f32.xlu0 %v2189
      %v2191 = vpop.xlane.xlu0 %2190
      %v2192 = vsel %vm2155, %v2141, -inf
      %2193 = vmax.xlane.f32.xlu0 %v2192
      %v2194 = vpop.xlane.xlu0 %2193
      %v2195 = vsel %vm2155, %v2144, -inf
      %2196 = vmax.xlane.f32.xlu0 %v2195
      %v2197 = vpop.xlane.xlu0 %2196
      %v2198 = vsel %vm2155, %v2149, -inf
      %2199 = vmax.xlane.f32.xlu0 %v2198
      %v2200 = vpop.xlane.xlu0 %2199
      %v2201 = vsel %vm2155, %v2152, -inf
      %2202 = vmax.xlane.f32.xlu0 %v2201
      %v2203 = vpop.xlane.xlu0 %2202
      %v2204 = vlaneseq
      %v2205 = vand.u32 %v2204, 127
      %vm2206 = vcmp.ge.f32.partialorder %v2093, %v2158
      %vm2207 = vcmp.ge.f32.partialorder %v2096, %v2161
      %vm2208 = vcmp.ge.f32.partialorder %v2101, %v2164
      %vm2209 = vcmp.ge.f32.partialorder %v2104, %v2167
      %vm2210 = vcmp.ge.f32.partialorder %v2109, %v2170
      %vm2211 = vcmp.ge.f32.partialorder %v2112, %v2173
      %vm2212 = vcmp.ge.f32.partialorder %v2117, %v2176
      %vm2213 = vcmp.ge.f32.partialorder %v2120, %v2179
      %vm2214 = vcmp.ge.f32.partialorder %v2125, %v2182
      %vm2215 = vcmp.ge.f32.partialorder %v2128, %v2185
      %vm2216 = vcmp.ge.f32.partialorder %v2133, %v2188
      %vm2217 = vcmp.ge.f32.partialorder %v2136, %v2191
      %vm2218 = vcmp.ge.f32.partialorder %v2141, %v2194
      %vm2219 = vcmp.ge.f32.partialorder %v2144, %v2197
      %vm2220 = vcmp.ge.f32.partialorder %v2149, %v2200
      %vm2221 = vcmp.ge.f32.partialorder %v2152, %v2203
      %v2222 = vsel %vm2206, %v2205, 81
      %v2223 = vsel %vm2207, %v2205, 81
      %v2224 = vsel %vm2208, %v2205, 81
      %v2225 = vsel %vm2209, %v2205, 81
      %v2226 = vsel %vm2210, %v2205, 81
      %v2227 = vsel %vm2211, %v2205, 81
      %v2228 = vsel %vm2212, %v2205, 81
      %v2229 = vsel %vm2213, %v2205, 81
      %v2230 = vsel %vm2214, %v2205, 81
      %v2231 = vsel %vm2215, %v2205, 81
      %v2232 = vsel %vm2216, %v2205, 81
      %v2233 = vsel %vm2217, %v2205, 81
      %v2234 = vsel %vm2218, %v2205, 81
      %v2235 = vsel %vm2219, %v2205, 81
      %v2236 = vsel %vm2220, %v2205, 81
      %v2237 = vsel %vm2221, %v2205, 81
      %v2238 = vsel %vm2155, %v2222, 2147483647
      %v2239 = vand.u32 %v2238, 65535
      %v2240 = vshra.s32 %v2238, 16
      %v2241 = vcvt.s32.f32 %v2239
      %v2242 = vcvt.s32.f32 %v2240
      %2243 = vmin.xlane.f32.xlu0 %v2242
      %v2244 = vpop.xlane.xlu0 %2243
      %vm2245 = vcmp.eq.f32.partialorder %v2242, %v2244
      %v2246 = vsel %vm2245, %v2241, inf
      %2247 = vmin.xlane.f32.xlu0 %v2246
      %v2248 = vpop.xlane.xlu0 %2247
      %v2249 = vcvt.f32.s32 %v2248
      %v2250 = vcvt.f32.s32 %v2244
      %v2251 = vshll.u32 %v2250, 16
      %v2252 = vadd.s32 %v2251, %v2249
      %v2253 = vsel %vm2155, %v2223, 2147483647
      %v2254 = vand.u32 %v2253, 65535
      %v2255 = vshra.s32 %v2253, 16
      %v2256 = vcvt.s32.f32 %v2254
      %v2257 = vcvt.s32.f32 %v2255
      %2258 = vmin.xlane.f32.xlu0 %v2257
      %v2259 = vpop.xlane.xlu0 %2258
      %vm2260 = vcmp.eq.f32.partialorder %v2257, %v2259
      %v2261 = vsel %vm2260, %v2256, inf
      %2262 = vmin.xlane.f32.xlu0 %v2261
      %v2263 = vpop.xlane.xlu0 %2262
      %v2264 = vcvt.f32.s32 %v2263
      %v2265 = vcvt.f32.s32 %v2259
      %v2266 = vshll.u32 %v2265, 16
      %v2267 = vadd.s32 %v2266, %v2264
      %v2268 = vsel %vm2155, %v2224, 2147483647
      %v2269 = vand.u32 %v2268, 65535
      %v2270 = vshra.s32 %v2268, 16
      %v2271 = vcvt.s32.f32 %v2269
      %v2272 = vcvt.s32.f32 %v2270
      %2273 = vmin.xlane.f32.xlu0 %v2272
      %v2274 = vpop.xlane.xlu0 %2273
      %vm2275 = vcmp.eq.f32.partialorder %v2272, %v2274
      %v2276 = vsel %vm2275, %v2271, inf
      %2277 = vmin.xlane.f32.xlu0 %v2276
      %v2278 = vpop.xlane.xlu0 %2277
      %v2279 = vcvt.f32.s32 %v2278
      %v2280 = vcvt.f32.s32 %v2274
      %v2281 = vshll.u32 %v2280, 16
      %v2282 = vadd.s32 %v2281, %v2279
      %v2283 = vsel %vm2155, %v2225, 2147483647
      %v2284 = vand.u32 %v2283, 65535
      %v2285 = vshra.s32 %v2283, 16
      %v2286 = vcvt.s32.f32 %v2284
      %v2287 = vcvt.s32.f32 %v2285
      %2288 = vmin.xlane.f32.xlu0 %v2287
      %v2289 = vpop.xlane.xlu0 %2288
      %vm2290 = vcmp.eq.f32.partialorder %v2287, %v2289
      %v2291 = vsel %vm2290, %v2286, inf
      %2292 = vmin.xlane.f32.xlu0 %v2291
      %v2293 = vpop.xlane.xlu0 %2292
      %v2294 = vcvt.f32.s32 %v2293
      %v2295 = vcvt.f32.s32 %v2289
      %v2296 = vshll.u32 %v2295, 16
      %v2297 = vadd.s32 %v2296, %v2294
      %v2298 = vsel %vm2155, %v2226, 2147483647
      %v2299 = vand.u32 %v2298, 65535
      %v2300 = vshra.s32 %v2298, 16
      %v2301 = vcvt.s32.f32 %v2299
      %v2302 = vcvt.s32.f32 %v2300
      %2303 = vmin.xlane.f32.xlu0 %v2302
      %v2304 = vpop.xlane.xlu0 %2303
      %vm2305 = vcmp.eq.f32.partialorder %v2302, %v2304
      %v2306 = vsel %vm2305, %v2301, inf
      %2307 = vmin.xlane.f32.xlu0 %v2306
      %v2308 = vpop.xlane.xlu0 %2307
      %v2309 = vcvt.f32.s32 %v2308
      %v2310 = vcvt.f32.s32 %v2304
      %v2311 = vshll.u32 %v2310, 16
      %v2312 = vadd.s32 %v2311, %v2309
      %v2313 = vsel %vm2155, %v2227, 2147483647
      %v2314 = vand.u32 %v2313, 65535
      %v2315 = vshra.s32 %v2313, 16
      %v2316 = vcvt.s32.f32 %v2314
      %v2317 = vcvt.s32.f32 %v2315
      %2318 = vmin.xlane.f32.xlu0 %v2317
      %v2319 = vpop.xlane.xlu0 %2318
      %vm2320 = vcmp.eq.f32.partialorder %v2317, %v2319
      %v2321 = vsel %vm2320, %v2316, inf
      %2322 = vmin.xlane.f32.xlu0 %v2321
      %v2323 = vpop.xlane.xlu0 %2322
      %v2324 = vcvt.f32.s32 %v2323
      %v2325 = vcvt.f32.s32 %v2319
      %v2326 = vshll.u32 %v2325, 16
      %v2327 = vadd.s32 %v2326, %v2324
      %v2328 = vsel %vm2155, %v2228, 2147483647
      %v2329 = vand.u32 %v2328, 65535
      %v2330 = vshra.s32 %v2328, 16
      %v2331 = vcvt.s32.f32 %v2329
      %v2332 = vcvt.s32.f32 %v2330
      %2333 = vmin.xlane.f32.xlu0 %v2332
      %v2334 = vpop.xlane.xlu0 %2333
      %vm2335 = vcmp.eq.f32.partialorder %v2332, %v2334
      %v2336 = vsel %vm2335, %v2331, inf
      %2337 = vmin.xlane.f32.xlu0 %v2336
      %v2338 = vpop.xlane.xlu0 %2337
      %v2339 = vcvt.f32.s32 %v2338
      %v2340 = vcvt.f32.s32 %v2334
      %v2341 = vshll.u32 %v2340, 16
      %v2342 = vadd.s32 %v2341, %v2339
      %v2343 = vsel %vm2155, %v2229, 2147483647
      %v2344 = vand.u32 %v2343, 65535
      %v2345 = vshra.s32 %v2343, 16
      %v2346 = vcvt.s32.f32 %v2344
      %v2347 = vcvt.s32.f32 %v2345
      %2348 = vmin.xlane.f32.xlu0 %v2347
      %v2349 = vpop.xlane.xlu0 %2348
      %vm2350 = vcmp.eq.f32.partialorder %v2347, %v2349
      %v2351 = vsel %vm2350, %v2346, inf
      %2352 = vmin.xlane.f32.xlu0 %v2351
      %v2353 = vpop.xlane.xlu0 %2352
      %v2354 = vcvt.f32.s32 %v2353
      %v2355 = vcvt.f32.s32 %v2349
      %v2356 = vshll.u32 %v2355, 16
      %v2357 = vadd.s32 %v2356, %v2354
      %v2358 = vsel %vm2155, %v2230, 2147483647
      %v2359 = vand.u32 %v2358, 65535
      %v2360 = vshra.s32 %v2358, 16
      %v2361 = vcvt.s32.f32 %v2359
      %v2362 = vcvt.s32.f32 %v2360
      %2363 = vmin.xlane.f32.xlu0 %v2362
      %v2364 = vpop.xlane.xlu0 %2363
      %vm2365 = vcmp.eq.f32.partialorder %v2362, %v2364
      %v2366 = vsel %vm2365, %v2361, inf
      %2367 = vmin.xlane.f32.xlu0 %v2366
      %v2368 = vpop.xlane.xlu0 %2367
      %v2369 = vcvt.f32.s32 %v2368
      %v2370 = vcvt.f32.s32 %v2364
      %v2371 = vshll.u32 %v2370, 16
      %v2372 = vadd.s32 %v2371, %v2369
      %v2373 = vsel %vm2155, %v2231, 2147483647
      %v2374 = vand.u32 %v2373, 65535
      %v2375 = vshra.s32 %v2373, 16
      %v2376 = vcvt.s32.f32 %v2374
      %v2377 = vcvt.s32.f32 %v2375
      %2378 = vmin.xlane.f32.xlu0 %v2377
      %v2379 = vpop.xlane.xlu0 %2378
      %vm2380 = vcmp.eq.f32.partialorder %v2377, %v2379
      %v2381 = vsel %vm2380, %v2376, inf
      %2382 = vmin.xlane.f32.xlu0 %v2381
      %v2383 = vpop.xlane.xlu0 %2382
      %v2384 = vcvt.f32.s32 %v2383
      %v2385 = vcvt.f32.s32 %v2379
      %v2386 = vshll.u32 %v2385, 16
      %v2387 = vadd.s32 %v2386, %v2384
      %v2388 = vsel %vm2155, %v2232, 2147483647
      %v2389 = vand.u32 %v2388, 65535
      %v2390 = vshra.s32 %v2388, 16
      %v2391 = vcvt.s32.f32 %v2389
      %v2392 = vcvt.s32.f32 %v2390
      %2393 = vmin.xlane.f32.xlu0 %v2392
      %v2394 = vpop.xlane.xlu0 %2393
      %vm2395 = vcmp.eq.f32.partialorder %v2392, %v2394
      %v2396 = vsel %vm2395, %v2391, inf
      %2397 = vmin.xlane.f32.xlu0 %v2396
      %v2398 = vpop.xlane.xlu0 %2397
      %v2399 = vcvt.f32.s32 %v2398
      %v2400 = vcvt.f32.s32 %v2394
      %v2401 = vshll.u32 %v2400, 16
      %v2402 = vadd.s32 %v2401, %v2399
      %v2403 = vsel %vm2155, %v2233, 2147483647
      %v2404 = vand.u32 %v2403, 65535
      %v2405 = vshra.s32 %v2403, 16
      %v2406 = vcvt.s32.f32 %v2404
      %v2407 = vcvt.s32.f32 %v2405
      %2408 = vmin.xlane.f32.xlu0 %v2407
      %v2409 = vpop.xlane.xlu0 %2408
      %vm2410 = vcmp.eq.f32.partialorder %v2407, %v2409
      %v2411 = vsel %vm2410, %v2406, inf
      %2412 = vmin.xlane.f32.xlu0 %v2411
      %v2413 = vpop.xlane.xlu0 %2412
      %v2414 = vcvt.f32.s32 %v2413
      %v2415 = vcvt.f32.s32 %v2409
      %v2416 = vshll.u32 %v2415, 16
      %v2417 = vadd.s32 %v2416, %v2414
      %v2418 = vsel %vm2155, %v2234, 2147483647
      %v2419 = vand.u32 %v2418, 65535
      %v2420 = vshra.s32 %v2418, 16
      %v2421 = vcvt.s32.f32 %v2419
      %v2422 = vcvt.s32.f32 %v2420
      %2423 = vmin.xlane.f32.xlu0 %v2422
      %v2424 = vpop.xlane.xlu0 %2423
      %vm2425 = vcmp.eq.f32.partialorder %v2422, %v2424
      %v2426 = vsel %vm2425, %v2421, inf
      %2427 = vmin.xlane.f32.xlu0 %v2426
      %v2428 = vpop.xlane.xlu0 %2427
      %v2429 = vcvt.f32.s32 %v2428
      %v2430 = vcvt.f32.s32 %v2424
      %v2431 = vshll.u32 %v2430, 16
      %v2432 = vadd.s32 %v2431, %v2429
      %v2433 = vsel %vm2155, %v2235, 2147483647
      %v2434 = vand.u32 %v2433, 65535
      %v2435 = vshra.s32 %v2433, 16
      %v2436 = vcvt.s32.f32 %v2434
      %v2437 = vcvt.s32.f32 %v2435
      %2438 = vmin.xlane.f32.xlu0 %v2437
      %v2439 = vpop.xlane.xlu0 %2438
      %vm2440 = vcmp.eq.f32.partialorder %v2437, %v2439
      %v2441 = vsel %vm2440, %v2436, inf
      %2442 = vmin.xlane.f32.xlu0 %v2441
      %v2443 = vpop.xlane.xlu0 %2442
      %v2444 = vcvt.f32.s32 %v2443
      %v2445 = vcvt.f32.s32 %v2439
      %v2446 = vshll.u32 %v2445, 16
      %v2447 = vadd.s32 %v2446, %v2444
      %v2448 = vsel %vm2155, %v2236, 2147483647
      %v2449 = vand.u32 %v2448, 65535
      %v2450 = vshra.s32 %v2448, 16
      %v2451 = vcvt.s32.f32 %v2449
      %v2452 = vcvt.s32.f32 %v2450
      %2453 = vmin.xlane.f32.xlu0 %v2452
      %v2454 = vpop.xlane.xlu0 %2453
      %vm2455 = vcmp.eq.f32.partialorder %v2452, %v2454
      %v2456 = vsel %vm2455, %v2451, inf
      %2457 = vmin.xlane.f32.xlu0 %v2456
      %v2458 = vpop.xlane.xlu0 %2457
      %v2459 = vcvt.f32.s32 %v2458
      %v2460 = vcvt.f32.s32 %v2454
      %v2461 = vshll.u32 %v2460, 16
      %v2462 = vadd.s32 %v2461, %v2459
      %v2463 = vsel %vm2155, %v2237, 2147483647
      %v2464 = vand.u32 %v2463, 65535
      %v2465 = vshra.s32 %v2463, 16
      %v2466 = vcvt.s32.f32 %v2464
      %v2467 = vcvt.s32.f32 %v2465
      %2468 = vmin.xlane.f32.xlu0 %v2467
      %v2469 = vpop.xlane.xlu0 %2468
      %vm2470 = vcmp.eq.f32.partialorder %v2467, %v2469
      %v2471 = vsel %vm2470, %v2466, inf
      %2472 = vmin.xlane.f32.xlu0 %v2471
      %v2473 = vpop.xlane.xlu0 %2472
      %v2474 = vcvt.f32.s32 %v2473
      %v2475 = vcvt.f32.s32 %v2469
      %v2476 = vshll.u32 %v2475, 16
      %v2477 = vadd.s32 %v2476, %v2474
      %v2478 = vcvt.s32.f32 %v2252
      %v2479 = vcvt.s32.f32 %v2267
      %v2480 = vcvt.s32.f32 %v2282
      %v2481 = vcvt.s32.f32 %v2297
      %v2482 = vcvt.s32.f32 %v2312
      %v2483 = vcvt.s32.f32 %v2327
      %v2484 = vcvt.s32.f32 %v2342
      %v2485 = vcvt.s32.f32 %v2357
      %v2486 = vcvt.s32.f32 %v2372
      %v2487 = vcvt.s32.f32 %v2387
      %v2488 = vcvt.s32.f32 %v2402
      %v2489 = vcvt.s32.f32 %v2417
      %v2490 = vcvt.s32.f32 %v2432
      %v2491 = vcvt.s32.f32 %v2447
      %v2492 = vcvt.s32.f32 %v2462
      %v2493 = vcvt.s32.f32 %v2477
      %v2494 = vxor.u32 %v2158, 2147483648
      %v2495 = vxor.u32 %v2161, 2147483648
      %v2496 = vxor.u32 %v2164, 2147483648
      %v2497 = vxor.u32 %v2167, 2147483648
      %v2498 = vxor.u32 %v2170, 2147483648
      %v2499 = vxor.u32 %v2173, 2147483648
      %v2500 = vxor.u32 %v2176, 2147483648
      %v2501 = vxor.u32 %v2179, 2147483648
      %v2502 = vxor.u32 %v2182, 2147483648
      %v2503 = vxor.u32 %v2185, 2147483648
      %v2504 = vxor.u32 %v2188, 2147483648
      %v2505 = vxor.u32 %v2191, 2147483648
      %v2506 = vxor.u32 %v2194, 2147483648
      %v2507 = vxor.u32 %v2197, 2147483648
      %v2508 = vxor.u32 %v2200, 2147483648
      %v2509 = vxor.u32 %v2203, 2147483648
      %v2510 = vmul.f32 %v2494, 1.442695
      %v2511 = vpow.pop %v2510
      %v2512 = vmul.f32 %v2495, 1.442695
      %v2513 = vpow.pop %v2512
      %v2514 = vmul.f32 %v2496, 1.442695
      %v2515 = vpow.pop %v2514
      %v2516 = vmul.f32 %v2497, 1.442695
      %v2517 = vpow.pop %v2516
      %v2518 = vmul.f32 %v2498, 1.442695
      %v2519 = vpow.pop %v2518
      %v2520 = vmul.f32 %v2499, 1.442695
      %v2521 = vpow.pop %v2520
      %v2522 = vmul.f32 %v2500, 1.442695
      %v2523 = vpow.pop %v2522
      %v2524 = vmul.f32 %v2501, 1.442695
      %v2525 = vpow.pop %v2524
      %v2526 = vmul.f32 %v2502, 1.442695
      %v2527 = vpow.pop %v2526
      %v2528 = vmul.f32 %v2503, 1.442695
      %v2529 = vpow.pop %v2528
      %v2530 = vmul.f32 %v2504, 1.442695
      %v2531 = vpow.pop %v2530
      %v2532 = vmul.f32 %v2505, 1.442695
      %v2533 = vpow.pop %v2532
      %v2534 = vmul.f32 %v2506, 1.442695
      %v2535 = vpow.pop %v2534
      %v2536 = vmul.f32 %v2507, 1.442695
      %v2537 = vpow.pop %v2536
      %v2538 = vmul.f32 %v2508, 1.442695
      %v2539 = vpow.pop %v2538
      %v2540 = vmul.f32 %v2509, 1.442695
      %v2541 = vpow.pop %v2540
      %v2542 = vadd.f32 %v2511, 1.0
      %v2543 = vadd.f32 %v2513, 1.0
      %v2544 = vadd.f32 %v2515, 1.0
      %v2545 = vadd.f32 %v2517, 1.0
      %v2546 = vadd.f32 %v2519, 1.0
      %v2547 = vadd.f32 %v2521, 1.0
      %v2548 = vadd.f32 %v2523, 1.0
      %v2549 = vadd.f32 %v2525, 1.0
      %v2550 = vadd.f32 %v2527, 1.0
      %v2551 = vadd.f32 %v2529, 1.0
      %v2552 = vadd.f32 %v2531, 1.0
      %v2553 = vadd.f32 %v2533, 1.0
      %v2554 = vadd.f32 %v2535, 1.0
      %v2555 = vadd.f32 %v2537, 1.0
      %v2556 = vadd.f32 %v2539, 1.0
      %v2557 = vadd.f32 %v2541, 1.0
      %v2558 = vrcp.pop %v2542
      %v2559 = vmul.f32 1.0, %v2558
      %v2560 = vrcp.pop %v2543
      %v2561 = vmul.f32 1.0, %v2560
      %v2562 = vrcp.pop %v2544
      %v2563 = vmul.f32 1.0, %v2562
      %v2564 = vrcp.pop %v2545
      %v2565 = vmul.f32 1.0, %v2564
      %v2566 = vrcp.pop %v2546
      %v2567 = vmul.f32 1.0, %v2566
      %v2568 = vrcp.pop %v2547
      %v2569 = vmul.f32 1.0, %v2568
      %v2570 = vrcp.pop %v2548
      %v2571 = vmul.f32 1.0, %v2570
      %v2572 = vrcp.pop %v2549
      %v2573 = vmul.f32 1.0, %v2572
      %v2574 = vrcp.pop %v2550
      %v2575 = vmul.f32 1.0, %v2574
      %v2576 = vrcp.pop %v2551
      %v2577 = vmul.f32 1.0, %v2576
      %v2578 = vrcp.pop %v2552
      %v2579 = vmul.f32 1.0, %v2578
      %v2580 = vrcp.pop %v2553
      %v2581 = vmul.f32 1.0, %v2580
      %v2582 = vrcp.pop %v2554
      %v2583 = vmul.f32 1.0, %v2582
      %v2584 = vrcp.pop %v2555
      %v2585 = vmul.f32 1.0, %v2584
      %v2586 = vrcp.pop %v2556
      %v2587 = vmul.f32 1.0, %v2586
      %v2588 = vrcp.pop %v2557
      %v2589 = vmul.f32 1.0, %v2588
      %v2590 = vxor.u32 %v2093, 2147483648
      %v2591 = vxor.u32 %v2096, 2147483648
      %v2592 = vxor.u32 %v2101, 2147483648
      %v2593 = vxor.u32 %v2104, 2147483648
      %v2594 = vxor.u32 %v2109, 2147483648
      %v2595 = vxor.u32 %v2112, 2147483648
      %v2596 = vxor.u32 %v2117, 2147483648
      %v2597 = vxor.u32 %v2120, 2147483648
      %v2598 = vxor.u32 %v2125, 2147483648
      %v2599 = vxor.u32 %v2128, 2147483648
      %v2600 = vxor.u32 %v2133, 2147483648
      %v2601 = vxor.u32 %v2136, 2147483648
      %v2602 = vxor.u32 %v2141, 2147483648
      %v2603 = vxor.u32 %v2144, 2147483648
      %v2604 = vxor.u32 %v2149, 2147483648
      %v2605 = vxor.u32 %v2152, 2147483648
      %v2606 = vmul.f32 %v2590, 1.442695
      %v2607 = vpow.pop %v2606
      %v2608 = vmul.f32 %v2591, 1.442695
      %v2609 = vpow.pop %v2608
      %v2610 = vmul.f32 %v2592, 1.442695
      %v2611 = vpow.pop %v2610
      %v2612 = vmul.f32 %v2593, 1.442695
      %v2613 = vpow.pop %v2612
      %v2614 = vmul.f32 %v2594, 1.442695
      %v2615 = vpow.pop %v2614
      %v2616 = vmul.f32 %v2595, 1.442695
      %v2617 = vpow.pop %v2616
      %v2618 = vmul.f32 %v2596, 1.442695
      %v2619 = vpow.pop %v2618
      %v2620 = vmul.f32 %v2597, 1.442695
      %v2621 = vpow.pop %v2620
      %v2622 = vmul.f32 %v2598, 1.442695
      %v2623 = vpow.pop %v2622
      %v2624 = vmul.f32 %v2599, 1.442695
      %v2625 = vpow.pop %v2624
      %v2626 = vmul.f32 %v2600, 1.442695
      %v2627 = vpow.pop %v2626
      %v2628 = vmul.f32 %v2601, 1.442695
      %v2629 = vpow.pop %v2628
      %v2630 = vmul.f32 %v2602, 1.442695
      %v2631 = vpow.pop %v2630
      %v2632 = vmul.f32 %v2603, 1.442695
      %v2633 = vpow.pop %v2632
      %v2634 = vmul.f32 %v2604, 1.442695
      %v2635 = vpow.pop %v2634
      %v2636 = vmul.f32 %v2605, 1.442695
      %v2637 = vpow.pop %v2636
      %v2638 = vadd.f32 %v2607, 1.0
      %v2639 = vadd.f32 %v2609, 1.0
      %v2640 = vadd.f32 %v2611, 1.0
      %v2641 = vadd.f32 %v2613, 1.0
      %v2642 = vadd.f32 %v2615, 1.0
      %v2643 = vadd.f32 %v2617, 1.0
      %v2644 = vadd.f32 %v2619, 1.0
      %v2645 = vadd.f32 %v2621, 1.0
      %v2646 = vadd.f32 %v2623, 1.0
      %v2647 = vadd.f32 %v2625, 1.0
      %v2648 = vadd.f32 %v2627, 1.0
      %v2649 = vadd.f32 %v2629, 1.0
      %v2650 = vadd.f32 %v2631, 1.0
      %v2651 = vadd.f32 %v2633, 1.0
      %v2652 = vadd.f32 %v2635, 1.0
      %v2653 = vadd.f32 %v2637, 1.0
      %v2654 = vrcp.pop %v2638
      %v2655 = vmul.f32 1.0, %v2654
      %v2656 = vrcp.pop %v2639
      %v2657 = vmul.f32 1.0, %v2656
      %v2658 = vrcp.pop %v2640
      %v2659 = vmul.f32 1.0, %v2658
      %v2660 = vrcp.pop %v2641
      %v2661 = vmul.f32 1.0, %v2660
      %v2662 = vrcp.pop %v2642
      %v2663 = vmul.f32 1.0, %v2662
      %v2664 = vrcp.pop %v2643
      %v2665 = vmul.f32 1.0, %v2664
      %v2666 = vrcp.pop %v2644
      %v2667 = vmul.f32 1.0, %v2666
      %v2668 = vrcp.pop %v2645
      %v2669 = vmul.f32 1.0, %v2668
      %v2670 = vrcp.pop %v2646
      %v2671 = vmul.f32 1.0, %v2670
      %v2672 = vrcp.pop %v2647
      %v2673 = vmul.f32 1.0, %v2672
      %v2674 = vrcp.pop %v2648
      %v2675 = vmul.f32 1.0, %v2674
      %v2676 = vrcp.pop %v2649
      %v2677 = vmul.f32 1.0, %v2676
      %v2678 = vrcp.pop %v2650
      %v2679 = vmul.f32 1.0, %v2678
      %v2680 = vrcp.pop %v2651
      %v2681 = vmul.f32 1.0, %v2680
      %v2682 = vrcp.pop %v2652
      %v2683 = vmul.f32 1.0, %v2682
      %v2684 = vrcp.pop %v2653
      %v2685 = vmul.f32 1.0, %v2684
      %v2686 = vmul.f32 %v2559, %v2655
      %v2687 = vmul.f32 %v2561, %v2657
      %v2688 = vmul.f32 %v2563, %v2659
      %v2689 = vmul.f32 %v2565, %v2661
      %v2690 = vmul.f32 %v2567, %v2663
      %v2691 = vmul.f32 %v2569, %v2665
      %v2692 = vmul.f32 %v2571, %v2667
      %v2693 = vmul.f32 %v2573, %v2669
      %v2694 = vmul.f32 %v2575, %v2671
      %v2695 = vmul.f32 %v2577, %v2673
      %v2696 = vmul.f32 %v2579, %v2675
      %v2697 = vmul.f32 %v2581, %v2677
      %v2698 = vmul.f32 %v2583, %v2679
      %v2699 = vmul.f32 %v2585, %v2681
      %v2700 = vmul.f32 %v2587, %v2683
      %v2701 = vmul.f32 %v2589, %v2685
      %v2702 = vmax.f32 %v2686, 0.0
      %v2703 = vmax.f32 %v2687, 0.0
      %v2704 = vmax.f32 %v2688, 0.0
      %v2705 = vmax.f32 %v2689, 0.0
      %v2706 = vmax.f32 %v2690, 0.0
      %v2707 = vmax.f32 %v2691, 0.0
      %v2708 = vmax.f32 %v2692, 0.0
      %v2709 = vmax.f32 %v2693, 0.0
      %v2710 = vmax.f32 %v2694, 0.0
      %v2711 = vmax.f32 %v2695, 0.0
      %v2712 = vmax.f32 %v2696, 0.0
      %v2713 = vmax.f32 %v2697, 0.0
      %v2714 = vmax.f32 %v2698, 0.0
      %v2715 = vmax.f32 %v2699, 0.0
      %v2716 = vmax.f32 %v2700, 0.0
      %v2717 = vmax.f32 %v2701, 0.0
      %v2718 = vrsqrt.pop %v2702
      %v2719 = vmul.f32 %v2702, %v2718
      %vm2720 = vcmp.eq.f32.partialorder %v2702, inf
      %v2721 = vsel %vm2720, %v2702, %v2719
      %vm2722 = vcmp.eq.f32.partialorder %v2702, 0.0
      %v2723 = vand.u32 %v2702, 2147483648
      %v2724 = vsel %vm2722, %v2723, %v2721
      %v2725 = vrsqrt.pop %v2703
      %v2726 = vmul.f32 %v2703, %v2725
      %vm2727 = vcmp.eq.f32.partialorder %v2703, inf
      %v2728 = vsel %vm2727, %v2703, %v2726
      %vm2729 = vcmp.eq.f32.partialorder %v2703, 0.0
      %v2730 = vand.u32 %v2703, 2147483648
      %v2731 = vsel %vm2729, %v2730, %v2728
      %v2732 = vrsqrt.pop %v2704
      %v2733 = vmul.f32 %v2704, %v2732
      %vm2734 = vcmp.eq.f32.partialorder %v2704, inf
      %v2735 = vsel %vm2734, %v2704, %v2733
      %vm2736 = vcmp.eq.f32.partialorder %v2704, 0.0
      %v2737 = vand.u32 %v2704, 2147483648
      %v2738 = vsel %vm2736, %v2737, %v2735
      %v2739 = vrsqrt.pop %v2705
      %v2740 = vmul.f32 %v2705, %v2739
      %vm2741 = vcmp.eq.f32.partialorder %v2705, inf
      %v2742 = vsel %vm2741, %v2705, %v2740
      %vm2743 = vcmp.eq.f32.partialorder %v2705, 0.0
      %v2744 = vand.u32 %v2705, 2147483648
      %v2745 = vsel %vm2743, %v2744, %v2742
      %v2746 = vrsqrt.pop %v2706
      %v2747 = vmul.f32 %v2706, %v2746
      %vm2748 = vcmp.eq.f32.partialorder %v2706, inf
      %v2749 = vsel %vm2748, %v2706, %v2747
      %vm2750 = vcmp.eq.f32.partialorder %v2706, 0.0
      %v2751 = vand.u32 %v2706, 2147483648
      %v2752 = vsel %vm2750, %v2751, %v2749
      %v2753 = vrsqrt.pop %v2707
      %v2754 = vmul.f32 %v2707, %v2753
      %vm2755 = vcmp.eq.f32.partialorder %v2707, inf
      %v2756 = vsel %vm2755, %v2707, %v2754
      %vm2757 = vcmp.eq.f32.partialorder %v2707, 0.0
      %v2758 = vand.u32 %v2707, 2147483648
      %v2759 = vsel %vm2757, %v2758, %v2756
      %v2760 = vrsqrt.pop %v2708
      %v2761 = vmul.f32 %v2708, %v2760
      %vm2762 = vcmp.eq.f32.partialorder %v2708, inf
      %v2763 = vsel %vm2762, %v2708, %v2761
      %vm2764 = vcmp.eq.f32.partialorder %v2708, 0.0
      %v2765 = vand.u32 %v2708, 2147483648
      %v2766 = vsel %vm2764, %v2765, %v2763
      %v2767 = vrsqrt.pop %v2709
      %v2768 = vmul.f32 %v2709, %v2767
      %vm2769 = vcmp.eq.f32.partialorder %v2709, inf
      %v2770 = vsel %vm2769, %v2709, %v2768
      %vm2771 = vcmp.eq.f32.partialorder %v2709, 0.0
      %v2772 = vand.u32 %v2709, 2147483648
      %v2773 = vsel %vm2771, %v2772, %v2770
      %v2774 = vrsqrt.pop %v2710
      %v2775 = vmul.f32 %v2710, %v2774
      %vm2776 = vcmp.eq.f32.partialorder %v2710, inf
      %v2777 = vsel %vm2776, %v2710, %v2775
      %vm2778 = vcmp.eq.f32.partialorder %v2710, 0.0
      %v2779 = vand.u32 %v2710, 2147483648
      %v2780 = vsel %vm2778, %v2779, %v2777
      %v2781 = vrsqrt.pop %v2711
      %v2782 = vmul.f32 %v2711, %v2781
      %vm2783 = vcmp.eq.f32.partialorder %v2711, inf
      %v2784 = vsel %vm2783, %v2711, %v2782
      %vm2785 = vcmp.eq.f32.partialorder %v2711, 0.0
      %v2786 = vand.u32 %v2711, 2147483648
      %v2787 = vsel %vm2785, %v2786, %v2784
      %v2788 = vrsqrt.pop %v2712
      %v2789 = vmul.f32 %v2712, %v2788
      %vm2790 = vcmp.eq.f32.partialorder %v2712, inf
      %v2791 = vsel %vm2790, %v2712, %v2789
      %vm2792 = vcmp.eq.f32.partialorder %v2712, 0.0
      %v2793 = vand.u32 %v2712, 2147483648
      %v2794 = vsel %vm2792, %v2793, %v2791
      %v2795 = vrsqrt.pop %v2713
      %v2796 = vmul.f32 %v2713, %v2795
      %vm2797 = vcmp.eq.f32.partialorder %v2713, inf
      %v2798 = vsel %vm2797, %v2713, %v2796
      %vm2799 = vcmp.eq.f32.partialorder %v2713, 0.0
      %v2800 = vand.u32 %v2713, 2147483648
      %v2801 = vsel %vm2799, %v2800, %v2798
      %v2802 = vrsqrt.pop %v2714
      %v2803 = vmul.f32 %v2714, %v2802
      %vm2804 = vcmp.eq.f32.partialorder %v2714, inf
      %v2805 = vsel %vm2804, %v2714, %v2803
      %vm2806 = vcmp.eq.f32.partialorder %v2714, 0.0
      %v2807 = vand.u32 %v2714, 2147483648
      %v2808 = vsel %vm2806, %v2807, %v2805
      %v2809 = vrsqrt.pop %v2715
      %v2810 = vmul.f32 %v2715, %v2809
      %vm2811 = vcmp.eq.f32.partialorder %v2715, inf
      %v2812 = vsel %vm2811, %v2715, %v2810
      %vm2813 = vcmp.eq.f32.partialorder %v2715, 0.0
      %v2814 = vand.u32 %v2715, 2147483648
      %v2815 = vsel %vm2813, %v2814, %v2812
      %v2816 = vrsqrt.pop %v2716
      %v2817 = vmul.f32 %v2716, %v2816
      %vm2818 = vcmp.eq.f32.partialorder %v2716, inf
      %v2819 = vsel %vm2818, %v2716, %v2817
      %vm2820 = vcmp.eq.f32.partialorder %v2716, 0.0
      %v2821 = vand.u32 %v2716, 2147483648
      %v2822 = vsel %vm2820, %v2821, %v2819
      %v2823 = vrsqrt.pop %v2717
      %v2824 = vmul.f32 %v2717, %v2823
      %vm2825 = vcmp.eq.f32.partialorder %v2717, inf
      %v2826 = vsel %vm2825, %v2717, %v2824
      %vm2827 = vcmp.eq.f32.partialorder %v2717, 0.0
      %v2828 = vand.u32 %v2717, 2147483648
      %v2829 = vsel %vm2827, %v2828, %v2826
      %v2830 = vld [vmem:[%s350] sm:$0xff]
      %v2831 = vld [vmem:[%s350 + $0x8] sm:$0xff]
      %v2832 = vld [vmem:[%s350 + $0x10] sm:$0xff]
      %v2833 = vld [vmem:[%s350 + $0x18] sm:$0xff]
      %v2834 = vld [vmem:[%s350 + $0x20] sm:$0xff]
      %v2835 = vld [vmem:[%s350 + $0x28] sm:$0xff]
      %v2836 = vld [vmem:[%s350 + $0x30] sm:$0xff]
      %v2837 = vld [vmem:[%s350 + $0x38] sm:$0xff]
      %v2838 = vld [vmem:[%s350 + $0x40] sm:$0xff]
      %v2839 = vld [vmem:[%s350 + $0x48] sm:$0xff]
      %v2840 = vld [vmem:[%s350 + $0x50] sm:$0xff]
      %v2841 = vld [vmem:[%s350 + $0x58] sm:$0xff]
      %v2842 = vld [vmem:[%s350 + $0x60] sm:$0xff]
      %v2843 = vld [vmem:[%s350 + $0x68] sm:$0xff]
      %v2844 = vld [vmem:[%s350 + $0x70] sm:$0xff]
      %v2845 = vld [vmem:[%s350 + $0x78] sm:$0xff]
      %2847 = vset.pattern.permute.xlu0 2
      %2848 = vperm.xlu0 %2847, %v2830
      %v2849 = vpop.permute.xlu0 %2848
      %2852 = vset.pattern.permute.xlu0 2
      %2853 = vperm.xlu0 %2852, %v2831
      %v2854 = vpop.permute.xlu0 %2853
      %2857 = vset.pattern.permute.xlu0 2
      %2858 = vperm.xlu0 %2857, %v2832
      %v2859 = vpop.permute.xlu0 %2858
      %2862 = vset.pattern.permute.xlu0 2
      %2863 = vperm.xlu0 %2862, %v2833
      %v2864 = vpop.permute.xlu0 %2863
      %2867 = vset.pattern.permute.xlu0 2
      %2868 = vperm.xlu0 %2867, %v2834
      %v2869 = vpop.permute.xlu0 %2868
      %2872 = vset.pattern.permute.xlu0 2
      %2873 = vperm.xlu0 %2872, %v2835
      %v2874 = vpop.permute.xlu0 %2873
      %2877 = vset.pattern.permute.xlu0 2
      %2878 = vperm.xlu0 %2877, %v2836
      %v2879 = vpop.permute.xlu0 %2878
      %2882 = vset.pattern.permute.xlu0 2
      %2883 = vperm.xlu0 %2882, %v2837
      %v2884 = vpop.permute.xlu0 %2883
      %2887 = vset.pattern.permute.xlu0 2
      %2888 = vperm.xlu0 %2887, %v2838
      %v2889 = vpop.permute.xlu0 %2888
      %2892 = vset.pattern.permute.xlu0 2
      %2893 = vperm.xlu0 %2892, %v2839
      %v2894 = vpop.permute.xlu0 %2893
      %2897 = vset.pattern.permute.xlu0 2
      %2898 = vperm.xlu0 %2897, %v2840
      %v2899 = vpop.permute.xlu0 %2898
      %2902 = vset.pattern.permute.xlu0 2
      %2903 = vperm.xlu0 %2902, %v2841
      %v2904 = vpop.permute.xlu0 %2903
      %2907 = vset.pattern.permute.xlu0 2
      %2908 = vperm.xlu0 %2907, %v2842
      %v2909 = vpop.permute.xlu0 %2908
      %2912 = vset.pattern.permute.xlu0 2
      %2913 = vperm.xlu0 %2912, %v2843
      %v2914 = vpop.permute.xlu0 %2913
      %2917 = vset.pattern.permute.xlu0 2
      %2918 = vperm.xlu0 %2917, %v2844
      %v2919 = vpop.permute.xlu0 %2918
      %2922 = vset.pattern.permute.xlu0 2
      %2923 = vperm.xlu0 %2922, %v2845
      %v2924 = vpop.permute.xlu0 %2923
      %v2926 = vmul.f32 %v2849, %v2093
      %v2927 = vmul.f32 %v2854, %v2096
      %v2928 = vmul.f32 %v2859, %v2101
      %v2929 = vmul.f32 %v2864, %v2104
      %v2930 = vmul.f32 %v2869, %v2109
      %v2931 = vmul.f32 %v2874, %v2112
      %v2932 = vmul.f32 %v2879, %v2117
      %v2933 = vmul.f32 %v2884, %v2120
      %v2934 = vmul.f32 %v2889, %v2125
      %v2935 = vmul.f32 %v2894, %v2128
      %v2936 = vmul.f32 %v2899, %v2133
      %v2937 = vmul.f32 %v2904, %v2136
      %v2938 = vmul.f32 %v2909, %v2141
      %v2939 = vmul.f32 %v2914, %v2144
      %v2940 = vmul.f32 %v2919, %v2149
      %v2941 = vmul.f32 %v2924, %v2152
      %v2942 = vmul.f32 %v2926, 1.442695
      %v2943 = vpow.pop %v2942
      %v2944 = vmul.f32 %v2927, 1.442695
      %v2945 = vpow.pop %v2944
      %v2946 = vmul.f32 %v2928, 1.442695
      %v2947 = vpow.pop %v2946
      %v2948 = vmul.f32 %v2929, 1.442695
      %v2949 = vpow.pop %v2948
      %v2950 = vmul.f32 %v2930, 1.442695
      %v2951 = vpow.pop %v2950
      %v2952 = vmul.f32 %v2931, 1.442695
      %v2953 = vpow.pop %v2952
      %v2954 = vmul.f32 %v2932, 1.442695
      %v2955 = vpow.pop %v2954
      %v2956 = vmul.f32 %v2933, 1.442695
      %v2957 = vpow.pop %v2956
      %v2958 = vmul.f32 %v2934, 1.442695
      %v2959 = vpow.pop %v2958
      %v2960 = vmul.f32 %v2935, 1.442695
      %v2961 = vpow.pop %v2960
      %v2962 = vmul.f32 %v2936, 1.442695
      %v2963 = vpow.pop %v2962
      %v2964 = vmul.f32 %v2937, 1.442695
      %v2965 = vpow.pop %v2964
      %v2966 = vmul.f32 %v2938, 1.442695
      %v2967 = vpow.pop %v2966
      %v2968 = vmul.f32 %v2939, 1.442695
      %v2969 = vpow.pop %v2968
      %v2970 = vmul.f32 %v2940, 1.442695
      %v2971 = vpow.pop %v2970
      %v2972 = vmul.f32 %v2941, 1.442695
      %v2973 = vpow.pop %v2972
      %2990 = vrot.lane.b32.xlu0 %v2943, 46
      %v2991 = vpop.permute.xlu0 %2990
      %2992 = vrot.lane.b32.xlu0 %v2945, 46
      %v2993 = vpop.permute.xlu0 %2992
      %2994 = vrot.lane.b32.xlu0 %v2947, 46
      %v2995 = vpop.permute.xlu0 %2994
      %2996 = vrot.lane.b32.xlu0 %v2949, 46
      %v2997 = vpop.permute.xlu0 %2996
      %2998 = vrot.lane.b32.xlu0 %v2951, 46
      %v2999 = vpop.permute.xlu0 %2998
      %3000 = vrot.lane.b32.xlu0 %v2953, 46
      %v3001 = vpop.permute.xlu0 %3000
      %3002 = vrot.lane.b32.xlu0 %v2955, 46
      %v3003 = vpop.permute.xlu0 %3002
      %3004 = vrot.lane.b32.xlu0 %v2957, 46
      %v3005 = vpop.permute.xlu0 %3004
      %3006 = vrot.lane.b32.xlu0 %v2959, 46
      %v3007 = vpop.permute.xlu0 %3006
      %3008 = vrot.lane.b32.xlu0 %v2961, 46
      %v3009 = vpop.permute.xlu0 %3008
      %3010 = vrot.lane.b32.xlu0 %v2963, 46
      %v3011 = vpop.permute.xlu0 %3010
      %3012 = vrot.lane.b32.xlu0 %v2965, 46
      %v3013 = vpop.permute.xlu0 %3012
      %3014 = vrot.lane.b32.xlu0 %v2967, 46
      %v3015 = vpop.permute.xlu0 %3014
      %3016 = vrot.lane.b32.xlu0 %v2969, 46
      %v3017 = vpop.permute.xlu0 %3016
      %3018 = vrot.lane.b32.xlu0 %v2971, 46
      %v3019 = vpop.permute.xlu0 %3018
      %3020 = vrot.lane.b32.xlu0 %v2973, 46
      %v3021 = vpop.permute.xlu0 %3020
      %v3038 = vsub.f32 %v2830, %v2991
      %v3039 = vsub.f32 %v2831, %v2993
      %v3040 = vsub.f32 %v2832, %v2995
      %v3041 = vsub.f32 %v2833, %v2997
      %v3042 = vsub.f32 %v2834, %v2999
      %v3043 = vsub.f32 %v2835, %v3001
      %v3044 = vsub.f32 %v2836, %v3003
      %v3045 = vsub.f32 %v2837, %v3005
      %v3046 = vsub.f32 %v2838, %v3007
      %v3047 = vsub.f32 %v2839, %v3009
      %v3048 = vsub.f32 %v2840, %v3011
      %v3049 = vsub.f32 %v2841, %v3013
      %v3050 = vsub.f32 %v2842, %v3015
      %v3051 = vsub.f32 %v2843, %v3017
      %v3052 = vsub.f32 %v2844, %v3019
      %v3053 = vsub.f32 %v2845, %v3021
      %3054 = vrot.lane.b32.xlu0 %v2943, 44
      %v3055 = vpop.permute.xlu0 %3054
      %3056 = vrot.lane.b32.xlu0 %v2945, 44
      %v3057 = vpop.permute.xlu0 %3056
      %3058 = vrot.lane.b32.xlu0 %v2947, 44
      %v3059 = vpop.permute.xlu0 %3058
      %3060 = vrot.lane.b32.xlu0 %v2949, 44
      %v3061 = vpop.permute.xlu0 %3060
      %3062 = vrot.lane.b32.xlu0 %v2951, 44
      %v3063 = vpop.permute.xlu0 %3062
      %3064 = vrot.lane.b32.xlu0 %v2953, 44
      %v3065 = vpop.permute.xlu0 %3064
      %3066 = vrot.lane.b32.xlu0 %v2955, 44
      %v3067 = vpop.permute.xlu0 %3066
      %3068 = vrot.lane.b32.xlu0 %v2957, 44
      %v3069 = vpop.permute.xlu0 %3068
      %3070 = vrot.lane.b32.xlu0 %v2959, 44
      %v3071 = vpop.permute.xlu0 %3070
      %3072 = vrot.lane.b32.xlu0 %v2961, 44
      %v3073 = vpop.permute.xlu0 %3072
      %3074 = vrot.lane.b32.xlu0 %v2963, 44
      %v3075 = vpop.permute.xlu0 %3074
      %3076 = vrot.lane.b32.xlu0 %v2965, 44
      %v3077 = vpop.permute.xlu0 %3076
      %3078 = vrot.lane.b32.xlu0 %v2967, 44
      %v3079 = vpop.permute.xlu0 %3078
      %3080 = vrot.lane.b32.xlu0 %v2969, 44
      %v3081 = vpop.permute.xlu0 %3080
      %3082 = vrot.lane.b32.xlu0 %v2971, 44
      %v3083 = vpop.permute.xlu0 %3082
      %3084 = vrot.lane.b32.xlu0 %v2973, 44
      %v3085 = vpop.permute.xlu0 %3084
      %v3102 = vadd.f32 %v2830, %v3055
      %v3103 = vadd.f32 %v2831, %v3057
      %v3104 = vadd.f32 %v2832, %v3059
      %v3105 = vadd.f32 %v2833, %v3061
      %v3106 = vadd.f32 %v2834, %v3063
      %v3107 = vadd.f32 %v2835, %v3065
      %v3108 = vadd.f32 %v2836, %v3067
      %v3109 = vadd.f32 %v2837, %v3069
      %v3110 = vadd.f32 %v2838, %v3071
      %v3111 = vadd.f32 %v2839, %v3073
      %v3112 = vadd.f32 %v2840, %v3075
      %v3113 = vadd.f32 %v2841, %v3077
      %v3114 = vadd.f32 %v2842, %v3079
      %v3115 = vadd.f32 %v2843, %v3081
      %v3116 = vadd.f32 %v2844, %v3083
      %v3117 = vadd.f32 %v2845, %v3085
      %3134 = vrot.lane.b32.xlu0 %v3102, 2
      %v3135 = vpop.permute.xlu0 %3134
      %3136 = vrot.lane.b32.xlu0 %v3103, 2
      %v3137 = vpop.permute.xlu0 %3136
      %3138 = vrot.lane.b32.xlu0 %v3104, 2
      %v3139 = vpop.permute.xlu0 %3138
      %3140 = vrot.lane.b32.xlu0 %v3105, 2
      %v3141 = vpop.permute.xlu0 %3140
      %3142 = vrot.lane.b32.xlu0 %v3106, 2
      %v3143 = vpop.permute.xlu0 %3142
      %3144 = vrot.lane.b32.xlu0 %v3107, 2
      %v3145 = vpop.permute.xlu0 %3144
      %3146 = vrot.lane.b32.xlu0 %v3108, 2
      %v3147 = vpop.permute.xlu0 %3146
      %3148 = vrot.lane.b32.xlu0 %v3109, 2
      %v3149 = vpop.permute.xlu0 %3148
      %3150 = vrot.lane.b32.xlu0 %v3110, 2
      %v3151 = vpop.permute.xlu0 %3150
      %3152 = vrot.lane.b32.xlu0 %v3111, 2
      %v3153 = vpop.permute.xlu0 %3152
      %3154 = vrot.lane.b32.xlu0 %v3112, 2
      %v3155 = vpop.permute.xlu0 %3154
      %3156 = vrot.lane.b32.xlu0 %v3113, 2
      %v3157 = vpop.permute.xlu0 %3156
      %3158 = vrot.lane.b32.xlu0 %v3114, 2
      %v3159 = vpop.permute.xlu0 %3158
      %3160 = vrot.lane.b32.xlu0 %v3115, 2
      %v3161 = vpop.permute.xlu0 %3160
      %3162 = vrot.lane.b32.xlu0 %v3116, 2
      %v3163 = vpop.permute.xlu0 %3162
      %3164 = vrot.lane.b32.xlu0 %v3117, 2
      %v3165 = vpop.permute.xlu0 %3164
      %vm3182 = vcmask 15360
      %v3183 = vsel %vm3182, %v3038, %v3135
      %v3184 = vsel %vm3182, %v3039, %v3137
      %v3185 = vsel %vm3182, %v3040, %v3139
      %v3186 = vsel %vm3182, %v3041, %v3141
      %v3187 = vsel %vm3182, %v3042, %v3143
      %v3188 = vsel %vm3182, %v3043, %v3145
      %v3189 = vsel %vm3182, %v3044, %v3147
      %v3190 = vsel %vm3182, %v3045, %v3149
      %v3191 = vsel %vm3182, %v3046, %v3151
      %v3192 = vsel %vm3182, %v3047, %v3153
      %v3193 = vsel %vm3182, %v3048, %v3155
      %v3194 = vsel %vm3182, %v3049, %v3157
      %v3195 = vsel %vm3182, %v3050, %v3159
      %v3196 = vsel %vm3182, %v3051, %v3161
      %v3197 = vsel %vm3182, %v3052, %v3163
      %v3198 = vsel %vm3182, %v3053, %v3165
      %3215 = vrot.lane.b32.xlu0 %v2724, 51
      %v3216 = vpop.permute.xlu0 %3215
      %3217 = vrot.lane.b32.xlu0 %v2731, 51
      %v3218 = vpop.permute.xlu0 %3217
      %3219 = vrot.lane.b32.xlu0 %v2738, 51
      %v3220 = vpop.permute.xlu0 %3219
      %3221 = vrot.lane.b32.xlu0 %v2745, 51
      %v3222 = vpop.permute.xlu0 %3221
      %3223 = vrot.lane.b32.xlu0 %v2752, 51
      %v3224 = vpop.permute.xlu0 %3223
      %3225 = vrot.lane.b32.xlu0 %v2759, 51
      %v3226 = vpop.permute.xlu0 %3225
      %3227 = vrot.lane.b32.xlu0 %v2766, 51
      %v3228 = vpop.permute.xlu0 %3227
      %3229 = vrot.lane.b32.xlu0 %v2773, 51
      %v3230 = vpop.permute.xlu0 %3229
      %3231 = vrot.lane.b32.xlu0 %v2780, 51
      %v3232 = vpop.permute.xlu0 %3231
      %3233 = vrot.lane.b32.xlu0 %v2787, 51
      %v3234 = vpop.permute.xlu0 %3233
      %3235 = vrot.lane.b32.xlu0 %v2794, 51
      %v3236 = vpop.permute.xlu0 %3235
      %3237 = vrot.lane.b32.xlu0 %v2801, 51
      %v3238 = vpop.permute.xlu0 %3237
      %3239 = vrot.lane.b32.xlu0 %v2808, 51
      %v3240 = vpop.permute.xlu0 %3239
      %3241 = vrot.lane.b32.xlu0 %v2815, 51
      %v3242 = vpop.permute.xlu0 %3241
      %3243 = vrot.lane.b32.xlu0 %v2822, 51
      %v3244 = vpop.permute.xlu0 %3243
      %3245 = vrot.lane.b32.xlu0 %v2829, 51
      %v3246 = vpop.permute.xlu0 %3245
      %vm3263 = vcmask 31744
      %v3264 = vsel %vm3263, %v3183, %v3216
      %v3265 = vsel %vm3263, %v3184, %v3218
      %v3266 = vsel %vm3263, %v3185, %v3220
      %v3267 = vsel %vm3263, %v3186, %v3222
      %v3268 = vsel %vm3263, %v3187, %v3224
      %v3269 = vsel %vm3263, %v3188, %v3226
      %v3270 = vsel %vm3263, %v3189, %v3228
      %v3271 = vsel %vm3263, %v3190, %v3230
      %v3272 = vsel %vm3263, %v3191, %v3232
      %v3273 = vsel %vm3263, %v3192, %v3234
      %v3274 = vsel %vm3263, %v3193, %v3236
      %v3275 = vsel %vm3263, %v3194, %v3238
      %v3276 = vsel %vm3263, %v3195, %v3240
      %v3277 = vsel %vm3263, %v3196, %v3242
      %v3278 = vsel %vm3263, %v3197, %v3244
      %v3279 = vsel %vm3263, %v3198, %v3246
      %vm3280 = vcmask 39936
      %v3281 = vsel %vm3280, %v3264, %v2478
      %v3282 = vsel %vm3280, %v3265, %v2479
      %v3283 = vsel %vm3280, %v3266, %v2480
      %v3284 = vsel %vm3280, %v3267, %v2481
      %v3285 = vsel %vm3280, %v3268, %v2482
      %v3286 = vsel %vm3280, %v3269, %v2483
      %v3287 = vsel %vm3280, %v3270, %v2484
      %v3288 = vsel %vm3280, %v3271, %v2485
      %v3289 = vsel %vm3280, %v3272, %v2486
      %v3290 = vsel %vm3280, %v3273, %v2487
      %v3291 = vsel %vm3280, %v3274, %v2488
      %v3292 = vsel %vm3280, %v3275, %v2489
      %v3293 = vsel %vm3280, %v3276, %v2490
      %v3294 = vsel %vm3280, %v3277, %v2491
      %v3295 = vsel %vm3280, %v3278, %v2492
      %v3296 = vsel %vm3280, %v3279, %v2493
      %vm3297 = vcmask 48128
      %v3298 = vsel %vm3297, %v3281, 0.0
      %v3299 = vsel %vm3297, %v3282, 0.0
      %v3300 = vsel %vm3297, %v3283, 0.0
      %v3301 = vsel %vm3297, %v3284, 0.0
      %v3302 = vsel %vm3297, %v3285, 0.0
      %v3303 = vsel %vm3297, %v3286, 0.0
      %v3304 = vsel %vm3297, %v3287, 0.0
      %v3305 = vsel %vm3297, %v3288, 0.0
      %v3306 = vsel %vm3297, %v3289, 0.0
      %v3307 = vsel %vm3297, %v3290, 0.0
      %v3308 = vsel %vm3297, %v3291, 0.0
      %v3309 = vsel %vm3297, %v3292, 0.0
      %v3310 = vsel %vm3297, %v3293, 0.0
      %v3311 = vsel %vm3297, %v3294, 0.0
      %v3312 = vsel %vm3297, %v3295, 0.0
      %v3313 = vsel %vm3297, %v3296, 0.0
      %3314 = vst [vmem:[%s356] sm:$0xff] %v3298
      %3315 = vst [vmem:[%s356 + $0x8] sm:$0xff] %v3299
      %3316 = vst [vmem:[%s356 + $0x10] sm:$0xff] %v3300
      %3317 = vst [vmem:[%s356 + $0x18] sm:$0xff] %v3301
      %3318 = vst [vmem:[%s356 + $0x20] sm:$0xff] %v3302
      %3319 = vst [vmem:[%s356 + $0x28] sm:$0xff] %v3303
      %3320 = vst [vmem:[%s356 + $0x30] sm:$0xff] %v3304
      %3321 = vst [vmem:[%s356 + $0x38] sm:$0xff] %v3305
      %3322 = vst [vmem:[%s356 + $0x40] sm:$0xff] %v3306
      %3323 = vst [vmem:[%s356 + $0x48] sm:$0xff] %v3307
      %3324 = vst [vmem:[%s356 + $0x50] sm:$0xff] %v3308
      %3325 = vst [vmem:[%s356 + $0x58] sm:$0xff] %v3309
      %3326 = vst [vmem:[%s356 + $0x60] sm:$0xff] %v3310
      %3327 = vst [vmem:[%s356 + $0x68] sm:$0xff] %v3311
      %3328 = vst [vmem:[%s356 + $0x70] sm:$0xff] %v3312
      %3329 = vst [vmem:[%s356 + $0x78] sm:$0xff] %v3313
      %s3330 = smul.u32 16, %s20
      %p3331 = scmp.lt.s32.totalorder %s3330, 95
      %s3332 = scalar_select %p3331, %s3330, 95
      %s3333 = smul.addr %s3332, 8
      %s3334 = scalar_lea.vmem %s9, %s3333
      // Predicated region
      $region57: #{fcos_inference.3} parent=55 // pred_check
        %p3335 = pneg %p237
      $region58: #{fcos_inference.3} parent=55 // pred_check_branch
        %3337 = sbr.rel (%p3335) target = $region60
      $region59: #{fcos_inference.3} parent=55 // pred_region
        %s3338 = smul.u32 16, %s20
      $region60: #{fcos_inference.3} parent=55 // pred_fallthru
        _
    $region56: #{fcos_inference.3} parent=5 // pred_fallthru
      _
    %p3339 = scmp.le.s32.totalorder 2, %s15
    // Predicated region
    $region61: #{fcos_inference.3} parent=5 // pred_check
      %p3340 = pneg %p3339
    $region62: #{fcos_inference.3} parent=5 // pred_check_branch
      %3342 = sbr.rel (%p3340) target = $region64
    $region63: #{fcos_inference.3} parent=5 // pred_region
      %s3343 = ssub.s32 %s15, 2
      // Predicated region
      $region65: #{fcos_inference.3} parent=63 // pred_check
        %p3344 = pneg %p243
      $region66: #{fcos_inference.3} parent=63 // pred_check_branch
        %3346 = sbr.rel (%p3344) target = $region68
      $region67: #{fcos_inference.3} parent=63 // pred_region
        %s3347 = smul.u32 16, %s21
        %p3348 = scmp.lt.s32.totalorder %s3347, 95
        %s3349 = scalar_select %p3348, %s3347, 95
        %s3350 = smul.addr %s3349, 8
        %s3351 = scalar_lea.vmem %s9, %s3350
      $region68: #{fcos_inference.3} parent=63 // pred_fallthru
        _
    $region64: #{fcos_inference.3} parent=5 // pred_fallthru
      _
  $region6: #{fcos_inference.3} parent=0 // loop_footer
    %s19 = sadd.s32 1, %s15
  $region7: #{fcos_inference.3} parent=0 // loop_footer_branch
    %14 = sbr.rel target = $region3
  $region8: #{fcos_inference.3} parent=0 // loop_exit
    _

</llo_original>
